<compile_context>
chip_gen: v6e
topology: v6e:2x2x1
jax: 0.10.0
libtpu: 0.0.40
codegen_flags: <defaults>
</compile_context>

<pallas_src>
import jax
import jax.numpy as jnp
from jax.experimental import pallas as pl
from jax.experimental.pallas import tpu as pltpu

KH = KW = 3                       # kernel_size = 3, padding = (k-1)//2 = 1
EPS = 1e-5                        # nn.BatchNorm default eps
CO_TILE = 128                     # output-channel tile = one lane-dense vreg row
VMEM_LIMIT = 48 * 1024 * 1024     # headroom under v7x's 64 MiB physical VMEM


def conv_stats_kernel(xpad_ref, w_ref, conv_ref, sum_ref, sumsq_ref):
    """Per (cout-block, image) tile: 3x3 conv + streaming BN statistics.

    xpad_ref : (1, H+2, W+2, Cin)      zero-padded input tile, bf16
    w_ref    : (KH*KW, Cin, CO_TILE)   weights for this cout block, bf16
    conv_ref : (1, H, W, CO_TILE)      raw conv output tile, f32
    sum_ref  : (1, CO_TILE)            per-channel sum      (resident over batch axis)
    sumsq_ref: (1, CO_TILE)            per-channel sum-sq   (resident over batch axis)
    """
    n = pl.program_id(1)
    _, H, W, CO = conv_ref.shape
    Cin = xpad_ref.shape[-1]

    if Cin % 128 == 0:
        # Lane-aligned channels: tile-local im2col, then ONE MXU matmul with
        # K = 9*Cin so the 128/256-deep systolic array stays fed.
        taps = [None] * (KH * KW)
        for kw in range(KW):
            xw = xpad_ref[:, :, kw:kw + W, :]            # one sublane shift per kw
            for kh in range(KH):
                taps[kh * KW + kw] = xw[0, kh:kh + H].reshape(H * W, Cin)
        patch = jnp.concatenate(taps, axis=-1)           # (H*W, 9*Cin), bf16
        w2d = w_ref[...].reshape(KH * KW * Cin, CO)      # row-major reshape, free
        acc = jnp.dot(patch, w2d, preferred_element_type=jnp.float32)
    else:
        # Small / unaligned Cin: per-tap matmuls (avoids sub-128-lane shuffles);
        # still tile-local, so the shifted slices stay bounded in VMEM.
        acc = jnp.zeros((H * W, CO), jnp.float32)
        for kw in range(KW):
            xw = xpad_ref[:, :, kw:kw + W, :]            # one sublane shift per kw
            for kh in range(KH):
                tap = xw[0, kh:kh + H].reshape(H * W, Cin)
                acc += jnp.dot(tap, w_ref[kh * KW + kw],
                               preferred_element_type=jnp.float32)

    conv_ref[...] = acc.reshape(1, H, W, CO)

    # Streaming per-channel statistics: sum/sumsq output blocks keep the same
    # block index along the (arbitrary) batch axis -> resident accumulators.
    @pl.when(n == 0)
    def _():
        sum_ref[...] = jnp.zeros_like(sum_ref)
        sumsq_ref[...] = jnp.zeros_like(sumsq_ref)

    sum_ref[...] += jnp.sum(acc, axis=0, keepdims=True)
    sumsq_ref[...] += jnp.sum(acc * acc, axis=0, keepdims=True)


def bn_relu_kernel(conv_ref, scale_ref, shift_ref, o_ref):
    """y = relu(conv * scale + shift); scale/shift broadcast over the lane axis."""
    y = conv_ref[...] * scale_ref[...] + shift_ref[...]
    o_ref[...] = jnp.maximum(y, 0.0)


def conv_sync_bn_relu(x_nchw, w_oihw, bias, gamma, beta, *, axis_name=None):
    """Conv2d(3x3, s=1, p=1, groups=1, bias) + SyncBatchNorm(train) + ReLU. NCHW in/out.

    `bias` cancels exactly under batch normalization (the batch mean contains it),
    so it never has to enter the kernels.  If `axis_name` is given (pmap /
    shard_map data parallelism), the BN statistics are all-reduced across that
    axis, giving true SyncBatchNorm semantics.
    """
    del bias  # mathematically a no-op: BN subtracts the (bias-containing) batch mean
    N, Cin, H, W = x_nchw.shape
    Cout = w_oihw.shape[0]

    Cin_p = ((Cin + 7) // 8) * 8
    Cout_p = ((Cout + CO_TILE - 1) // CO_TILE) * CO_TILE
    n_co = Cout_p // CO_TILE

    # NHWC, 1-pixel halo + channel pad, bf16 feeds the MXU at full rate.
    # TODO(synk): generate the halo in-kernel (masked edge taps) to avoid the
    # extra HBM round-trip of jnp.pad.
    x = jnp.transpose(x_nchw, (0, 2, 3, 1))
    x = jnp.pad(x, ((0, 0), (1, 1), (1, 1), (0, Cin_p - Cin))).astype(jnp.bfloat16)

    # (Cout, Cin, KH, KW) -> (KH*KW, Cin_p, Cout_p), tap-major contraction order.
    w = jnp.transpose(w_oihw, (2, 3, 1, 0))
    w = jnp.pad(w, ((0, 0), (0, 0), (0, Cin_p - Cin), (0, Cout_p - Cout)))
    w = w.reshape(KH * KW, Cin_p, Cout_p).astype(jnp.bfloat16)

    flops1 = 2 * N * H * W * KH * KW * Cin_p * Cout_p
    bytes1 = x.size * 2 + w.size * 2 + N * H * W * Cout_p * 4 + 2 * Cout_p * 4

    # ---------------- pass 1: conv + per-channel sum / sumsq -----------------
    conv, s, ss = pl.pallas_call(
        conv_stats_kernel,
        out_shape=(
            jax.ShapeDtypeStruct((N, H, W, Cout_p), jnp.float32),   # raw conv
            jax.ShapeDtypeStruct((1, Cout_p), jnp.float32),          # sum
            jax.ShapeDtypeStruct((1, Cout_p), jnp.float32),          # sum of squares
        ),
        grid_spec=pltpu.PrefetchScalarGridSpec(
            num_scalar_prefetch=0,
            grid=(n_co, N),                                # (cout blocks, batch)
            in_specs=[
                pl.BlockSpec((1, H + 2, W + 2, Cin_p), lambda co, n: (n, 0, 0, 0)),
                pl.BlockSpec((KH * KW, Cin_p, CO_TILE), lambda co, n: (0, 0, co)),
            ],
            out_specs=[
                pl.BlockSpec((1, H, W, CO_TILE), lambda co, n: (n, 0, 0, co)),
                pl.BlockSpec((1, CO_TILE), lambda co, n: (0, co)),
                pl.BlockSpec((1, CO_TILE), lambda co, n: (0, co)),
            ],
        ),
        compiler_params=pltpu.CompilerParams(
            dimension_semantics=("parallel", "arbitrary"),
            vmem_limit_bytes=VMEM_LIMIT),
        cost_estimate=pl.CostEstimate(
            flops=flops1, transcendentals=0, bytes_accessed=bytes1),
    )(x, w)

    # ------ fold conv bias + BN batch stats into one per-channel scale/shift ------
    cnt = jnp.float32(N * H * W)
    if axis_name is not None:          # true SyncBN across the data-parallel axis
        s = jax.lax.psum(s, axis_name)
        ss = jax.lax.psum(ss, axis_name)
        cnt = jax.lax.psum(cnt, axis_name)
    mean = s / cnt
    var = jnp.maximum(ss / cnt - mean * mean, 0.0)   # biased var; guard cancellation
    inv_std = jax.lax.rsqrt(var + EPS)
    gamma_p = jnp.pad(gamma.astype(jnp.float32), (0, Cout_p - Cout)).reshape(1, Cout_p)
    beta_p = jnp.pad(beta.astype(jnp.float32), (0, Cout_p - Cout)).reshape(1, Cout_p)
    scale = gamma_p * inv_std
    shift = beta_p - mean * scale
    # TODO(synk): PyTorch also updates running_mean/running_var in training mode;
    # expose (mean, var) as extra outputs if running-stat tracking is required.

    # ---------------- pass 2: normalize + ReLU (streaming, lane-dense) ----------------
    out = pl.pallas_call(
        bn_relu_kernel,
        out_shape=jax.ShapeDtypeStruct((N, H, W, Cout_p), jnp.float32),
        grid_spec=pltpu.PrefetchScalarGridSpec(
            num_scalar_prefetch=0,
            grid=(n_co, N),
            in_specs=[
                pl.BlockSpec((1, H, W, CO_TILE), lambda co, n: (n, 0, 0, co)),
                pl.BlockSpec((1, CO_TILE), lambda co, n: (0, co)),
                pl.BlockSpec((1, CO_TILE), lambda co, n: (0, co)),
            ],
            out_specs=pl.BlockSpec((1, H, W, CO_TILE), lambda co, n: (n, 0, 0, co)),
        ),
        compiler_params=pltpu.CompilerParams(
            dimension_semantics=("parallel", "parallel"),
            vmem_limit_bytes=VMEM_LIMIT),
        cost_estimate=pl.CostEstimate(
            flops=2 * N * H * W * Cout_p, transcendentals=0,
            bytes_accessed=2 * N * H * W * Cout_p * 4),
    )(conv, scale, shift)

    out = out[..., :Cout]                      # drop channel padding
    return jnp.transpose(out, (0, 3, 1, 2))    # back to NCHW


def _reference(x_nchw, w_oihw, bias, gamma, beta):
    """Plain-JAX reference matching the PyTorch module's forward (training BN)."""
    y = jax.lax.conv_general_dilated(
        x_nchw, w_oihw, window_strides=(1, 1), padding=((1, 1), (1, 1)),
        dimension_numbers=("NCHW", "OIHW", "NCHW"))
    y = y + bias.reshape(1, -1, 1, 1)
    mean = jnp.mean(y, axis=(0, 2, 3), keepdims=True)
    var = jnp.mean((y - mean) ** 2, axis=(0, 2, 3), keepdims=True)
    y = (y - mean) / jnp.sqrt(var + EPS)
    y = y * gamma.reshape(1, -1, 1, 1) + beta.reshape(1, -1, 1, 1)
    return jnp.maximum(y, 0.0)


if __name__ == "__main__":
    N, Cin, Cout, H, W = 2, 4, 8, 16, 16

    key = jax.random.PRNGKey(0)
    kx, kw_, kb, kg, kbt = jax.random.split(key, 5)

    x = jax.random.normal(kx, (N, Cin, H, W), dtype=jnp.float32)
    w_oihw = jax.random.normal(kw_, (Cout, Cin, KH, KW), dtype=jnp.float32) * 0.1
    bias = jax.random.normal(kb, (Cout,), dtype=jnp.float32) * 0.1
    gamma = 1.0 + 0.1 * jax.random.normal(kg, (Cout,), dtype=jnp.float32)
    beta = 0.1 * jax.random.normal(kbt, (Cout,), dtype=jnp.float32)

    out = jax.jit(conv_sync_bn_relu)(x, w_oihw, bias, gamma, beta)
    out = jax.block_until_ready(out)

    ref = _reference(x, w_oihw, bias, gamma, beta)
    assert out.shape == (N, Cout, H, W)
    # Tolerance sized for the intentional bf16 quantization of the MXU inputs.
    assert jnp.allclose(out, ref, atol=3e-2, rtol=3e-2), \
        f"max abs diff = {float(jnp.max(jnp.abs(out - ref)))}"

    print("KERNEL_OK")
</pallas_src>

<mosaic_0001>
module attributes {stable_mosaic.version = 11 : i64} {
  func.func @conv_stats_kernel(%arg0: i32, %arg1: i32, %arg2: memref<1x18x18x8xbf16, #tpu.memory_space<vmem>>, %arg3: memref<9x8x128xbf16, #tpu.memory_space<vmem>>, %arg4: memref<1x16x16x128xf32, #tpu.memory_space<vmem>>, %arg5: memref<1x128xf32, #tpu.memory_space<vmem>>, %arg6: memref<1x128xf32, #tpu.memory_space<vmem>>) attributes {dimension_semantics = [#tpu.dimension_semantics<parallel>, #tpu.dimension_semantics<arbitrary>], iteration_bounds = array<i64: 1, 2>, scalar_prefetch = 0 : i64, scratch_operands = 0 : i64, tpu.core_type = #tpu.core_type<tc>, window_params = [{transform_indices = @transform_0, window_bounds = array<i64: 1, 18, 18, 8>}, {transform_indices = @transform_1, window_bounds = array<i64: 9, 8, 128>}, {transform_indices = @transform_2, window_bounds = array<i64: 1, 16, 16, 128>}, {transform_indices = @transform_3, window_bounds = array<i64: 1, 128>}, {transform_indices = @transform_4, window_bounds = array<i64: 1, 128>}]} {
    %cst = arith.constant 0.000000e+00 : f32
    %0 = vector.broadcast %cst : f32 to vector<256x128xf32>
    %c0 = arith.constant 0 : index
    %c0_0 = arith.constant 0 : index
    %c0_1 = arith.constant 0 : index
    %c0_2 = arith.constant 0 : index
    %1 = vector.load %arg2[%c0, %c0_0, %c0_1, %c0_2] : memref<1x18x18x8xbf16, #tpu.memory_space<vmem>>, vector<1x18x16x8xbf16>
    %2 = vector.extract_strided_slice %1 {offsets = [0, 0, 0, 0], sizes = [1, 16, 16, 8], strides = [1, 1, 1, 1]} : vector<1x18x16x8xbf16> to vector<1x16x16x8xbf16>
    %3 = vector.shape_cast %2 : vector<1x16x16x8xbf16> to vector<16x16x8xbf16>
    %4 = vector.shape_cast %3 : vector<16x16x8xbf16> to vector<256x8xbf16>
    %c0_3 = arith.constant 0 : index
    %c0_4 = arith.constant 0 : index
    %c0_5 = arith.constant 0 : index
    %5 = vector.load %arg3[%c0_3, %c0_4, %c0_5] : memref<9x8x128xbf16, #tpu.memory_space<vmem>>, vector<1x8x128xbf16>
    %6 = vector.shape_cast %5 : vector<1x8x128xbf16> to vector<8x128xbf16>
    %cst_6 = arith.constant dense<0.000000e+00> : vector<256x128xf32>
    %7 = tpu.matmul %4, %6, %cst_6 {dimension_numbers = #tpu.dot_dimension_numbers<[1], [0], [0], [1], [0, 0, 1, 1], [], []>} : vector<256x8xbf16>, vector<8x128xbf16>, vector<256x128xf32> -> vector<256x128xf32>
    %8 = arith.addf %0, %7 : vector<256x128xf32>
    %9 = vector.extract_strided_slice %1 {offsets = [0, 1, 0, 0], sizes = [1, 16, 16, 8], strides = [1, 1, 1, 1]} : vector<1x18x16x8xbf16> to vector<1x16x16x8xbf16>
    %10 = vector.shape_cast %9 : vector<1x16x16x8xbf16> to vector<16x16x8xbf16>
    %11 = vector.shape_cast %10 : vector<16x16x8xbf16> to vector<256x8xbf16>
    %c3 = arith.constant 3 : index
    %c0_7 = arith.constant 0 : index
    %c0_8 = arith.constant 0 : index
    %12 = vector.load %arg3[%c3, %c0_7, %c0_8] : memref<9x8x128xbf16, #tpu.memory_space<vmem>>, vector<1x8x128xbf16>
    %13 = vector.shape_cast %12 : vector<1x8x128xbf16> to vector<8x128xbf16>
    %cst_9 = arith.constant dense<0.000000e+00> : vector<256x128xf32>
    %14 = tpu.matmul %11, %13, %cst_9 {dimension_numbers = #tpu.dot_dimension_numbers<[1], [0], [0], [1], [0, 0, 1, 1], [], []>} : vector<256x8xbf16>, vector<8x128xbf16>, vector<256x128xf32> -> vector<256x128xf32>
    %15 = arith.addf %8, %14 : vector<256x128xf32>
    %16 = vector.extract_strided_slice %1 {offsets = [0, 2, 0, 0], sizes = [1, 16, 16, 8], strides = [1, 1, 1, 1]} : vector<1x18x16x8xbf16> to vector<1x16x16x8xbf16>
    %17 = vector.shape_cast %16 : vector<1x16x16x8xbf16> to vector<16x16x8xbf16>
    %18 = vector.shape_cast %17 : vector<16x16x8xbf16> to vector<256x8xbf16>
    %c6 = arith.constant 6 : index
    %c0_10 = arith.constant 0 : index
    %c0_11 = arith.constant 0 : index
    %19 = vector.load %arg3[%c6, %c0_10, %c0_11] : memref<9x8x128xbf16, #tpu.memory_space<vmem>>, vector<1x8x128xbf16>
    %20 = vector.shape_cast %19 : vector<1x8x128xbf16> to vector<8x128xbf16>
    %cst_12 = arith.constant dense<0.000000e+00> : vector<256x128xf32>
    %21 = tpu.matmul %18, %20, %cst_12 {dimension_numbers = #tpu.dot_dimension_numbers<[1], [0], [0], [1], [0, 0, 1, 1], [], []>} : vector<256x8xbf16>, vector<8x128xbf16>, vector<256x128xf32> -> vector<256x128xf32>
    %22 = arith.addf %15, %21 : vector<256x128xf32>
    %c0_13 = arith.constant 0 : index
    %c0_14 = arith.constant 0 : index
    %c1 = arith.constant 1 : index
    %c0_15 = arith.constant 0 : index
    %23 = vector.load %arg2[%c0_13, %c0_14, %c1, %c0_15] : memref<1x18x18x8xbf16, #tpu.memory_space<vmem>>, vector<1x18x16x8xbf16>
    %24 = vector.extract_strided_slice %23 {offsets = [0, 0, 0, 0], sizes = [1, 16, 16, 8], strides = [1, 1, 1, 1]} : vector<1x18x16x8xbf16> to vector<1x16x16x8xbf16>
    %25 = vector.shape_cast %24 : vector<1x16x16x8xbf16> to vector<16x16x8xbf16>
    %26 = vector.shape_cast %25 : vector<16x16x8xbf16> to vector<256x8xbf16>
    %c1_16 = arith.constant 1 : index
    %c0_17 = arith.constant 0 : index
    %c0_18 = arith.constant 0 : index
    %27 = vector.load %arg3[%c1_16, %c0_17, %c0_18] : memref<9x8x128xbf16, #tpu.memory_space<vmem>>, vector<1x8x128xbf16>
    %28 = vector.shape_cast %27 : vector<1x8x128xbf16> to vector<8x128xbf16>
    %cst_19 = arith.constant dense<0.000000e+00> : vector<256x128xf32>
    %29 = tpu.matmul %26, %28, %cst_19 {dimension_numbers = #tpu.dot_dimension_numbers<[1], [0], [0], [1], [0, 0, 1, 1], [], []>} : vector<256x8xbf16>, vector<8x128xbf16>, vector<256x128xf32> -> vector<256x128xf32>
    %30 = arith.addf %22, %29 : vector<256x128xf32>
    %31 = vector.extract_strided_slice %23 {offsets = [0, 1, 0, 0], sizes = [1, 16, 16, 8], strides = [1, 1, 1, 1]} : vector<1x18x16x8xbf16> to vector<1x16x16x8xbf16>
    %32 = vector.shape_cast %31 : vector<1x16x16x8xbf16> to vector<16x16x8xbf16>
    %33 = vector.shape_cast %32 : vector<16x16x8xbf16> to vector<256x8xbf16>
    %c4 = arith.constant 4 : index
    %c0_20 = arith.constant 0 : index
    %c0_21 = arith.constant 0 : index
    %34 = vector.load %arg3[%c4, %c0_20, %c0_21] : memref<9x8x128xbf16, #tpu.memory_space<vmem>>, vector<1x8x128xbf16>
    %35 = vector.shape_cast %34 : vector<1x8x128xbf16> to vector<8x128xbf16>
    %cst_22 = arith.constant dense<0.000000e+00> : vector<256x128xf32>
    %36 = tpu.matmul %33, %35, %cst_22 {dimension_numbers = #tpu.dot_dimension_numbers<[1], [0], [0], [1], [0, 0, 1, 1], [], []>} : vector<256x8xbf16>, vector<8x128xbf16>, vector<256x128xf32> -> vector<256x128xf32>
    %37 = arith.addf %30, %36 : vector<256x128xf32>
    %38 = vector.extract_strided_slice %23 {offsets = [0, 2, 0, 0], sizes = [1, 16, 16, 8], strides = [1, 1, 1, 1]} : vector<1x18x16x8xbf16> to vector<1x16x16x8xbf16>
    %39 = vector.shape_cast %38 : vector<1x16x16x8xbf16> to vector<16x16x8xbf16>
    %40 = vector.shape_cast %39 : vector<16x16x8xbf16> to vector<256x8xbf16>
    %c7 = arith.constant 7 : index
    %c0_23 = arith.constant 0 : index
    %c0_24 = arith.constant 0 : index
    %41 = vector.load %arg3[%c7, %c0_23, %c0_24] : memref<9x8x128xbf16, #tpu.memory_space<vmem>>, vector<1x8x128xbf16>
    %42 = vector.shape_cast %41 : vector<1x8x128xbf16> to vector<8x128xbf16>
    %cst_25 = arith.constant dense<0.000000e+00> : vector<256x128xf32>
    %43 = tpu.matmul %40, %42, %cst_25 {dimension_numbers = #tpu.dot_dimension_numbers<[1], [0], [0], [1], [0, 0, 1, 1], [], []>} : vector<256x8xbf16>, vector<8x128xbf16>, vector<256x128xf32> -> vector<256x128xf32>
    %44 = arith.addf %37, %43 : vector<256x128xf32>
    %c0_26 = arith.constant 0 : index
    %c0_27 = arith.constant 0 : index
    %c2 = arith.constant 2 : index
    %c0_28 = arith.constant 0 : index
    %45 = vector.load %arg2[%c0_26, %c0_27, %c2, %c0_28] : memref<1x18x18x8xbf16, #tpu.memory_space<vmem>>, vector<1x18x16x8xbf16>
    %46 = vector.extract_strided_slice %45 {offsets = [0, 0, 0, 0], sizes = [1, 16, 16, 8], strides = [1, 1, 1, 1]} : vector<1x18x16x8xbf16> to vector<1x16x16x8xbf16>
    %47 = vector.shape_cast %46 : vector<1x16x16x8xbf16> to vector<16x16x8xbf16>
    %48 = vector.shape_cast %47 : vector<16x16x8xbf16> to vector<256x8xbf16>
    %c2_29 = arith.constant 2 : index
    %c0_30 = arith.constant 0 : index
    %c0_31 = arith.constant 0 : index
    %49 = vector.load %arg3[%c2_29, %c0_30, %c0_31] : memref<9x8x128xbf16, #tpu.memory_space<vmem>>, vector<1x8x128xbf16>
    %50 = vector.shape_cast %49 : vector<1x8x128xbf16> to vector<8x128xbf16>
    %cst_32 = arith.constant dense<0.000000e+00> : vector<256x128xf32>
    %51 = tpu.matmul %48, %50, %cst_32 {dimension_numbers = #tpu.dot_dimension_numbers<[1], [0], [0], [1], [0, 0, 1, 1], [], []>} : vector<256x8xbf16>, vector<8x128xbf16>, vector<256x128xf32> -> vector<256x128xf32>
    %52 = arith.addf %44, %51 : vector<256x128xf32>
    %53 = vector.extract_strided_slice %45 {offsets = [0, 1, 0, 0], sizes = [1, 16, 16, 8], strides = [1, 1, 1, 1]} : vector<1x18x16x8xbf16> to vector<1x16x16x8xbf16>
    %54 = vector.shape_cast %53 : vector<1x16x16x8xbf16> to vector<16x16x8xbf16>
    %55 = vector.shape_cast %54 : vector<16x16x8xbf16> to vector<256x8xbf16>
    %c5 = arith.constant 5 : index
    %c0_33 = arith.constant 0 : index
    %c0_34 = arith.constant 0 : index
    %56 = vector.load %arg3[%c5, %c0_33, %c0_34] : memref<9x8x128xbf16, #tpu.memory_space<vmem>>, vector<1x8x128xbf16>
    %57 = vector.shape_cast %56 : vector<1x8x128xbf16> to vector<8x128xbf16>
    %cst_35 = arith.constant dense<0.000000e+00> : vector<256x128xf32>
    %58 = tpu.matmul %55, %57, %cst_35 {dimension_numbers = #tpu.dot_dimension_numbers<[1], [0], [0], [1], [0, 0, 1, 1], [], []>} : vector<256x8xbf16>, vector<8x128xbf16>, vector<256x128xf32> -> vector<256x128xf32>
    %59 = arith.addf %52, %58 : vector<256x128xf32>
    %60 = vector.extract_strided_slice %45 {offsets = [0, 2, 0, 0], sizes = [1, 16, 16, 8], strides = [1, 1, 1, 1]} : vector<1x18x16x8xbf16> to vector<1x16x16x8xbf16>
    %61 = vector.shape_cast %60 : vector<1x16x16x8xbf16> to vector<16x16x8xbf16>
    %62 = vector.shape_cast %61 : vector<16x16x8xbf16> to vector<256x8xbf16>
    %c8 = arith.constant 8 : index
    %c0_36 = arith.constant 0 : index
    %c0_37 = arith.constant 0 : index
    %63 = vector.load %arg3[%c8, %c0_36, %c0_37] : memref<9x8x128xbf16, #tpu.memory_space<vmem>>, vector<1x8x128xbf16>
    %64 = vector.shape_cast %63 : vector<1x8x128xbf16> to vector<8x128xbf16>
    %cst_38 = arith.constant dense<0.000000e+00> : vector<256x128xf32>
    %65 = tpu.matmul %62, %64, %cst_38 {dimension_numbers = #tpu.dot_dimension_numbers<[1], [0], [0], [1], [0, 0, 1, 1], [], []>} : vector<256x8xbf16>, vector<8x128xbf16>, vector<256x128xf32> -> vector<256x128xf32>
    %66 = arith.addf %59, %65 : vector<256x128xf32>
    %67 = vector.shape_cast %66 : vector<256x128xf32> to vector<1x16x16x128xf32>
    %c0_39 = arith.constant 0 : index
    %c0_40 = arith.constant 0 : index
    %c0_41 = arith.constant 0 : index
    %c0_42 = arith.constant 0 : index
    %68 = vector.load %arg4[%c0_39, %c0_40, %c0_41, %c0_42] : memref<1x16x16x128xf32, #tpu.memory_space<vmem>>, vector<1x16x16x128xf32>
    tpu.vector_store %arg4[%c0_39, %c0_40, %c0_41, %c0_42], %67 {strides = array<i32>} : memref<1x16x16x128xf32, #tpu.memory_space<vmem>>, vector<1x16x16x128xf32>,
    %c0_i32 = arith.constant 0 : i32
    %69 = arith.cmpi eq, %arg1, %c0_i32 : i32
    %70 = arith.extui %69 : i1 to i32
    %c0_i32_43 = arith.constant 0 : i32
    %71 = arith.cmpi ne, %70, %c0_i32_43 : i32
    scf.if %71 {
      %cst_54 = arith.constant 0.000000e+00 : f32
      %83 = vector.broadcast %cst_54 : f32 to vector<1x128xf32>
      %c0_55 = arith.constant 0 : index
      %c0_56 = arith.constant 0 : index
      %84 = vector.load %arg5[%c0_55, %c0_56] : memref<1x128xf32, #tpu.memory_space<vmem>>, vector<1x128xf32>
      tpu.vector_store %arg5[%c0_55, %c0_56], %83 {strides = array<i32>} : memref<1x128xf32, #tpu.memory_space<vmem>>, vector<1x128xf32>,
      %cst_57 = arith.constant 0.000000e+00 : f32
      %85 = vector.broadcast %cst_57 : f32 to vector<1x128xf32>
      %c0_58 = arith.constant 0 : index
      %c0_59 = arith.constant 0 : index
      %86 = vector.load %arg6[%c0_58, %c0_59] : memref<1x128xf32, #tpu.memory_space<vmem>>, vector<1x128xf32>
      tpu.vector_store %arg6[%c0_58, %c0_59], %85 {strides = array<i32>} : memref<1x128xf32, #tpu.memory_space<vmem>>, vector<1x128xf32>,
    } else {
    }
    %c0_44 = arith.constant 0 : index
    %c0_45 = arith.constant 0 : index
    %72 = vector.load %arg5[%c0_44, %c0_45] : memref<1x128xf32, #tpu.memory_space<vmem>>, vector<1x128xf32>
    %cst_46 = arith.constant dense<0.000000e+00> : vector<128xf32>
    %73 = vector.multi_reduction <add>, %66, %cst_46 [0] : vector<256x128xf32> to vector<128xf32>
    %74 = vector.shape_cast %73 : vector<128xf32> to vector<1x128xf32>
    %75 = arith.addf %72, %74 : vector<1x128xf32>
    %c0_47 = arith.constant 0 : index
    %c0_48 = arith.constant 0 : index
    %76 = vector.load %arg5[%c0_47, %c0_48] : memref<1x128xf32, #tpu.memory_space<vmem>>, vector<1x128xf32>
    tpu.vector_store %arg5[%c0_47, %c0_48], %75 {strides = array<i32>} : memref<1x128xf32, #tpu.memory_space<vmem>>, vector<1x128xf32>,
    %c0_49 = arith.constant 0 : index
    %c0_50 = arith.constant 0 : index
    %77 = vector.load %arg6[%c0_49, %c0_50] : memref<1x128xf32, #tpu.memory_space<vmem>>, vector<1x128xf32>
    %78 = arith.mulf %66, %66 : vector<256x128xf32>
    %cst_51 = arith.constant dense<0.000000e+00> : vector<128xf32>
    %79 = vector.multi_reduction <add>, %78, %cst_51 [0] : vector<256x128xf32> to vector<128xf32>
    %80 = vector.shape_cast %79 : vector<128xf32> to vector<1x128xf32>
    %81 = arith.addf %77, %80 : vector<1x128xf32>
    %c0_52 = arith.constant 0 : index
    %c0_53 = arith.constant 0 : index
    %82 = vector.load %arg6[%c0_52, %c0_53] : memref<1x128xf32, #tpu.memory_space<vmem>>, vector<1x128xf32>
    tpu.vector_store %arg6[%c0_52, %c0_53], %81 {strides = array<i32>} : memref<1x128xf32, #tpu.memory_space<vmem>>, vector<1x128xf32>,
    return
  }
  func.func @transform_0(%arg0: i32, %arg1: i32) -> (i32, i32, i32, i32) {
    %c0_i32 = arith.constant 0 : i32
    %c0_i32_0 = arith.constant 0 : i32
    %c0_i32_1 = arith.constant 0 : i32
    %c0_i32_2 = arith.constant 0 : i32
    return %arg1, %c0_i32, %c0_i32_0, %c0_i32_1 : i32, i32, i32, i32
  }
  func.func @transform_1(%arg0: i32, %arg1: i32) -> (i32, i32, i32) {
    %c0_i32 = arith.constant 0 : i32
    %c0_i32_0 = arith.constant 0 : i32
    %c0_i32_1 = arith.constant 0 : i32
    return %c0_i32, %c0_i32_0, %arg0 : i32, i32, i32
  }
  func.func @transform_2(%arg0: i32, %arg1: i32) -> (i32, i32, i32, i32) {
    %c0_i32 = arith.constant 0 : i32
    %c0_i32_0 = arith.constant 0 : i32
    %c0_i32_1 = arith.constant 0 : i32
    return %arg1, %c0_i32, %c0_i32_0, %arg0 : i32, i32, i32, i32
  }
  func.func @transform_3(%arg0: i32, %arg1: i32) -> (i32, i32) {
    %c0_i32 = arith.constant 0 : i32
    %c0_i32_0 = arith.constant 0 : i32
    return %c0_i32, %arg0 : i32, i32
  }
  func.func @transform_4(%arg0: i32, %arg1: i32) -> (i32, i32) {
    %c0_i32 = arith.constant 0 : i32
    %c0_i32_0 = arith.constant 0 : i32
    return %c0_i32, %arg0 : i32, i32
  }
}

module attributes {stable_mosaic.version = 11 : i64} {
  func.func @bn_relu_kernel(%arg0: i32, %arg1: i32, %arg2: memref<1x16x16x128xf32, #tpu.memory_space<vmem>>, %arg3: memref<1x128xf32, #tpu.memory_space<vmem>>, %arg4: memref<1x128xf32, #tpu.memory_space<vmem>>, %arg5: memref<1x16x16x128xf32, #tpu.memory_space<vmem>>) attributes {dimension_semantics = [#tpu.dimension_semantics<parallel>, #tpu.dimension_semantics<parallel>], iteration_bounds = array<i64: 1, 2>, scalar_prefetch = 0 : i64, scratch_operands = 0 : i64, tpu.core_type = #tpu.core_type<tc>, window_params = [{transform_indices = @transform_0, window_bounds = array<i64: 1, 16, 16, 128>}, {transform_indices = @transform_1, window_bounds = array<i64: 1, 128>}, {transform_indices = @transform_2, window_bounds = array<i64: 1, 128>}, {transform_indices = @transform_3, window_bounds = array<i64: 1, 16, 16, 128>}]} {
    %c0 = arith.constant 0 : index
    %c0_0 = arith.constant 0 : index
    %c0_1 = arith.constant 0 : index
    %c0_2 = arith.constant 0 : index
    %0 = vector.load %arg2[%c0, %c0_0, %c0_1, %c0_2] : memref<1x16x16x128xf32, #tpu.memory_space<vmem>>, vector<1x16x16x128xf32>
    %c0_3 = arith.constant 0 : index
    %c0_4 = arith.constant 0 : index
    %1 = vector.load %arg3[%c0_3, %c0_4] : memref<1x128xf32, #tpu.memory_space<vmem>>, vector<1x128xf32>
    %2 = vector.shape_cast %1 : vector<1x128xf32> to vector<1x1x1x128xf32>
    %3 = vector.broadcast %2 : vector<1x1x1x128xf32> to vector<1x16x16x128xf32>
    %4 = arith.mulf %0, %3 : vector<1x16x16x128xf32>
    %c0_5 = arith.constant 0 : index
    %c0_6 = arith.constant 0 : index
    %5 = vector.load %arg4[%c0_5, %c0_6] : memref<1x128xf32, #tpu.memory_space<vmem>>, vector<1x128xf32>
    %6 = vector.shape_cast %5 : vector<1x128xf32> to vector<1x1x1x128xf32>
    %7 = vector.broadcast %6 : vector<1x1x1x128xf32> to vector<1x16x16x128xf32>
    %8 = arith.addf %4, %7 : vector<1x16x16x128xf32>
    %cst = arith.constant 0.000000e+00 : f32
    %9 = vector.broadcast %cst : f32 to vector<1x16x16x128xf32>
    %10 = arith.maximumf %8, %9 : vector<1x16x16x128xf32>
    %c0_7 = arith.constant 0 : index
    %c0_8 = arith.constant 0 : index
    %c0_9 = arith.constant 0 : index
    %c0_10 = arith.constant 0 : index
    %11 = vector.load %arg5[%c0_7, %c0_8, %c0_9, %c0_10] : memref<1x16x16x128xf32, #tpu.memory_space<vmem>>, vector<1x16x16x128xf32>
    tpu.vector_store %arg5[%c0_7, %c0_8, %c0_9, %c0_10], %10 {strides = array<i32>} : memref<1x16x16x128xf32, #tpu.memory_space<vmem>>, vector<1x16x16x128xf32>,
    return
  }
  func.func @transform_0(%arg0: i32, %arg1: i32) -> (i32, i32, i32, i32) {
    %c0_i32 = arith.constant 0 : i32
    %c0_i32_0 = arith.constant 0 : i32
    %c0_i32_1 = arith.constant 0 : i32
    return %arg1, %c0_i32, %c0_i32_0, %arg0 : i32, i32, i32, i32
  }
  func.func @transform_1(%arg0: i32, %arg1: i32) -> (i32, i32) {
    %c0_i32 = arith.constant 0 : i32
    %c0_i32_0 = arith.constant 0 : i32
    return %c0_i32, %arg0 : i32, i32
  }
  func.func @transform_2(%arg0: i32, %arg1: i32) -> (i32, i32) {
    %c0_i32 = arith.constant 0 : i32
    %c0_i32_0 = arith.constant 0 : i32
    return %c0_i32, %arg0 : i32, i32
  }
  func.func @transform_3(%arg0: i32, %arg1: i32) -> (i32, i32, i32, i32) {
    %c0_i32 = arith.constant 0 : i32
    %c0_i32_0 = arith.constant 0 : i32
    %c0_i32_1 = arith.constant 0 : i32
    return %arg1, %c0_i32, %c0_i32_0, %arg0 : i32, i32, i32, i32
  }
}

</mosaic_0001>

<llo_original>
// kernel: conv_sync_bn_relu.3
$region0: #{conv_sync_bn_relu.3}
  #allocation0 [shape = 'u32[]', space=smem, size = 0x4, offset = 0x4, fixed_abs, tag = 'smem constant byte address 0x4 - core index']
  #allocation1 [shape = 'u32[144,128]{1,0:T(1,128)}', space=vmem, size = 0x12000, scoped, tag = 'internal scratch']
  %s0 = inlined_call_operand.vmem [shape: f32[2,16,16,128], index: 0, kind: input, shape index: {}]
  %s1 = inlined_call_operand.vmem [shape: f32[1,128], index: 1, kind: input, shape index: {}]
  %s2 = inlined_call_operand.vmem [shape: f32[1,128], index: 2, kind: input, shape index: {}]
  %s3 = inlined_call_operand.vmem [shape: f32[2,16,16,128], index: 3, kind: output, shape index: {}]
  %s4 = sld [smem:[#allocation0]]
  $region45: #{conv_sync_bn_relu.3} parent=0
    _
  %s6 = ssub.s32 1, %s4
  %s7 = scalar_select 0, %s6, %s4
  loop: start=0, step=1, limit=4
  $region2: #{conv_sync_bn_relu.3} parent=0 // loop_pre_header
    _
  $region3: #{conv_sync_bn_relu.3} parent=0 // loop_header
    %s9 = sphi 0, %s13
    %p10 = scmp.ge.s32.totalorder %s9, 4
    %s16 = sphi 0, %s28
    %s17 = sphi 0, %s24
    %s18 = sphi 0, %s16
    %s19 = sphi 0, %s17
    %s20 = sphi 0, %s18
    %s21 = sphi 0, %s19
    %s33 = sphi 0, %s35
    %s36 = sphi 0, %s33
    %s37 = sphi 0, %s36
    %s53 = sphi 0, %s37
    %s59 = sphi 0, %s61
    %s62 = sphi 0, %s59
    %s63 = sphi 0, %s62
    %s79 = sphi 0, %s63
    %s85 = sphi 0, %s87
    %s88 = sphi 0, %s85
    %s89 = sphi 0, %s88
    %s105 = sphi 0, %s89
    %s113 = sphi 0, %s115
    %s116 = sphi 0, %s113
    %s117 = sphi 0, %s116
    %s133 = sphi 0, %s117
  $region4: #{conv_sync_bn_relu.3} parent=0 // loop_header_branch
    %12 = sbr.rel (%p10) target = $region8
  $region5: #{conv_sync_bn_relu.3} parent=0 // loop_body
    %s14 = ssub.s32 %s9, 1
    %s15 = ssub.s32 %s9, 2
    %s22 = sadd.s32 1, %s17
    %p23 = scmp.ge.s32.totalorder %s22, 2
    %s24 = scalar_select %p23, 0, %s22
    %s25 = sadd.s32 1, %s16
    %s26 = scalar_select %p23, %s25, %s16
    %p27 = scmp.ge.s32.totalorder %s26, 1
    %s28 = scalar_select %p27, 0, %s26
    %s29 = ssub.s32 %s17, %s24
    %s30 = ssub.s32 %s16, %s28
    %s31 = sor.u32 %s29, %s30
    %p32 = scmp.eq.s32.totalorder %s31, 0
    %s34 = sadd.s32 %s33, 1
    %s35 = scalar_select %p32, %s33, %s34
    %p38 = pneg %p32
    %p39 = scmp.eq.s32.totalorder %s9, 1
    %p40 = por %p38, %p39
    %p41 = scmp.ne.s32.totalorder %s33, %s36
    %p42 = scmp.eq.s32.totalorder %s9, 0
    %p43 = por %p41, %p42
    %p44 = scmp.ne.s32.totalorder %s33, %s36
    %p45 = scmp.eq.s32.totalorder %s14, 1
    %p46 = por %p44, %p45
    %p47 = scmp.ne.s32.totalorder %s36, %s37
    %p48 = scmp.eq.s32.totalorder %s14, 0
    %p49 = por %p47, %p48
    %p50 = scmp.ne.s32.totalorder %s36, %s37
    %p51 = scmp.eq.s32.totalorder %s15, 1
    %p52 = por %p50, %p51
    %p54 = scmp.ne.s32.totalorder %s37, %s53
    %p55 = scmp.eq.s32.totalorder %s15, 0
    %p56 = por %p54, %p55
    %s57 = ssub.s32 %s16, %s28
    %p58 = scmp.eq.s32.totalorder %s57, 0
    %s60 = sadd.s32 %s59, 1
    %s61 = scalar_select %p58, %s59, %s60
    %p64 = pneg %p58
    %p65 = scmp.eq.s32.totalorder %s9, 1
    %p66 = por %p64, %p65
    %p67 = scmp.ne.s32.totalorder %s59, %s62
    %p68 = scmp.eq.s32.totalorder %s9, 0
    %p69 = por %p67, %p68
    %p70 = scmp.ne.s32.totalorder %s59, %s62
    %p71 = scmp.eq.s32.totalorder %s14, 1
    %p72 = por %p70, %p71
    %p73 = scmp.ne.s32.totalorder %s62, %s63
    %p74 = scmp.eq.s32.totalorder %s14, 0
    %p75 = por %p73, %p74
    %p76 = scmp.ne.s32.totalorder %s62, %s63
    %p77 = scmp.eq.s32.totalorder %s15, 1
    %p78 = por %p76, %p77
    %p80 = scmp.ne.s32.totalorder %s63, %s79
    %p81 = scmp.eq.s32.totalorder %s15, 0
    %p82 = por %p80, %p81
    %s83 = ssub.s32 %s16, %s28
    %p84 = scmp.eq.s32.totalorder %s83, 0
    %s86 = sadd.s32 %s85, 1
    %s87 = scalar_select %p84, %s85, %s86
    %p90 = pneg %p84
    %p91 = scmp.eq.s32.totalorder %s9, 1
    %p92 = por %p90, %p91
    %p93 = scmp.ne.s32.totalorder %s85, %s88
    %p94 = scmp.eq.s32.totalorder %s9, 0
    %p95 = por %p93, %p94
    %p96 = scmp.ne.s32.totalorder %s85, %s88
    %p97 = scmp.eq.s32.totalorder %s14, 1
    %p98 = por %p96, %p97
    %p99 = scmp.ne.s32.totalorder %s88, %s89
    %p100 = scmp.eq.s32.totalorder %s14, 0
    %p101 = por %p99, %p100
    %p102 = scmp.ne.s32.totalorder %s88, %s89
    %p103 = scmp.eq.s32.totalorder %s15, 1
    %p104 = por %p102, %p103
    %p106 = scmp.ne.s32.totalorder %s89, %s105
    %p107 = scmp.eq.s32.totalorder %s15, 0
    %p108 = por %p106, %p107
    %s109 = ssub.s32 %s17, %s24
    %s110 = ssub.s32 %s16, %s28
    %s111 = sor.u32 %s109, %s110
    %p112 = scmp.eq.s32.totalorder %s111, 0
    %s114 = sadd.s32 %s113, 1
    %s115 = scalar_select %p112, %s113, %s114
    %p118 = pneg %p112
    %p119 = scmp.eq.s32.totalorder %s9, 1
    %p120 = por %p118, %p119
    %p121 = scmp.ne.s32.totalorder %s113, %s116
    %p122 = scmp.eq.s32.totalorder %s9, 0
    %p123 = por %p121, %p122
    %p124 = scmp.ne.s32.totalorder %s113, %s116
    %p125 = scmp.eq.s32.totalorder %s14, 1
    %p126 = por %p124, %p125
    %p127 = scmp.ne.s32.totalorder %s116, %s117
    %p128 = scmp.eq.s32.totalorder %s14, 0
    %p129 = por %p127, %p128
    %p130 = scmp.ne.s32.totalorder %s116, %s117
    %p131 = scmp.eq.s32.totalorder %s15, 1
    %p132 = por %p130, %p131
    %p134 = scmp.ne.s32.totalorder %s117, %s133
    %p135 = scmp.eq.s32.totalorder %s15, 0
    %p136 = por %p134, %p135
    %p137 = scmp.le.s32.totalorder 1, %s9
    %p138 = scmp.lt.s32.totalorder %s9, 3
    %p139 = pnand %p137, %p138
    %p140 = pneg %p139
    // Predicated region
    $region9: #{conv_sync_bn_relu.3} parent=5 // pred_check
      _
    $region10: #{conv_sync_bn_relu.3} parent=5 // pred_check_branch
      %142 = sbr.rel (%p139) target = $region12
    $region11: #{conv_sync_bn_relu.3} parent=5 // pred_region
      %s143 = ssub.s32 %s9, 1
      // Predicated region
      $region13: #{conv_sync_bn_relu.3} parent=11 // pred_check
        %p144 = pneg %p75
      $region14: #{conv_sync_bn_relu.3} parent=11 // pred_check_branch
        %146 = sbr.rel (%p144) target = $region16
      $region15: #{conv_sync_bn_relu.3} parent=11 // pred_region
        %p147 = scmp.lt.s32.totalorder %s18, 0
        %s148 = scalar_select %p147, %s18, 0
        %s149 = scalar_lea.vmem %s1, %s148
      $region16: #{conv_sync_bn_relu.3} parent=11 // pred_fallthru
        _
      // Predicated region
      $region17: #{conv_sync_bn_relu.3} parent=11 // pred_check
        %p150 = pneg %p101
      $region18: #{conv_sync_bn_relu.3} parent=11 // pred_check_branch
        %152 = sbr.rel (%p150) target = $region20
      $region19: #{conv_sync_bn_relu.3} parent=11 // pred_region
        %p153 = scmp.lt.s32.totalorder %s18, 0
        %s154 = scalar_select %p153, %s18, 0
        %s155 = scalar_lea.vmem %s2, %s154
      $region20: #{conv_sync_bn_relu.3} parent=11 // pred_fallthru
        _
    $region12: #{conv_sync_bn_relu.3} parent=5 // pred_fallthru
      _
    %p156 = scmp.lt.s32.totalorder %s9, 2
    // Predicated region
    $region21: #{conv_sync_bn_relu.3} parent=5 // pred_check
      %p157 = pneg %p156
    $region22: #{conv_sync_bn_relu.3} parent=5 // pred_check_branch
      %159 = sbr.rel (%p157) target = $region24
    $region23: #{conv_sync_bn_relu.3} parent=5 // pred_region
      // Predicated region
      $region25: #{conv_sync_bn_relu.3} parent=23 // pred_check
        %p160 = pneg %p43
      $region26: #{conv_sync_bn_relu.3} parent=23 // pred_check_branch
        %162 = sbr.rel (%p160) target = $region28
      $region27: #{conv_sync_bn_relu.3} parent=23 // pred_region
        %p163 = scmp.lt.s32.totalorder %s17, 1
        %s164 = scalar_select %p163, %s17, 1
        %p165 = scmp.lt.s32.totalorder %s16, 0
        %s166 = scalar_select %p165, %s16, 0
        %s167 = smul.addr %s164, 32
        %s168 = sadd.s32 %s166, %s167
        %s169 = smul.addr %s168, 8
        %s170 = scalar_lea.vmem %s0, %s169
      $region28: #{conv_sync_bn_relu.3} parent=23 // pred_fallthru
        _
    $region24: #{conv_sync_bn_relu.3} parent=5 // pred_fallthru
      _
    %p171 = scmp.le.s32.totalorder 1, %s9
    %p172 = scmp.lt.s32.totalorder %s9, 3
    %p173 = pnand %p171, %p172
    %p174 = pneg %p173
    // Predicated region
    $region29: #{conv_sync_bn_relu.3} parent=5 // pred_check
      _
    $region30: #{conv_sync_bn_relu.3} parent=5 // pred_check_branch
      %176 = sbr.rel (%p173) target = $region32
    $region31: #{conv_sync_bn_relu.3} parent=5 // pred_region
      %s177 = ssub.s32 %s9, 1
      %p178 = scmp.lt.s32.totalorder %s19, 1
      %s179 = scalar_select %p178, %s19, 1
      %p180 = scmp.lt.s32.totalorder %s18, 0
      %s181 = scalar_select %p180, %s18, 0
      %s182 = smul.addr %s179, 32
      %s183 = sadd.s32 %s181, %s182
      %s184 = smul.addr %s183, 8
      %s185 = scalar_lea.vmem %s0, %s184
      %p186 = pneg %p49
      %p187 = pneg %p46
      %p188 = scmp.lt.s32.totalorder %s18, 0
      %s189 = scalar_select %p188, %s18, 0
      %s190 = scalar_lea.vmem %s1, %s189
      %p191 = pneg %p75
      %p192 = pneg %p72
      %p193 = scmp.lt.s32.totalorder %s18, 0
      %s194 = scalar_select %p193, %s18, 0
      %s195 = scalar_lea.vmem %s2, %s194
      %p196 = pneg %p101
      %p197 = pneg %p98
      %p198 = pneg %p129
      %p199 = pneg %p126
      %p200 = scmp.lt.s32.totalorder %s19, 1
      %s201 = scalar_select %p200, %s19, 1
      %p202 = scmp.lt.s32.totalorder %s18, 0
      %s203 = scalar_select %p202, %s18, 0
      %s204 = smul.addr %s201, 32
      %s205 = sadd.s32 %s203, %s204
      %s206 = smul.addr %s205, 8
      %s207 = scalar_lea.vmem %s3, %s206
      %p208 = scmp.lt.s32.totalorder %s19, 1
      %s209 = scalar_select %p208, %s19, 1
      %p210 = scmp.lt.s32.totalorder %s18, 0
      %s211 = scalar_select %p210, %s18, 0
      %s212 = smul.addr %s209, 32
      %s213 = sadd.s32 %s211, %s212
      %s214 = smul.addr %s213, 8
      %s215 = scalar_lea.vmem %s0, %s214
      %p216 = scmp.lt.s32.totalorder %s18, 0
      %s217 = scalar_select %p216, %s18, 0
      %s218 = scalar_lea.vmem %s1, %s217
      %p219 = scmp.lt.s32.totalorder %s18, 0
      %s220 = scalar_select %p219, %s18, 0
      %s221 = scalar_lea.vmem %s2, %s220
      %p222 = scmp.lt.s32.totalorder %s19, 1
      %s223 = scalar_select %p222, %s19, 1
      %p224 = scmp.lt.s32.totalorder %s18, 0
      %s225 = scalar_select %p224, %s18, 0
      %s226 = smul.addr %s223, 32
      %s227 = sadd.s32 %s225, %s226
      %s228 = smul.addr %s227, 8
      %s229 = scalar_lea.vmem %s3, %s228
      %v230 = vld [vmem:[%s215] sm:$0xff]
      %v231 = vld [vmem:[%s215 + $0x8] sm:$0xff]
      %v232 = vld [vmem:[%s215 + $0x10] sm:$0xff]
      %v233 = vld [vmem:[%s215 + $0x18] sm:$0xff]
      %v234 = vld [vmem:[%s215 + $0x20] sm:$0xff]
      %v235 = vld [vmem:[%s215 + $0x28] sm:$0xff]
      %v236 = vld [vmem:[%s215 + $0x30] sm:$0xff]
      %v237 = vld [vmem:[%s215 + $0x38] sm:$0xff]
      %v238 = vld [vmem:[%s215 + $0x40] sm:$0xff]
      %v239 = vld [vmem:[%s215 + $0x48] sm:$0xff]
      %v240 = vld [vmem:[%s215 + $0x50] sm:$0xff]
      %v241 = vld [vmem:[%s215 + $0x58] sm:$0xff]
      %v242 = vld [vmem:[%s215 + $0x60] sm:$0xff]
      %v243 = vld [vmem:[%s215 + $0x68] sm:$0xff]
      %v244 = vld [vmem:[%s215 + $0x70] sm:$0xff]
      %v245 = vld [vmem:[%s215 + $0x78] sm:$0xff]
      %v246 = vld [vmem:[%s215 + $0x80] sm:$0xff]
      %v247 = vld [vmem:[%s215 + $0x88] sm:$0xff]
      %v248 = vld [vmem:[%s215 + $0x90] sm:$0xff]
      %v249 = vld [vmem:[%s215 + $0x98] sm:$0xff]
      %v250 = vld [vmem:[%s215 + $0xa0] sm:$0xff]
      %v251 = vld [vmem:[%s215 + $0xa8] sm:$0xff]
      %v252 = vld [vmem:[%s215 + $0xb0] sm:$0xff]
      %v253 = vld [vmem:[%s215 + $0xb8] sm:$0xff]
      %v254 = vld [vmem:[%s215 + $0xc0] sm:$0xff]
      %v255 = vld [vmem:[%s215 + $0xc8] sm:$0xff]
      %v256 = vld [vmem:[%s215 + $0xd0] sm:$0xff]
      %v257 = vld [vmem:[%s215 + $0xd8] sm:$0xff]
      %v258 = vld [vmem:[%s215 + $0xe0] sm:$0xff]
      %v259 = vld [vmem:[%s215 + $0xe8] sm:$0xff]
      %v260 = vld [vmem:[%s215 + $0xf0] sm:$0xff]
      %v261 = vld [vmem:[%s215 + $0xf8] sm:$0xff]
      %v262 = vld [vmem:[%s218] sm:$0x1]
      %v264 = vlaneseq
      %v265 = vshrl.u32 %v264, 7
      %v266 = vsub.s32 0, %v265
      %v267 = vrot.slane %v262, %v266
      %v269 = vmul.f32 %v230, %v267
      %v270 = vmul.f32 %v231, %v267
      %v271 = vmul.f32 %v232, %v267
      %v272 = vmul.f32 %v233, %v267
      %v273 = vmul.f32 %v234, %v267
      %v274 = vmul.f32 %v235, %v267
      %v275 = vmul.f32 %v236, %v267
      %v276 = vmul.f32 %v237, %v267
      %v277 = vmul.f32 %v238, %v267
      %v278 = vmul.f32 %v239, %v267
      %v279 = vmul.f32 %v240, %v267
      %v280 = vmul.f32 %v241, %v267
      %v281 = vmul.f32 %v242, %v267
      %v282 = vmul.f32 %v243, %v267
      %v283 = vmul.f32 %v244, %v267
      %v284 = vmul.f32 %v245, %v267
      %v285 = vmul.f32 %v246, %v267
      %v286 = vmul.f32 %v247, %v267
      %v287 = vmul.f32 %v248, %v267
      %v288 = vmul.f32 %v249, %v267
      %v289 = vmul.f32 %v250, %v267
      %v290 = vmul.f32 %v251, %v267
      %v291 = vmul.f32 %v252, %v267
      %v292 = vmul.f32 %v253, %v267
      %v293 = vmul.f32 %v254, %v267
      %v294 = vmul.f32 %v255, %v267
      %v295 = vmul.f32 %v256, %v267
      %v296 = vmul.f32 %v257, %v267
      %v297 = vmul.f32 %v258, %v267
      %v298 = vmul.f32 %v259, %v267
      %v299 = vmul.f32 %v260, %v267
      %v300 = vmul.f32 %v261, %v267
      %v301 = vld [vmem:[%s221] sm:$0x1]
      %v303 = vlaneseq
      %v304 = vshrl.u32 %v303, 7
      %v305 = vsub.s32 0, %v304
      %v306 = vrot.slane %v301, %v305
      %v308 = vadd.f32 %v269, %v306
      %v309 = vadd.f32 %v270, %v306
      %v310 = vadd.f32 %v271, %v306
      %v311 = vadd.f32 %v272, %v306
      %v312 = vadd.f32 %v273, %v306
      %v313 = vadd.f32 %v274, %v306
      %v314 = vadd.f32 %v275, %v306
      %v315 = vadd.f32 %v276, %v306
      %v316 = vadd.f32 %v277, %v306
      %v317 = vadd.f32 %v278, %v306
      %v318 = vadd.f32 %v279, %v306
      %v319 = vadd.f32 %v280, %v306
      %v320 = vadd.f32 %v281, %v306
      %v321 = vadd.f32 %v282, %v306
      %v322 = vadd.f32 %v283, %v306
      %v323 = vadd.f32 %v284, %v306
      %v324 = vadd.f32 %v285, %v306
      %v325 = vadd.f32 %v286, %v306
      %v326 = vadd.f32 %v287, %v306
      %v327 = vadd.f32 %v288, %v306
      %v328 = vadd.f32 %v289, %v306
      %v329 = vadd.f32 %v290, %v306
      %v330 = vadd.f32 %v291, %v306
      %v331 = vadd.f32 %v292, %v306
      %v332 = vadd.f32 %v293, %v306
      %v333 = vadd.f32 %v294, %v306
      %v334 = vadd.f32 %v295, %v306
      %v335 = vadd.f32 %v296, %v306
      %v336 = vadd.f32 %v297, %v306
      %v337 = vadd.f32 %v298, %v306
      %v338 = vadd.f32 %v299, %v306
      %v339 = vadd.f32 %v300, %v306
      %v340 = vmax.f32 %v308, 0.0
      %v341 = vmax.f32 %v309, 0.0
      %v342 = vmax.f32 %v310, 0.0
      %v343 = vmax.f32 %v311, 0.0
      %v344 = vmax.f32 %v312, 0.0
      %v345 = vmax.f32 %v313, 0.0
      %v346 = vmax.f32 %v314, 0.0
      %v347 = vmax.f32 %v315, 0.0
      %v348 = vmax.f32 %v316, 0.0
      %v349 = vmax.f32 %v317, 0.0
      %v350 = vmax.f32 %v318, 0.0
      %v351 = vmax.f32 %v319, 0.0
      %v352 = vmax.f32 %v320, 0.0
      %v353 = vmax.f32 %v321, 0.0
      %v354 = vmax.f32 %v322, 0.0
      %v355 = vmax.f32 %v323, 0.0
      %v356 = vmax.f32 %v324, 0.0
      %v357 = vmax.f32 %v325, 0.0
      %v358 = vmax.f32 %v326, 0.0
      %v359 = vmax.f32 %v327, 0.0
      %v360 = vmax.f32 %v328, 0.0
      %v361 = vmax.f32 %v329, 0.0
      %v362 = vmax.f32 %v330, 0.0
      %v363 = vmax.f32 %v331, 0.0
      %v364 = vmax.f32 %v332, 0.0
      %v365 = vmax.f32 %v333, 0.0
      %v366 = vmax.f32 %v334, 0.0
      %v367 = vmax.f32 %v335, 0.0
      %v368 = vmax.f32 %v336, 0.0
      %v369 = vmax.f32 %v337, 0.0
      %v370 = vmax.f32 %v338, 0.0
      %v371 = vmax.f32 %v339, 0.0
      %372 = vst [vmem:[%s229] sm:$0xff] %v340
      %373 = vst [vmem:[%s229 + $0x8] sm:$0xff] %v341
      %374 = vst [vmem:[%s229 + $0x10] sm:$0xff] %v342
      %375 = vst [vmem:[%s229 + $0x18] sm:$0xff] %v343
      %376 = vst [vmem:[%s229 + $0x20] sm:$0xff] %v344
      %377 = vst [vmem:[%s229 + $0x28] sm:$0xff] %v345
      %378 = vst [vmem:[%s229 + $0x30] sm:$0xff] %v346
      %379 = vst [vmem:[%s229 + $0x38] sm:$0xff] %v347
      %380 = vst [vmem:[%s229 + $0x40] sm:$0xff] %v348
      %381 = vst [vmem:[%s229 + $0x48] sm:$0xff] %v349
      %382 = vst [vmem:[%s229 + $0x50] sm:$0xff] %v350
      %383 = vst [vmem:[%s229 + $0x58] sm:$0xff] %v351
      %384 = vst [vmem:[%s229 + $0x60] sm:$0xff] %v352
      %385 = vst [vmem:[%s229 + $0x68] sm:$0xff] %v353
      %386 = vst [vmem:[%s229 + $0x70] sm:$0xff] %v354
      %387 = vst [vmem:[%s229 + $0x78] sm:$0xff] %v355
      %388 = vst [vmem:[%s229 + $0x80] sm:$0xff] %v356
      %389 = vst [vmem:[%s229 + $0x88] sm:$0xff] %v357
      %390 = vst [vmem:[%s229 + $0x90] sm:$0xff] %v358
      %391 = vst [vmem:[%s229 + $0x98] sm:$0xff] %v359
      %392 = vst [vmem:[%s229 + $0xa0] sm:$0xff] %v360
      %393 = vst [vmem:[%s229 + $0xa8] sm:$0xff] %v361
      %394 = vst [vmem:[%s229 + $0xb0] sm:$0xff] %v362
      %395 = vst [vmem:[%s229 + $0xb8] sm:$0xff] %v363
      %396 = vst [vmem:[%s229 + $0xc0] sm:$0xff] %v364
      %397 = vst [vmem:[%s229 + $0xc8] sm:$0xff] %v365
      %398 = vst [vmem:[%s229 + $0xd0] sm:$0xff] %v366
      %399 = vst [vmem:[%s229 + $0xd8] sm:$0xff] %v367
      %400 = vst [vmem:[%s229 + $0xe0] sm:$0xff] %v368
      %401 = vst [vmem:[%s229 + $0xe8] sm:$0xff] %v369
      %402 = vst [vmem:[%s229 + $0xf0] sm:$0xff] %v370
      %403 = vst [vmem:[%s229 + $0xf8] sm:$0xff] %v371
      %p404 = scmp.lt.s32.totalorder %s19, 1
      %s405 = scalar_select %p404, %s19, 1
      %p406 = scmp.lt.s32.totalorder %s18, 0
      %s407 = scalar_select %p406, %s18, 0
      %s408 = smul.addr %s405, 32
      %s409 = sadd.s32 %s407, %s408
      %s410 = smul.addr %s409, 8
      %s411 = scalar_lea.vmem %s3, %s410
      // Predicated region
      $region33: #{conv_sync_bn_relu.3} parent=31 // pred_check
        %p412 = pneg %p126
      $region34: #{conv_sync_bn_relu.3} parent=31 // pred_check_branch
        %414 = sbr.rel (%p412) target = $region36
      $region35: #{conv_sync_bn_relu.3} parent=31 // pred_region
        _
      $region36: #{conv_sync_bn_relu.3} parent=31 // pred_fallthru
        _
    $region32: #{conv_sync_bn_relu.3} parent=5 // pred_fallthru
      _
    %p415 = scmp.le.s32.totalorder 2, %s9
    // Predicated region
    $region37: #{conv_sync_bn_relu.3} parent=5 // pred_check
      %p416 = pneg %p415
    $region38: #{conv_sync_bn_relu.3} parent=5 // pred_check_branch
      %418 = sbr.rel (%p416) target = $region40
    $region39: #{conv_sync_bn_relu.3} parent=5 // pred_region
      %s419 = ssub.s32 %s9, 2
      // Predicated region
      $region41: #{conv_sync_bn_relu.3} parent=39 // pred_check
        %p420 = pneg %p132
      $region42: #{conv_sync_bn_relu.3} parent=39 // pred_check_branch
        %422 = sbr.rel (%p420) target = $region44
      $region43: #{conv_sync_bn_relu.3} parent=39 // pred_region
        %p423 = scmp.lt.s32.totalorder %s21, 1
        %s424 = scalar_select %p423, %s21, 1
        %p425 = scmp.lt.s32.totalorder %s20, 0
        %s426 = scalar_select %p425, %s20, 0
        %s427 = smul.addr %s424, 32
        %s428 = sadd.s32 %s426, %s427
        %s429 = smul.addr %s428, 8
        %s430 = scalar_lea.vmem %s3, %s429
      $region44: #{conv_sync_bn_relu.3} parent=39 // pred_fallthru
        _
    $region40: #{conv_sync_bn_relu.3} parent=5 // pred_fallthru
      _
  $region6: #{conv_sync_bn_relu.3} parent=0 // loop_footer
    %s13 = sadd.s32 1, %s9
  $region7: #{conv_sync_bn_relu.3} parent=0 // loop_footer_branch
    %8 = sbr.rel target = $region3
  $region8: #{conv_sync_bn_relu.3} parent=0 // loop_exit
    _

// kernel: conv_sync_bn_relu.2
$region0: #{conv_sync_bn_relu.2}
  #allocation0 [shape = 'u32[]', space=smem, size = 0x4, offset = 0x4, fixed_abs, tag = 'smem constant byte address 0x4 - core index']
  #allocation1 [shape = 'u32[144,128]{1,0:T(1,128)}', space=vmem, size = 0x12000, scoped, tag = 'internal scratch']
  %s0 = inlined_call_operand.vmem [shape: bf16[2,18,18,8], index: 0, kind: input, shape index: {}]
  %s1 = inlined_call_operand.vmem [shape: bf16[9,8,128], index: 1, kind: input, shape index: {}]
  %s2 = inlined_call_operand.vmem [shape: f32[2,16,16,128], index: 2, kind: output, shape index: {0}]
  %s3 = inlined_call_operand.vmem [shape: f32[1,128], index: 3, kind: output, shape index: {1}]
  %s4 = inlined_call_operand.vmem [shape: f32[1,128], index: 4, kind: output, shape index: {2}]
  %5 = xla_tuple %s2, %s3, %s4
  %s6 = sld [smem:[#allocation0]]
  $region61: #{conv_sync_bn_relu.2} parent=0
    _
  %s8 = ssub.s32 1, %s6
  %s9 = scalar_select 0, %s8, %s6
  loop: start=0, step=1, limit=4
  $region2: #{conv_sync_bn_relu.2} parent=0 // loop_pre_header
    _
  $region3: #{conv_sync_bn_relu.2} parent=0 // loop_header
    %s11 = sphi 0, %s15
    %p12 = scmp.ge.s32.totalorder %s11, 4
    %s18 = sphi 0, %s30
    %s19 = sphi 0, %s26
    %s20 = sphi 0, %s18
    %s21 = sphi 0, %s19
    %s22 = sphi 0, %s20
    %s23 = sphi 0, %s21
    %s33 = sphi 0, %s35
    %s36 = sphi 0, %s33
    %s37 = sphi 0, %s36
    %s53 = sphi 0, %s37
    %s59 = sphi 0, %s61
    %s62 = sphi 0, %s59
    %s63 = sphi 0, %s62
    %s79 = sphi 0, %s63
    %s87 = sphi 0, %s89
    %s90 = sphi 0, %s87
    %s91 = sphi 0, %s90
    %s107 = sphi 0, %s91
    %s113 = sphi 0, %s115
    %s116 = sphi 0, %s113
    %s117 = sphi 0, %s116
    %s133 = sphi 0, %s117
    %s139 = sphi 0, %s141
    %s142 = sphi 0, %s139
    %s143 = sphi 0, %s142
    %s159 = sphi 0, %s143
  $region4: #{conv_sync_bn_relu.2} parent=0 // loop_header_branch
    %14 = sbr.rel (%p12) target = $region8
  $region5: #{conv_sync_bn_relu.2} parent=0 // loop_body
    %s16 = ssub.s32 %s11, 1
    %s17 = ssub.s32 %s11, 2
    %s24 = sadd.s32 1, %s19
    %p25 = scmp.ge.s32.totalorder %s24, 2
    %s26 = scalar_select %p25, 0, %s24
    %s27 = sadd.s32 1, %s18
    %s28 = scalar_select %p25, %s27, %s18
    %p29 = scmp.ge.s32.totalorder %s28, 1
    %s30 = scalar_select %p29, 0, %s28
    %s31 = ssub.s32 %s19, %s26
    %p32 = scmp.eq.s32.totalorder %s31, 0
    %s34 = sadd.s32 %s33, 1
    %s35 = scalar_select %p32, %s33, %s34
    %p38 = pneg %p32
    %p39 = scmp.eq.s32.totalorder %s11, 1
    %p40 = por %p38, %p39
    %p41 = scmp.ne.s32.totalorder %s33, %s36
    %p42 = scmp.eq.s32.totalorder %s11, 0
    %p43 = por %p41, %p42
    %p44 = scmp.ne.s32.totalorder %s33, %s36
    %p45 = scmp.eq.s32.totalorder %s16, 1
    %p46 = por %p44, %p45
    %p47 = scmp.ne.s32.totalorder %s36, %s37
    %p48 = scmp.eq.s32.totalorder %s16, 0
    %p49 = por %p47, %p48
    %p50 = scmp.ne.s32.totalorder %s36, %s37
    %p51 = scmp.eq.s32.totalorder %s17, 1
    %p52 = por %p50, %p51
    %p54 = scmp.ne.s32.totalorder %s37, %s53
    %p55 = scmp.eq.s32.totalorder %s17, 0
    %p56 = por %p54, %p55
    %s57 = ssub.s32 %s18, %s30
    %p58 = scmp.eq.s32.totalorder %s57, 0
    %s60 = sadd.s32 %s59, 1
    %s61 = scalar_select %p58, %s59, %s60
    %p64 = pneg %p58
    %p65 = scmp.eq.s32.totalorder %s11, 1
    %p66 = por %p64, %p65
    %p67 = scmp.ne.s32.totalorder %s59, %s62
    %p68 = scmp.eq.s32.totalorder %s11, 0
    %p69 = por %p67, %p68
    %p70 = scmp.ne.s32.totalorder %s59, %s62
    %p71 = scmp.eq.s32.totalorder %s16, 1
    %p72 = por %p70, %p71
    %p73 = scmp.ne.s32.totalorder %s62, %s63
    %p74 = scmp.eq.s32.totalorder %s16, 0
    %p75 = por %p73, %p74
    %p76 = scmp.ne.s32.totalorder %s62, %s63
    %p77 = scmp.eq.s32.totalorder %s17, 1
    %p78 = por %p76, %p77
    %p80 = scmp.ne.s32.totalorder %s63, %s79
    %p81 = scmp.eq.s32.totalorder %s17, 0
    %p82 = por %p80, %p81
    %s83 = ssub.s32 %s19, %s26
    %s84 = ssub.s32 %s18, %s30
    %s85 = sor.u32 %s83, %s84
    %p86 = scmp.eq.s32.totalorder %s85, 0
    %s88 = sadd.s32 %s87, 1
    %s89 = scalar_select %p86, %s87, %s88
    %p92 = pneg %p86
    %p93 = scmp.eq.s32.totalorder %s11, 1
    %p94 = por %p92, %p93
    %p95 = scmp.ne.s32.totalorder %s87, %s90
    %p96 = scmp.eq.s32.totalorder %s11, 0
    %p97 = por %p95, %p96
    %p98 = scmp.ne.s32.totalorder %s87, %s90
    %p99 = scmp.eq.s32.totalorder %s16, 1
    %p100 = por %p98, %p99
    %p101 = scmp.ne.s32.totalorder %s90, %s91
    %p102 = scmp.eq.s32.totalorder %s16, 0
    %p103 = por %p101, %p102
    %p104 = scmp.ne.s32.totalorder %s90, %s91
    %p105 = scmp.eq.s32.totalorder %s17, 1
    %p106 = por %p104, %p105
    %p108 = scmp.ne.s32.totalorder %s91, %s107
    %p109 = scmp.eq.s32.totalorder %s17, 0
    %p110 = por %p108, %p109
    %s111 = ssub.s32 %s18, %s30
    %p112 = scmp.eq.s32.totalorder %s111, 0
    %s114 = sadd.s32 %s113, 1
    %s115 = scalar_select %p112, %s113, %s114
    %p118 = pneg %p112
    %p119 = scmp.eq.s32.totalorder %s11, 1
    %p120 = por %p118, %p119
    %p121 = scmp.ne.s32.totalorder %s113, %s116
    %p122 = scmp.eq.s32.totalorder %s11, 0
    %p123 = por %p121, %p122
    %p124 = scmp.ne.s32.totalorder %s113, %s116
    %p125 = scmp.eq.s32.totalorder %s16, 1
    %p126 = por %p124, %p125
    %p127 = scmp.ne.s32.totalorder %s116, %s117
    %p128 = scmp.eq.s32.totalorder %s16, 0
    %p129 = por %p127, %p128
    %p130 = scmp.ne.s32.totalorder %s116, %s117
    %p131 = scmp.eq.s32.totalorder %s17, 1
    %p132 = por %p130, %p131
    %p134 = scmp.ne.s32.totalorder %s117, %s133
    %p135 = scmp.eq.s32.totalorder %s17, 0
    %p136 = por %p134, %p135
    %s137 = ssub.s32 %s18, %s30
    %p138 = scmp.eq.s32.totalorder %s137, 0
    %s140 = sadd.s32 %s139, 1
    %s141 = scalar_select %p138, %s139, %s140
    %p144 = pneg %p138
    %p145 = scmp.eq.s32.totalorder %s11, 1
    %p146 = por %p144, %p145
    %p147 = scmp.ne.s32.totalorder %s139, %s142
    %p148 = scmp.eq.s32.totalorder %s11, 0
    %p149 = por %p147, %p148
    %p150 = scmp.ne.s32.totalorder %s139, %s142
    %p151 = scmp.eq.s32.totalorder %s16, 1
    %p152 = por %p150, %p151
    %p153 = scmp.ne.s32.totalorder %s142, %s143
    %p154 = scmp.eq.s32.totalorder %s16, 0
    %p155 = por %p153, %p154
    %p156 = scmp.ne.s32.totalorder %s142, %s143
    %p157 = scmp.eq.s32.totalorder %s17, 1
    %p158 = por %p156, %p157
    %p160 = scmp.ne.s32.totalorder %s143, %s159
    %p161 = scmp.eq.s32.totalorder %s17, 0
    %p162 = por %p160, %p161
    %p163 = scmp.le.s32.totalorder 1, %s11
    %p164 = scmp.lt.s32.totalorder %s11, 3
    %p165 = pnand %p163, %p164
    %p166 = pneg %p165
    // Predicated region
    $region9: #{conv_sync_bn_relu.2} parent=5 // pred_check
      _
    $region10: #{conv_sync_bn_relu.2} parent=5 // pred_check_branch
      %168 = sbr.rel (%p165) target = $region12
    $region11: #{conv_sync_bn_relu.2} parent=5 // pred_region
      %s169 = ssub.s32 %s11, 1
      // Predicated region
      $region13: #{conv_sync_bn_relu.2} parent=11 // pred_check
        %p170 = pneg %p75
      $region14: #{conv_sync_bn_relu.2} parent=11 // pred_check_branch
        %172 = sbr.rel (%p170) target = $region16
      $region15: #{conv_sync_bn_relu.2} parent=11 // pred_region
        %p173 = scmp.lt.s32.totalorder %s20, 0
        %s174 = scalar_select %p173, %s20, 0
        %s175 = smul.addr %s174, 4
        %s176 = scalar_lea.vmem %s1, %s175
      $region16: #{conv_sync_bn_relu.2} parent=11 // pred_fallthru
        _
    $region12: #{conv_sync_bn_relu.2} parent=5 // pred_fallthru
      _
    %p177 = scmp.lt.s32.totalorder %s11, 2
    // Predicated region
    $region17: #{conv_sync_bn_relu.2} parent=5 // pred_check
      %p178 = pneg %p177
    $region18: #{conv_sync_bn_relu.2} parent=5 // pred_check_branch
      %180 = sbr.rel (%p178) target = $region20
    $region19: #{conv_sync_bn_relu.2} parent=5 // pred_region
      // Predicated region
      $region21: #{conv_sync_bn_relu.2} parent=19 // pred_check
        %p181 = pneg %p43
      $region22: #{conv_sync_bn_relu.2} parent=19 // pred_check_branch
        %183 = sbr.rel (%p181) target = $region24
      $region23: #{conv_sync_bn_relu.2} parent=19 // pred_region
        %p184 = scmp.lt.s32.totalorder %s19, 1
        %s185 = scalar_select %p184, %s19, 1
        %s186 = smul.addr %s185, 54
        %s187 = smul.addr %s186, 4
        %s188 = scalar_lea.vmem %s0, %s187
      $region24: #{conv_sync_bn_relu.2} parent=19 // pred_fallthru
        _
    $region20: #{conv_sync_bn_relu.2} parent=5 // pred_fallthru
      _
    %p189 = scmp.le.s32.totalorder 1, %s11
    %p190 = scmp.lt.s32.totalorder %s11, 3
    %p191 = pnand %p189, %p190
    %p192 = pneg %p191
    // Predicated region
    $region25: #{conv_sync_bn_relu.2} parent=5 // pred_check
      _
    $region26: #{conv_sync_bn_relu.2} parent=5 // pred_check_branch
      %194 = sbr.rel (%p191) target = $region28
    $region27: #{conv_sync_bn_relu.2} parent=5 // pred_region
      %s195 = ssub.s32 %s11, 1
      %p196 = scmp.lt.s32.totalorder %s21, 1
      %s197 = scalar_select %p196, %s21, 1
      %s198 = smul.addr %s197, 54
      %s199 = smul.addr %s198, 4
      %s200 = scalar_lea.vmem %s0, %s199
      %p201 = pneg %p49
      %p202 = pneg %p46
      %p203 = scmp.lt.s32.totalorder %s20, 0
      %s204 = scalar_select %p203, %s20, 0
      %s205 = smul.addr %s204, 4
      %s206 = scalar_lea.vmem %s1, %s205
      %p207 = pneg %p75
      %p208 = pneg %p72
      %p209 = pneg %p103
      %p210 = pneg %p100
      %p211 = scmp.lt.s32.totalorder %s21, 1
      %s212 = scalar_select %p211, %s21, 1
      %p213 = scmp.lt.s32.totalorder %s20, 0
      %s214 = scalar_select %p213, %s20, 0
      %s215 = smul.addr %s212, 32
      %s216 = sadd.s32 %s214, %s215
      %s217 = smul.addr %s216, 8
      %s218 = scalar_lea.vmem %s2, %s217
      %p219 = pneg %p129
      %p220 = pneg %p126
      %p221 = scmp.lt.s32.totalorder %s20, 0
      %s222 = scalar_select %p221, %s20, 0
      %s223 = scalar_lea.vmem %s3, %s222
      %p224 = pneg %p155
      %p225 = pneg %p152
      %p226 = scmp.lt.s32.totalorder %s20, 0
      %s227 = scalar_select %p226, %s20, 0
      %s228 = scalar_lea.vmem %s4, %s227
      %p229 = scmp.lt.s32.totalorder %s21, 1
      %s230 = scalar_select %p229, %s21, 1
      %s231 = smul.addr %s230, 54
      %s232 = smul.addr %s231, 4
      %s233 = scalar_lea.vmem %s0, %s232
      %p234 = scmp.lt.s32.totalorder %s20, 0
      %s235 = scalar_select %p234, %s20, 0
      %s236 = smul.addr %s235, 4
      %s237 = scalar_lea.vmem %s1, %s236
      %p238 = scmp.lt.s32.totalorder %s21, 1
      %s239 = scalar_select %p238, %s21, 1
      %p240 = scmp.lt.s32.totalorder %s20, 0
      %s241 = scalar_select %p240, %s20, 0
      %s242 = smul.addr %s239, 32
      %s243 = sadd.s32 %s241, %s242
      %s244 = smul.addr %s243, 8
      %s245 = scalar_lea.vmem %s2, %s244
      %p246 = scmp.lt.s32.totalorder %s20, 0
      %s247 = scalar_select %p246, %s20, 0
      %s248 = scalar_lea.vmem %s3, %s247
      %p249 = scmp.lt.s32.totalorder %s20, 0
      %s250 = scalar_select %p249, %s20, 0
      %s251 = scalar_lea.vmem %s4, %s250
      %v253 = vld [vmem:[%s233] sm:$0xf]
      %v254 = vld [vmem:[%s233 + $0x4] sm:$0xf]
      %v255 = vld [vmem:[%s233 + $0xc] sm:$0xf]
      %v256 = vld [vmem:[%s233 + $0x10] sm:$0xf]
      %v257 = vld [vmem:[%s233 + $0x18] sm:$0xf]
      %v258 = vld [vmem:[%s233 + $0x1c] sm:$0xf]
      %v259 = vld [vmem:[%s233 + $0x24] sm:$0xf]
      %v260 = vld [vmem:[%s233 + $0x28] sm:$0xf]
      %v261 = vld [vmem:[%s233 + $0x30] sm:$0xf]
      %v262 = vld [vmem:[%s233 + $0x34] sm:$0xf]
      %v263 = vld [vmem:[%s233 + $0x3c] sm:$0xf]
      %v264 = vld [vmem:[%s233 + $0x40] sm:$0xf]
      %v265 = vld [vmem:[%s233 + $0x48] sm:$0xf]
      %v266 = vld [vmem:[%s233 + $0x4c] sm:$0xf]
      %v267 = vld [vmem:[%s233 + $0x54] sm:$0xf]
      %v268 = vld [vmem:[%s233 + $0x58] sm:$0xf]
      %v269 = vld [vmem:[%s233 + $0x60] sm:$0xf]
      %v270 = vld [vmem:[%s233 + $0x64] sm:$0xf]
      %v271 = vld [vmem:[%s233 + $0x6c] sm:$0xf]
      %v272 = vld [vmem:[%s233 + $0x70] sm:$0xf]
      %v273 = vld [vmem:[%s233 + $0x78] sm:$0xf]
      %v274 = vld [vmem:[%s233 + $0x7c] sm:$0xf]
      %v275 = vld [vmem:[%s233 + $0x84] sm:$0xf]
      %v276 = vld [vmem:[%s233 + $0x88] sm:$0xf]
      %v277 = vld [vmem:[%s233 + $0x90] sm:$0xf]
      %v278 = vld [vmem:[%s233 + $0x94] sm:$0xf]
      %v279 = vld [vmem:[%s233 + $0x9c] sm:$0xf]
      %v280 = vld [vmem:[%s233 + $0xa0] sm:$0xf]
      %v281 = vld [vmem:[%s233 + $0xa8] sm:$0xf]
      %v282 = vld [vmem:[%s233 + $0xac] sm:$0xf]
      %v283 = vld [vmem:[%s233 + $0xb4] sm:$0xf]
      %v284 = vld [vmem:[%s233 + $0xb8] sm:$0xf]
      %v285 = vld [vmem:[%s233 + $0xc0] sm:$0xf]
      %v286 = vld [vmem:[%s233 + $0xc4] sm:$0xf]
      %v287 = vld [vmem:[%s233 + $0xcc] sm:$0xf]
      %v288 = vld [vmem:[%s233 + $0xd0] sm:$0xf]
      %v289 = vld [vmem:[%s237] sm:$0xf]
      %s290 = scalar_lea.vmem %s237, 12
      %v291 = vld [vmem:[%s290] sm:$0xf]
      %v324 = vunpack.c.l.b16 %v255
      %v325 = vunpack.c.l.b16 %v256
      %v326 = vunpack.c.l.b16 %v257
      %v327 = vunpack.c.l.b16 %v258
      %v328 = vunpack.c.l.b16 %v259
      %v329 = vunpack.c.l.b16 %v260
      %v330 = vunpack.c.l.b16 %v261
      %v331 = vunpack.c.l.b16 %v262
      %v332 = vunpack.c.l.b16 %v263
      %v333 = vunpack.c.l.b16 %v264
      %v334 = vunpack.c.l.b16 %v265
      %v335 = vunpack.c.l.b16 %v266
      %v336 = vunpack.c.l.b16 %v267
      %v337 = vunpack.c.l.b16 %v268
      %v338 = vunpack.c.l.b16 %v269
      %v339 = vunpack.c.l.b16 %v270
      %v340 = vunpack.c.l.b16 %v271
      %v341 = vunpack.c.l.b16 %v272
      %v342 = vunpack.c.l.b16 %v273
      %v343 = vunpack.c.l.b16 %v274
      %v344 = vunpack.c.l.b16 %v275
      %v345 = vunpack.c.l.b16 %v276
      %v346 = vunpack.c.l.b16 %v277
      %v347 = vunpack.c.l.b16 %v278
      %v348 = vunpack.c.l.b16 %v279
      %v349 = vunpack.c.l.b16 %v280
      %v350 = vunpack.c.l.b16 %v281
      %v351 = vunpack.c.l.b16 %v282
      %v352 = vunpack.c.l.b16 %v283
      %v353 = vunpack.c.l.b16 %v284
      %v354 = vunpack.c.l.b16 %v285
      %v355 = vunpack.c.l.b16 %v286
      %v356 = vpack.c.b16 %v325, %v324
      %v357 = vpack.c.b16 %v327, %v326
      %v358 = vpack.c.b16 %v329, %v328
      %v359 = vpack.c.b16 %v331, %v330
      %v360 = vpack.c.b16 %v333, %v332
      %v361 = vpack.c.b16 %v335, %v334
      %v362 = vpack.c.b16 %v337, %v336
      %v363 = vpack.c.b16 %v339, %v338
      %v364 = vpack.c.b16 %v341, %v340
      %v365 = vpack.c.b16 %v343, %v342
      %v366 = vpack.c.b16 %v345, %v344
      %v367 = vpack.c.b16 %v347, %v346
      %v368 = vpack.c.b16 %v349, %v348
      %v369 = vpack.c.b16 %v351, %v350
      %v370 = vpack.c.b16 %v353, %v352
      %v371 = vpack.c.b16 %v355, %v354
      %vm372 = vcmask 64512
      %v374 = vsel %vm372, %v356, 0
      %v377 = vsel %vm372, %v357, 0
      %v380 = vsel %vm372, %v358, 0
      %v383 = vsel %vm372, %v359, 0
      %v386 = vsel %vm372, %v360, 0
      %v389 = vsel %vm372, %v361, 0
      %v392 = vsel %vm372, %v362, 0
      %v395 = vsel %vm372, %v363, 0
      %v398 = vsel %vm372, %v364, 0
      %v401 = vsel %vm372, %v365, 0
      %v404 = vsel %vm372, %v366, 0
      %v407 = vsel %vm372, %v367, 0
      %v410 = vsel %vm372, %v368, 0
      %v413 = vsel %vm372, %v369, 0
      %v416 = vsel %vm372, %v370, 0
      %v419 = vsel %vm372, %v371, 0
      %vm421 = vcmask 1043456
      %v423 = vsel %vm421, %v291, 0
      %425 = vmatprep.subr.bf16.mxu0 0
      %426 = vmatpush1.bf16.msra.mxu0 0
      %427 = vmatprep.subr.bf16.mxu0 0
      %428 = vmatpush1.bf16.msra.mxu0 0
      %429 = vmatprep.subr.bf16.mxu0 0
      %430 = vmatpush1.bf16.msra.mxu0 0
      %431 = vmatprep.subr.bf16.mxu0 0
      %432 = vmatpush1.bf16.msra.mxu0 0
      %433 = vmatprep.subr.bf16.mxu0 0
      %434 = vmatpush1.bf16.msra.mxu0 0
      %435 = vmatprep.subr.bf16.mxu0 0
      %436 = vmatpush1.bf16.msra.mxu0 0
      %437 = vmatprep.subr.bf16.mxu0 0
      %438 = vmatpush1.bf16.msra.mxu0 0
      %439 = vmatprep.subr.bf16.mxu0 0
      %440 = vmatpush1.bf16.msra.mxu0 %v423
      %441 = vmatprep.subr.bf16.mxu0 0
      %442 = vmatpush2.bf16.msra.mxu0 0
      %443 = vmatprep.subr.bf16.mxu0 0
      %444 = vmatpush2.bf16.msra.mxu0 0
      %445 = vmatprep.subr.bf16.mxu0 0
      %446 = vmatpush2.bf16.msra.mxu0 0
      %447 = vmatprep.subr.bf16.mxu0 0
      %448 = vmatpush2.bf16.msra.mxu0 0
      %449 = vmatprep.subr.bf16.mxu0 0
      %450 = vmatpush2.bf16.msra.mxu0 0
      %451 = vmatprep.subr.bf16.mxu0 0
      %452 = vmatpush2.bf16.msra.mxu0 0
      %453 = vmatprep.subr.bf16.mxu0 0
      %454 = vmatpush2.bf16.msra.mxu0 0
      %455 = vmatprep.subr.bf16.mxu0 0
      %456 = vmatpush2.bf16.msra.mxu0 0
      %457 = vmatprep.mubr.bf16.mxu0 0
      %458 = vmatmul.mubr.bf16.gmra.mxu0 %v374
      %v459 = vpop.f32.mrf.mxu0
      %v460 = vadd.f32 0.0, %v459
      %v461 = vpop.f32.mrf.mxu0
      %v462 = vpop.f32.mrf.mxu0
      %v463 = vadd.f32 0.0, %v462
      %v464 = vpop.f32.mrf.mxu0
      %465 = vmatprep.mubr.bf16.mxu0 0
      %466 = vmatmul.mubr.bf16.gmra.mxu0 %v377
      %v467 = vpop.f32.mrf.mxu0
      %v468 = vadd.f32 0.0, %v467
      %v469 = vpop.f32.mrf.mxu0
      %v470 = vpop.f32.mrf.mxu0
      %v471 = vadd.f32 0.0, %v470
      %v472 = vpop.f32.mrf.mxu0
      %473 = vmatprep.mubr.bf16.mxu0 0
      %474 = vmatmul.mubr.bf16.gmra.mxu0 %v380
      %v475 = vpop.f32.mrf.mxu0
      %v476 = vadd.f32 0.0, %v475
      %v477 = vpop.f32.mrf.mxu0
      %v478 = vpop.f32.mrf.mxu0
      %v479 = vadd.f32 0.0, %v478
      %v480 = vpop.f32.mrf.mxu0
      %481 = vmatprep.mubr.bf16.mxu0 0
      %482 = vmatmul.mubr.bf16.gmra.mxu0 %v383
      %v483 = vpop.f32.mrf.mxu0
      %v484 = vadd.f32 0.0, %v483
      %v485 = vpop.f32.mrf.mxu0
      %v486 = vpop.f32.mrf.mxu0
      %v487 = vadd.f32 0.0, %v486
      %v488 = vpop.f32.mrf.mxu0
      %489 = vmatprep.mubr.bf16.mxu0 0
      %490 = vmatmul.mubr.bf16.gmra.mxu0 %v386
      %v491 = vpop.f32.mrf.mxu0
      %v492 = vadd.f32 0.0, %v491
      %v493 = vpop.f32.mrf.mxu0
      %v494 = vpop.f32.mrf.mxu0
      %v495 = vadd.f32 0.0, %v494
      %v496 = vpop.f32.mrf.mxu0
      %497 = vmatprep.mubr.bf16.mxu0 0
      %498 = vmatmul.mubr.bf16.gmra.mxu0 %v389
      %v499 = vpop.f32.mrf.mxu0
      %v500 = vadd.f32 0.0, %v499
      %v501 = vpop.f32.mrf.mxu0
      %v502 = vpop.f32.mrf.mxu0
      %v503 = vadd.f32 0.0, %v502
      %v504 = vpop.f32.mrf.mxu0
      %505 = vmatprep.mubr.bf16.mxu0 0
      %506 = vmatmul.mubr.bf16.gmra.mxu0 %v392
      %v507 = vpop.f32.mrf.mxu0
      %v508 = vadd.f32 0.0, %v507
      %v509 = vpop.f32.mrf.mxu0
      %v510 = vpop.f32.mrf.mxu0
      %v511 = vadd.f32 0.0, %v510
      %v512 = vpop.f32.mrf.mxu0
      %513 = vmatprep.mubr.bf16.mxu0 0
      %514 = vmatmul.mubr.bf16.gmra.mxu0 %v395
      %v515 = vpop.f32.mrf.mxu0
      %v516 = vadd.f32 0.0, %v515
      %v517 = vpop.f32.mrf.mxu0
      %v518 = vpop.f32.mrf.mxu0
      %v519 = vadd.f32 0.0, %v518
      %v520 = vpop.f32.mrf.mxu0
      %521 = vmatprep.mubr.bf16.mxu0 0
      %522 = vmatmul.mubr.bf16.gmra.mxu0 %v398
      %v523 = vpop.f32.mrf.mxu0
      %v524 = vadd.f32 0.0, %v523
      %v525 = vpop.f32.mrf.mxu0
      %v526 = vpop.f32.mrf.mxu0
      %v527 = vadd.f32 0.0, %v526
      %v528 = vpop.f32.mrf.mxu0
      %529 = vmatprep.mubr.bf16.mxu0 0
      %530 = vmatmul.mubr.bf16.gmra.mxu0 %v401
      %v531 = vpop.f32.mrf.mxu0
      %v532 = vadd.f32 0.0, %v531
      %v533 = vpop.f32.mrf.mxu0
      %v534 = vpop.f32.mrf.mxu0
      %v535 = vadd.f32 0.0, %v534
      %v536 = vpop.f32.mrf.mxu0
      %537 = vmatprep.mubr.bf16.mxu0 0
      %538 = vmatmul.mubr.bf16.gmra.mxu0 %v404
      %v539 = vpop.f32.mrf.mxu0
      %v540 = vadd.f32 0.0, %v539
      %v541 = vpop.f32.mrf.mxu0
      %v542 = vpop.f32.mrf.mxu0
      %v543 = vadd.f32 0.0, %v542
      %v544 = vpop.f32.mrf.mxu0
      %545 = vmatprep.mubr.bf16.mxu0 0
      %546 = vmatmul.mubr.bf16.gmra.mxu0 %v407
      %v547 = vpop.f32.mrf.mxu0
      %v548 = vadd.f32 0.0, %v547
      %v549 = vpop.f32.mrf.mxu0
      %v550 = vpop.f32.mrf.mxu0
      %v551 = vadd.f32 0.0, %v550
      %v552 = vpop.f32.mrf.mxu0
      %553 = vmatprep.mubr.bf16.mxu0 0
      %554 = vmatmul.mubr.bf16.gmra.mxu0 %v410
      %v555 = vpop.f32.mrf.mxu0
      %v556 = vadd.f32 0.0, %v555
      %v557 = vpop.f32.mrf.mxu0
      %v558 = vpop.f32.mrf.mxu0
      %v559 = vadd.f32 0.0, %v558
      %v560 = vpop.f32.mrf.mxu0
      %561 = vmatprep.mubr.bf16.mxu0 0
      %562 = vmatmul.mubr.bf16.gmra.mxu0 %v413
      %v563 = vpop.f32.mrf.mxu0
      %v564 = vadd.f32 0.0, %v563
      %v565 = vpop.f32.mrf.mxu0
      %v566 = vpop.f32.mrf.mxu0
      %v567 = vadd.f32 0.0, %v566
      %v568 = vpop.f32.mrf.mxu0
      %569 = vmatprep.mubr.bf16.mxu0 0
      %570 = vmatmul.mubr.bf16.gmra.mxu0 %v416
      %v571 = vpop.f32.mrf.mxu0
      %v572 = vadd.f32 0.0, %v571
      %v573 = vpop.f32.mrf.mxu0
      %v574 = vpop.f32.mrf.mxu0
      %v575 = vadd.f32 0.0, %v574
      %v576 = vpop.f32.mrf.mxu0
      %577 = vmatprep.mubr.bf16.mxu0 0
      %578 = vmatmul.mubr.bf16.gmra.mxu0 %v419
      %v579 = vpop.f32.mrf.mxu0
      %v580 = vadd.f32 0.0, %v579
      %v581 = vpop.f32.mrf.mxu0
      %v582 = vpop.f32.mrf.mxu0
      %v583 = vadd.f32 0.0, %v582
      %v584 = vpop.f32.mrf.mxu0
      %585 = vdwg.mxu0
      %v588 = vunpack.c.l.b16 %v253
      %v589 = vunpack.c.l.b16 %v254
      %v590 = vpack.c.b16 %v589, %v588
      %v592 = vsel %vm372, %v590, 0
      %v595 = vsel %vm421, %v289, 0
      %597 = vmatprep.subr.bf16.mxu0 0
      %598 = vmatpush1.bf16.msra.mxu0 0
      %599 = vmatprep.subr.bf16.mxu0 0
      %600 = vmatpush1.bf16.msra.mxu0 0
      %601 = vmatprep.subr.bf16.mxu0 0
      %602 = vmatpush1.bf16.msra.mxu0 0
      %603 = vmatprep.subr.bf16.mxu0 0
      %604 = vmatpush1.bf16.msra.mxu0 0
      %605 = vmatprep.subr.bf16.mxu0 0
      %606 = vmatpush1.bf16.msra.mxu0 0
      %607 = vmatprep.subr.bf16.mxu0 0
      %608 = vmatpush1.bf16.msra.mxu0 0
      %609 = vmatprep.subr.bf16.mxu0 0
      %610 = vmatpush1.bf16.msra.mxu0 0
      %611 = vmatprep.subr.bf16.mxu0 0
      %612 = vmatpush1.bf16.msra.mxu0 %v595
      %613 = vmatprep.subr.bf16.mxu0 0
      %614 = vmatpush2.bf16.msra.mxu0 0
      %615 = vmatprep.subr.bf16.mxu0 0
      %616 = vmatpush2.bf16.msra.mxu0 0
      %617 = vmatprep.subr.bf16.mxu0 0
      %618 = vmatpush2.bf16.msra.mxu0 0
      %619 = vmatprep.subr.bf16.mxu0 0
      %620 = vmatpush2.bf16.msra.mxu0 0
      %621 = vmatprep.subr.bf16.mxu0 0
      %622 = vmatpush2.bf16.msra.mxu0 0
      %623 = vmatprep.subr.bf16.mxu0 0
      %624 = vmatpush2.bf16.msra.mxu0 0
      %625 = vmatprep.subr.bf16.mxu0 0
      %626 = vmatpush2.bf16.msra.mxu0 0
      %627 = vmatprep.subr.bf16.mxu0 0
      %628 = vmatpush2.bf16.msra.mxu0 0
      %629 = vmatprep.mubr.bf16.mxu0 0
      %630 = vmatmul.mubr.bf16.gmra.mxu0 %v592
      %v631 = vpop.f32.mrf.mxu0
      %v632 = vadd.f32 %v460, %v631
      %v633 = vpop.f32.mrf.mxu0
      %v634 = vpop.f32.mrf.mxu0
      %v635 = vadd.f32 %v463, %v634
      %v636 = vpop.f32.mrf.mxu0
      %637 = vmatprep.mubr.bf16.mxu0 0
      %638 = vmatmul.mubr.bf16.gmra.mxu0 %v374
      %v639 = vpop.f32.mrf.mxu0
      %v640 = vadd.f32 %v468, %v639
      %v641 = vpop.f32.mrf.mxu0
      %v642 = vpop.f32.mrf.mxu0
      %v643 = vadd.f32 %v471, %v642
      %v644 = vpop.f32.mrf.mxu0
      %645 = vmatprep.mubr.bf16.mxu0 0
      %646 = vmatmul.mubr.bf16.gmra.mxu0 %v377
      %v647 = vpop.f32.mrf.mxu0
      %v648 = vadd.f32 %v476, %v647
      %v649 = vpop.f32.mrf.mxu0
      %v650 = vpop.f32.mrf.mxu0
      %v651 = vadd.f32 %v479, %v650
      %v652 = vpop.f32.mrf.mxu0
      %653 = vmatprep.mubr.bf16.mxu0 0
      %654 = vmatmul.mubr.bf16.gmra.mxu0 %v380
      %v655 = vpop.f32.mrf.mxu0
      %v656 = vadd.f32 %v484, %v655
      %v657 = vpop.f32.mrf.mxu0
      %v658 = vpop.f32.mrf.mxu0
      %v659 = vadd.f32 %v487, %v658
      %v660 = vpop.f32.mrf.mxu0
      %661 = vmatprep.mubr.bf16.mxu0 0
      %662 = vmatmul.mubr.bf16.gmra.mxu0 %v383
      %v663 = vpop.f32.mrf.mxu0
      %v664 = vadd.f32 %v492, %v663
      %v665 = vpop.f32.mrf.mxu0
      %v666 = vpop.f32.mrf.mxu0
      %v667 = vadd.f32 %v495, %v666
      %v668 = vpop.f32.mrf.mxu0
      %669 = vmatprep.mubr.bf16.mxu0 0
      %670 = vmatmul.mubr.bf16.gmra.mxu0 %v386
      %v671 = vpop.f32.mrf.mxu0
      %v672 = vadd.f32 %v500, %v671
      %v673 = vpop.f32.mrf.mxu0
      %v674 = vpop.f32.mrf.mxu0
      %v675 = vadd.f32 %v503, %v674
      %v676 = vpop.f32.mrf.mxu0
      %677 = vmatprep.mubr.bf16.mxu0 0
      %678 = vmatmul.mubr.bf16.gmra.mxu0 %v389
      %v679 = vpop.f32.mrf.mxu0
      %v680 = vadd.f32 %v508, %v679
      %v681 = vpop.f32.mrf.mxu0
      %v682 = vpop.f32.mrf.mxu0
      %v683 = vadd.f32 %v511, %v682
      %v684 = vpop.f32.mrf.mxu0
      %685 = vmatprep.mubr.bf16.mxu0 0
      %686 = vmatmul.mubr.bf16.gmra.mxu0 %v392
      %v687 = vpop.f32.mrf.mxu0
      %v688 = vadd.f32 %v516, %v687
      %v689 = vpop.f32.mrf.mxu0
      %v690 = vpop.f32.mrf.mxu0
      %v691 = vadd.f32 %v519, %v690
      %v692 = vpop.f32.mrf.mxu0
      %693 = vmatprep.mubr.bf16.mxu0 0
      %694 = vmatmul.mubr.bf16.gmra.mxu0 %v395
      %v695 = vpop.f32.mrf.mxu0
      %v696 = vadd.f32 %v524, %v695
      %v697 = vpop.f32.mrf.mxu0
      %v698 = vpop.f32.mrf.mxu0
      %v699 = vadd.f32 %v527, %v698
      %v700 = vpop.f32.mrf.mxu0
      %701 = vmatprep.mubr.bf16.mxu0 0
      %702 = vmatmul.mubr.bf16.gmra.mxu0 %v398
      %v703 = vpop.f32.mrf.mxu0
      %v704 = vadd.f32 %v532, %v703
      %v705 = vpop.f32.mrf.mxu0
      %v706 = vpop.f32.mrf.mxu0
      %v707 = vadd.f32 %v535, %v706
      %v708 = vpop.f32.mrf.mxu0
      %709 = vmatprep.mubr.bf16.mxu0 0
      %710 = vmatmul.mubr.bf16.gmra.mxu0 %v401
      %v711 = vpop.f32.mrf.mxu0
      %v712 = vadd.f32 %v540, %v711
      %v713 = vpop.f32.mrf.mxu0
      %v714 = vpop.f32.mrf.mxu0
      %v715 = vadd.f32 %v543, %v714
      %v716 = vpop.f32.mrf.mxu0
      %717 = vmatprep.mubr.bf16.mxu0 0
      %718 = vmatmul.mubr.bf16.gmra.mxu0 %v404
      %v719 = vpop.f32.mrf.mxu0
      %v720 = vadd.f32 %v548, %v719
      %v721 = vpop.f32.mrf.mxu0
      %v722 = vpop.f32.mrf.mxu0
      %v723 = vadd.f32 %v551, %v722
      %v724 = vpop.f32.mrf.mxu0
      %725 = vmatprep.mubr.bf16.mxu0 0
      %726 = vmatmul.mubr.bf16.gmra.mxu0 %v407
      %v727 = vpop.f32.mrf.mxu0
      %v728 = vadd.f32 %v556, %v727
      %v729 = vpop.f32.mrf.mxu0
      %v730 = vpop.f32.mrf.mxu0
      %v731 = vadd.f32 %v559, %v730
      %v732 = vpop.f32.mrf.mxu0
      %733 = vmatprep.mubr.bf16.mxu0 0
      %734 = vmatmul.mubr.bf16.gmra.mxu0 %v410
      %v735 = vpop.f32.mrf.mxu0
      %v736 = vadd.f32 %v564, %v735
      %v737 = vpop.f32.mrf.mxu0
      %v738 = vpop.f32.mrf.mxu0
      %v739 = vadd.f32 %v567, %v738
      %v740 = vpop.f32.mrf.mxu0
      %741 = vmatprep.mubr.bf16.mxu0 0
      %742 = vmatmul.mubr.bf16.gmra.mxu0 %v413
      %v743 = vpop.f32.mrf.mxu0
      %v744 = vadd.f32 %v572, %v743
      %v745 = vpop.f32.mrf.mxu0
      %v746 = vpop.f32.mrf.mxu0
      %v747 = vadd.f32 %v575, %v746
      %v748 = vpop.f32.mrf.mxu0
      %749 = vmatprep.mubr.bf16.mxu0 0
      %750 = vmatmul.mubr.bf16.gmra.mxu0 %v416
      %v751 = vpop.f32.mrf.mxu0
      %v752 = vadd.f32 %v580, %v751
      %v753 = vpop.f32.mrf.mxu0
      %v754 = vpop.f32.mrf.mxu0
      %v755 = vadd.f32 %v583, %v754
      %v756 = vpop.f32.mrf.mxu0
      %757 = vdwg.mxu0
      %s758 = scalar_lea.vmem %s237, 24
      %v759 = vld [vmem:[%s758] sm:$0xf]
      %v762 = vunpack.c.l.b16 %v287
      %v763 = vunpack.c.l.b16 %v288
      %v764 = vpack.c.b16 %v763, %v762
      %v766 = vsel %vm372, %v764, 0
      %v769 = vsel %vm421, %v759, 0
      %771 = vmatprep.subr.bf16.mxu0 0
      %772 = vmatpush1.bf16.msra.mxu0 0
      %773 = vmatprep.subr.bf16.mxu0 0
      %774 = vmatpush1.bf16.msra.mxu0 0
      %775 = vmatprep.subr.bf16.mxu0 0
      %776 = vmatpush1.bf16.msra.mxu0 0
      %777 = vmatprep.subr.bf16.mxu0 0
      %778 = vmatpush1.bf16.msra.mxu0 0
      %779 = vmatprep.subr.bf16.mxu0 0
      %780 = vmatpush1.bf16.msra.mxu0 0
      %781 = vmatprep.subr.bf16.mxu0 0
      %782 = vmatpush1.bf16.msra.mxu0 0
      %783 = vmatprep.subr.bf16.mxu0 0
      %784 = vmatpush1.bf16.msra.mxu0 0
      %785 = vmatprep.subr.bf16.mxu0 0
      %786 = vmatpush1.bf16.msra.mxu0 %v769
      %787 = vmatprep.subr.bf16.mxu0 0
      %788 = vmatpush2.bf16.msra.mxu0 0
      %789 = vmatprep.subr.bf16.mxu0 0
      %790 = vmatpush2.bf16.msra.mxu0 0
      %791 = vmatprep.subr.bf16.mxu0 0
      %792 = vmatpush2.bf16.msra.mxu0 0
      %793 = vmatprep.subr.bf16.mxu0 0
      %794 = vmatpush2.bf16.msra.mxu0 0
      %795 = vmatprep.subr.bf16.mxu0 0
      %796 = vmatpush2.bf16.msra.mxu0 0
      %797 = vmatprep.subr.bf16.mxu0 0
      %798 = vmatpush2.bf16.msra.mxu0 0
      %799 = vmatprep.subr.bf16.mxu0 0
      %800 = vmatpush2.bf16.msra.mxu0 0
      %801 = vmatprep.subr.bf16.mxu0 0
      %802 = vmatpush2.bf16.msra.mxu0 0
      %803 = vmatprep.mubr.bf16.mxu0 0
      %804 = vmatmul.mubr.bf16.gmra.mxu0 %v377
      %v805 = vpop.f32.mrf.mxu0
      %v806 = vadd.f32 0.0, %v805
      %v807 = vpop.f32.mrf.mxu0
      %v808 = vpop.f32.mrf.mxu0
      %v809 = vadd.f32 0.0, %v808
      %v810 = vpop.f32.mrf.mxu0
      %811 = vmatprep.mubr.bf16.mxu0 0
      %812 = vmatmul.mubr.bf16.gmra.mxu0 %v380
      %v813 = vpop.f32.mrf.mxu0
      %v814 = vadd.f32 0.0, %v813
      %v815 = vpop.f32.mrf.mxu0
      %v816 = vpop.f32.mrf.mxu0
      %v817 = vadd.f32 0.0, %v816
      %v818 = vpop.f32.mrf.mxu0
      %819 = vmatprep.mubr.bf16.mxu0 0
      %820 = vmatmul.mubr.bf16.gmra.mxu0 %v383
      %v821 = vpop.f32.mrf.mxu0
      %v822 = vadd.f32 0.0, %v821
      %v823 = vpop.f32.mrf.mxu0
      %v824 = vpop.f32.mrf.mxu0
      %v825 = vadd.f32 0.0, %v824
      %v826 = vpop.f32.mrf.mxu0
      %827 = vmatprep.mubr.bf16.mxu0 0
      %828 = vmatmul.mubr.bf16.gmra.mxu0 %v386
      %v829 = vpop.f32.mrf.mxu0
      %v830 = vadd.f32 0.0, %v829
      %v831 = vpop.f32.mrf.mxu0
      %v832 = vpop.f32.mrf.mxu0
      %v833 = vadd.f32 0.0, %v832
      %v834 = vpop.f32.mrf.mxu0
      %835 = vmatprep.mubr.bf16.mxu0 0
      %836 = vmatmul.mubr.bf16.gmra.mxu0 %v389
      %v837 = vpop.f32.mrf.mxu0
      %v838 = vadd.f32 0.0, %v837
      %v839 = vpop.f32.mrf.mxu0
      %v840 = vpop.f32.mrf.mxu0
      %v841 = vadd.f32 0.0, %v840
      %v842 = vpop.f32.mrf.mxu0
      %843 = vmatprep.mubr.bf16.mxu0 0
      %844 = vmatmul.mubr.bf16.gmra.mxu0 %v392
      %v845 = vpop.f32.mrf.mxu0
      %v846 = vadd.f32 0.0, %v845
      %v847 = vpop.f32.mrf.mxu0
      %v848 = vpop.f32.mrf.mxu0
      %v849 = vadd.f32 0.0, %v848
      %v850 = vpop.f32.mrf.mxu0
      %851 = vmatprep.mubr.bf16.mxu0 0
      %852 = vmatmul.mubr.bf16.gmra.mxu0 %v395
      %v853 = vpop.f32.mrf.mxu0
      %v854 = vadd.f32 0.0, %v853
      %v855 = vpop.f32.mrf.mxu0
      %v856 = vpop.f32.mrf.mxu0
      %v857 = vadd.f32 0.0, %v856
      %v858 = vpop.f32.mrf.mxu0
      %859 = vmatprep.mubr.bf16.mxu0 0
      %860 = vmatmul.mubr.bf16.gmra.mxu0 %v398
      %v861 = vpop.f32.mrf.mxu0
      %v862 = vadd.f32 0.0, %v861
      %v863 = vpop.f32.mrf.mxu0
      %v864 = vpop.f32.mrf.mxu0
      %v865 = vadd.f32 0.0, %v864
      %v866 = vpop.f32.mrf.mxu0
      %867 = vmatprep.mubr.bf16.mxu0 0
      %868 = vmatmul.mubr.bf16.gmra.mxu0 %v401
      %v869 = vpop.f32.mrf.mxu0
      %v870 = vadd.f32 0.0, %v869
      %v871 = vpop.f32.mrf.mxu0
      %v872 = vpop.f32.mrf.mxu0
      %v873 = vadd.f32 0.0, %v872
      %v874 = vpop.f32.mrf.mxu0
      %875 = vmatprep.mubr.bf16.mxu0 0
      %876 = vmatmul.mubr.bf16.gmra.mxu0 %v404
      %v877 = vpop.f32.mrf.mxu0
      %v878 = vadd.f32 0.0, %v877
      %v879 = vpop.f32.mrf.mxu0
      %v880 = vpop.f32.mrf.mxu0
      %v881 = vadd.f32 0.0, %v880
      %v882 = vpop.f32.mrf.mxu0
      %883 = vmatprep.mubr.bf16.mxu0 0
      %884 = vmatmul.mubr.bf16.gmra.mxu0 %v407
      %v885 = vpop.f32.mrf.mxu0
      %v886 = vadd.f32 0.0, %v885
      %v887 = vpop.f32.mrf.mxu0
      %v888 = vpop.f32.mrf.mxu0
      %v889 = vadd.f32 0.0, %v888
      %v890 = vpop.f32.mrf.mxu0
      %891 = vmatprep.mubr.bf16.mxu0 0
      %892 = vmatmul.mubr.bf16.gmra.mxu0 %v410
      %v893 = vpop.f32.mrf.mxu0
      %v894 = vadd.f32 0.0, %v893
      %v895 = vpop.f32.mrf.mxu0
      %v896 = vpop.f32.mrf.mxu0
      %v897 = vadd.f32 0.0, %v896
      %v898 = vpop.f32.mrf.mxu0
      %899 = vmatprep.mubr.bf16.mxu0 0
      %900 = vmatmul.mubr.bf16.gmra.mxu0 %v413
      %v901 = vpop.f32.mrf.mxu0
      %v902 = vadd.f32 0.0, %v901
      %v903 = vpop.f32.mrf.mxu0
      %v904 = vpop.f32.mrf.mxu0
      %v905 = vadd.f32 0.0, %v904
      %v906 = vpop.f32.mrf.mxu0
      %907 = vmatprep.mubr.bf16.mxu0 0
      %908 = vmatmul.mubr.bf16.gmra.mxu0 %v416
      %v909 = vpop.f32.mrf.mxu0
      %v910 = vadd.f32 0.0, %v909
      %v911 = vpop.f32.mrf.mxu0
      %v912 = vpop.f32.mrf.mxu0
      %v913 = vadd.f32 0.0, %v912
      %v914 = vpop.f32.mrf.mxu0
      %915 = vmatprep.mubr.bf16.mxu0 0
      %916 = vmatmul.mubr.bf16.gmra.mxu0 %v419
      %v917 = vpop.f32.mrf.mxu0
      %v918 = vadd.f32 0.0, %v917
      %v919 = vpop.f32.mrf.mxu0
      %v920 = vpop.f32.mrf.mxu0
      %v921 = vadd.f32 0.0, %v920
      %v922 = vpop.f32.mrf.mxu0
      %923 = vmatprep.mubr.bf16.mxu0 0
      %924 = vmatmul.mubr.bf16.gmra.mxu0 %v766
      %v925 = vpop.f32.mrf.mxu0
      %v926 = vadd.f32 0.0, %v925
      %v927 = vpop.f32.mrf.mxu0
      %v928 = vpop.f32.mrf.mxu0
      %v929 = vadd.f32 0.0, %v928
      %v930 = vpop.f32.mrf.mxu0
      %931 = vdwg.mxu0
      %v932 = vadd.f32 %v632, %v806
      %v933 = vadd.f32 %v635, %v809
      %v934 = vadd.f32 %v640, %v814
      %v935 = vadd.f32 %v643, %v817
      %v936 = vadd.f32 %v648, %v822
      %v937 = vadd.f32 %v651, %v825
      %v938 = vadd.f32 %v656, %v830
      %v939 = vadd.f32 %v659, %v833
      %v940 = vadd.f32 %v664, %v838
      %v941 = vadd.f32 %v667, %v841
      %v942 = vadd.f32 %v672, %v846
      %v943 = vadd.f32 %v675, %v849
      %v944 = vadd.f32 %v680, %v854
      %v945 = vadd.f32 %v683, %v857
      %v946 = vadd.f32 %v688, %v862
      %v947 = vadd.f32 %v691, %v865
      %v948 = vadd.f32 %v696, %v870
      %v949 = vadd.f32 %v699, %v873
      %v950 = vadd.f32 %v704, %v878
      %v951 = vadd.f32 %v707, %v881
      %v952 = vadd.f32 %v712, %v886
      %v953 = vadd.f32 %v715, %v889
      %v954 = vadd.f32 %v720, %v894
      %v955 = vadd.f32 %v723, %v897
      %v956 = vadd.f32 %v728, %v902
      %v957 = vadd.f32 %v731, %v905
      %v958 = vadd.f32 %v736, %v910
      %v959 = vadd.f32 %v739, %v913
      %v960 = vadd.f32 %v744, %v918
      %v961 = vadd.f32 %v747, %v921
      %v962 = vadd.f32 %v752, %v926
      %v963 = vadd.f32 %v755, %v929
      %v964 = vld [vmem:[%s233] sm:$0xf]
      %v965 = vld [vmem:[%s233 + $0x4] sm:$0xf]
      %v966 = vld [vmem:[%s233 + $0x8] sm:$0x1]
      %v967 = vld [vmem:[%s233 + $0xc] sm:$0xf]
      %v968 = vld [vmem:[%s233 + $0x10] sm:$0xf]
      %v969 = vld [vmem:[%s233 + $0x14] sm:$0x1]
      %v970 = vld [vmem:[%s233 + $0x18] sm:$0xf]
      %v971 = vld [vmem:[%s233 + $0x1c] sm:$0xf]
      %v972 = vld [vmem:[%s233 + $0x20] sm:$0x1]
      %v973 = vld [vmem:[%s233 + $0x24] sm:$0xf]
      %v974 = vld [vmem:[%s233 + $0x28] sm:$0xf]
      %v975 = vld [vmem:[%s233 + $0x2c] sm:$0x1]
      %v976 = vld [vmem:[%s233 + $0x30] sm:$0xf]
      %v977 = vld [vmem:[%s233 + $0x34] sm:$0xf]
      %v978 = vld [vmem:[%s233 + $0x38] sm:$0x1]
      %v979 = vld [vmem:[%s233 + $0x3c] sm:$0xf]
      %v980 = vld [vmem:[%s233 + $0x40] sm:$0xf]
      %v981 = vld [vmem:[%s233 + $0x44] sm:$0x1]
      %v982 = vld [vmem:[%s233 + $0x48] sm:$0xf]
      %v983 = vld [vmem:[%s233 + $0x4c] sm:$0xf]
      %v984 = vld [vmem:[%s233 + $0x50] sm:$0x1]
      %v985 = vld [vmem:[%s233 + $0x54] sm:$0xf]
      %v986 = vld [vmem:[%s233 + $0x58] sm:$0xf]
      %v987 = vld [vmem:[%s233 + $0x5c] sm:$0x1]
      %v988 = vld [vmem:[%s233 + $0x60] sm:$0xf]
      %v989 = vld [vmem:[%s233 + $0x64] sm:$0xf]
      %v990 = vld [vmem:[%s233 + $0x68] sm:$0x1]
      %v991 = vld [vmem:[%s233 + $0x6c] sm:$0xf]
      %v992 = vld [vmem:[%s233 + $0x70] sm:$0xf]
      %v993 = vld [vmem:[%s233 + $0x74] sm:$0x1]
      %v994 = vld [vmem:[%s233 + $0x78] sm:$0xf]
      %v995 = vld [vmem:[%s233 + $0x7c] sm:$0xf]
      %v996 = vld [vmem:[%s233 + $0x80] sm:$0x1]
      %v997 = vld [vmem:[%s233 + $0x84] sm:$0xf]
      %v998 = vld [vmem:[%s233 + $0x88] sm:$0xf]
      %v999 = vld [vmem:[%s233 + $0x8c] sm:$0x1]
      %v1000 = vld [vmem:[%s233 + $0x90] sm:$0xf]
      %v1001 = vld [vmem:[%s233 + $0x94] sm:$0xf]
      %v1002 = vld [vmem:[%s233 + $0x98] sm:$0x1]
      %v1003 = vld [vmem:[%s233 + $0x9c] sm:$0xf]
      %v1004 = vld [vmem:[%s233 + $0xa0] sm:$0xf]
      %v1005 = vld [vmem:[%s233 + $0xa4] sm:$0x1]
      %v1006 = vld [vmem:[%s233 + $0xa8] sm:$0xf]
      %v1007 = vld [vmem:[%s233 + $0xac] sm:$0xf]
      %v1008 = vld [vmem:[%s233 + $0xb0] sm:$0x1]
      %v1009 = vld [vmem:[%s233 + $0xb4] sm:$0xf]
      %v1010 = vld [vmem:[%s233 + $0xb8] sm:$0xf]
      %v1011 = vld [vmem:[%s233 + $0xbc] sm:$0x1]
      %v1012 = vld [vmem:[%s233 + $0xc0] sm:$0xf]
      %v1013 = vld [vmem:[%s233 + $0xc4] sm:$0xf]
      %v1014 = vld [vmem:[%s233 + $0xc8] sm:$0x1]
      %v1015 = vld [vmem:[%s233 + $0xcc] sm:$0xf]
      %v1016 = vld [vmem:[%s233 + $0xd0] sm:$0xf]
      %v1017 = vld [vmem:[%s233 + $0xd4] sm:$0x1]
      %vm1018 = vsmask.f32 3328
      %vm1019 = vsmask.f32 7440
      %vm1020 = vmor %vm1018, %vm1019
      %v1022 = vshrl.u32 %v964, 16
      %v1024 = vrot.slane %v1022, 4
      %v1025 = vshll.u32 %v964, 16
      %v1027 = vrot.slane %v1025, 5
      %v1028 = vor.u32 %v1024, %v1027
      %v1029 = vrot.slane %v1028, 4
      %v1031 = vshll.u32 %v965, 16
      %v1033 = vrot.slane %v1031, 5
      %v1034 = vsel %vm1020, %v1029, %v1033
      %v1035 = vshrl.u32 %v965, 16
      %v1037 = vrot.slane %v1035, 4
      %v1038 = vor.u32 %v1037, %v1033
      %v1039 = vrot.slane %v1038, 4
      %v1041 = vshll.u32 %v966, 16
      %v1043 = vrot.slane %v1041, 5
      %v1044 = vsel %vm1020, %v1039, %v1043
      %v1046 = vshrl.u32 %v967, 16
      %v1048 = vrot.slane %v1046, 4
      %v1049 = vshll.u32 %v967, 16
      %v1051 = vrot.slane %v1049, 5
      %v1052 = vor.u32 %v1048, %v1051
      %v1053 = vrot.slane %v1052, 4
      %v1055 = vshll.u32 %v968, 16
      %v1057 = vrot.slane %v1055, 5
      %v1058 = vsel %vm1020, %v1053, %v1057
      %v1059 = vshrl.u32 %v968, 16
      %v1061 = vrot.slane %v1059, 4
      %v1062 = vor.u32 %v1061, %v1057
      %v1063 = vrot.slane %v1062, 4
      %v1065 = vshll.u32 %v969, 16
      %v1067 = vrot.slane %v1065, 5
      %v1068 = vsel %vm1020, %v1063, %v1067
      %v1070 = vshrl.u32 %v970, 16
      %v1072 = vrot.slane %v1070, 4
      %v1073 = vshll.u32 %v970, 16
      %v1075 = vrot.slane %v1073, 5
      %v1076 = vor.u32 %v1072, %v1075
      %v1077 = vrot.slane %v1076, 4
      %v1079 = vshll.u32 %v971, 16
      %v1081 = vrot.slane %v1079, 5
      %v1082 = vsel %vm1020, %v1077, %v1081
      %v1083 = vshrl.u32 %v971, 16
      %v1085 = vrot.slane %v1083, 4
      %v1086 = vor.u32 %v1085, %v1081
      %v1087 = vrot.slane %v1086, 4
      %v1089 = vshll.u32 %v972, 16
      %v1091 = vrot.slane %v1089, 5
      %v1092 = vsel %vm1020, %v1087, %v1091
      %v1094 = vshrl.u32 %v973, 16
      %v1096 = vrot.slane %v1094, 4
      %v1097 = vshll.u32 %v973, 16
      %v1099 = vrot.slane %v1097, 5
      %v1100 = vor.u32 %v1096, %v1099
      %v1101 = vrot.slane %v1100, 4
      %v1103 = vshll.u32 %v974, 16
      %v1105 = vrot.slane %v1103, 5
      %v1106 = vsel %vm1020, %v1101, %v1105
      %v1107 = vshrl.u32 %v974, 16
      %v1109 = vrot.slane %v1107, 4
      %v1110 = vor.u32 %v1109, %v1105
      %v1111 = vrot.slane %v1110, 4
      %v1113 = vshll.u32 %v975, 16
      %v1115 = vrot.slane %v1113, 5
      %v1116 = vsel %vm1020, %v1111, %v1115
      %v1118 = vshrl.u32 %v976, 16
      %v1120 = vrot.slane %v1118, 4
      %v1121 = vshll.u32 %v976, 16
      %v1123 = vrot.slane %v1121, 5
      %v1124 = vor.u32 %v1120, %v1123
      %v1125 = vrot.slane %v1124, 4
      %v1127 = vshll.u32 %v977, 16
      %v1129 = vrot.slane %v1127, 5
      %v1130 = vsel %vm1020, %v1125, %v1129
      %v1131 = vshrl.u32 %v977, 16
      %v1133 = vrot.slane %v1131, 4
      %v1134 = vor.u32 %v1133, %v1129
      %v1135 = vrot.slane %v1134, 4
      %v1137 = vshll.u32 %v978, 16
      %v1139 = vrot.slane %v1137, 5
      %v1140 = vsel %vm1020, %v1135, %v1139
      %v1142 = vshrl.u32 %v979, 16
      %v1144 = vrot.slane %v1142, 4
      %v1145 = vshll.u32 %v979, 16
      %v1147 = vrot.slane %v1145, 5
      %v1148 = vor.u32 %v1144, %v1147
      %v1149 = vrot.slane %v1148, 4
      %v1151 = vshll.u32 %v980, 16
      %v1153 = vrot.slane %v1151, 5
      %v1154 = vsel %vm1020, %v1149, %v1153
      %v1155 = vshrl.u32 %v980, 16
      %v1157 = vrot.slane %v1155, 4
      %v1158 = vor.u32 %v1157, %v1153
      %v1159 = vrot.slane %v1158, 4
      %v1161 = vshll.u32 %v981, 16
      %v1163 = vrot.slane %v1161, 5
      %v1164 = vsel %vm1020, %v1159, %v1163
      %v1166 = vshrl.u32 %v982, 16
      %v1168 = vrot.slane %v1166, 4
      %v1169 = vshll.u32 %v982, 16
      %v1171 = vrot.slane %v1169, 5
      %v1172 = vor.u32 %v1168, %v1171
      %v1173 = vrot.slane %v1172, 4
      %v1175 = vshll.u32 %v983, 16
      %v1177 = vrot.slane %v1175, 5
      %v1178 = vsel %vm1020, %v1173, %v1177
      %v1179 = vshrl.u32 %v983, 16
      %v1181 = vrot.slane %v1179, 4
      %v1182 = vor.u32 %v1181, %v1177
      %v1183 = vrot.slane %v1182, 4
      %v1185 = vshll.u32 %v984, 16
      %v1187 = vrot.slane %v1185, 5
      %v1188 = vsel %vm1020, %v1183, %v1187
      %v1190 = vshrl.u32 %v985, 16
      %v1192 = vrot.slane %v1190, 4
      %v1193 = vshll.u32 %v985, 16
      %v1195 = vrot.slane %v1193, 5
      %v1196 = vor.u32 %v1192, %v1195
      %v1197 = vrot.slane %v1196, 4
      %v1199 = vshll.u32 %v986, 16
      %v1201 = vrot.slane %v1199, 5
      %v1202 = vsel %vm1020, %v1197, %v1201
      %v1203 = vshrl.u32 %v986, 16
      %v1205 = vrot.slane %v1203, 4
      %v1206 = vor.u32 %v1205, %v1201
      %v1207 = vrot.slane %v1206, 4
      %v1209 = vshll.u32 %v987, 16
      %v1211 = vrot.slane %v1209, 5
      %v1212 = vsel %vm1020, %v1207, %v1211
      %v1214 = vshrl.u32 %v988, 16
      %v1216 = vrot.slane %v1214, 4
      %v1217 = vshll.u32 %v988, 16
      %v1219 = vrot.slane %v1217, 5
      %v1220 = vor.u32 %v1216, %v1219
      %v1221 = vrot.slane %v1220, 4
      %v1223 = vshll.u32 %v989, 16
      %v1225 = vrot.slane %v1223, 5
      %v1226 = vsel %vm1020, %v1221, %v1225
      %v1227 = vshrl.u32 %v989, 16
      %v1229 = vrot.slane %v1227, 4
      %v1230 = vor.u32 %v1229, %v1225
      %v1231 = vrot.slane %v1230, 4
      %v1233 = vshll.u32 %v990, 16
      %v1235 = vrot.slane %v1233, 5
      %v1236 = vsel %vm1020, %v1231, %v1235
      %v1238 = vshrl.u32 %v991, 16
      %v1240 = vrot.slane %v1238, 4
      %v1241 = vshll.u32 %v991, 16
      %v1243 = vrot.slane %v1241, 5
      %v1244 = vor.u32 %v1240, %v1243
      %v1245 = vrot.slane %v1244, 4
      %v1247 = vshll.u32 %v992, 16
      %v1249 = vrot.slane %v1247, 5
      %v1250 = vsel %vm1020, %v1245, %v1249
      %v1251 = vshrl.u32 %v992, 16
      %v1253 = vrot.slane %v1251, 4
      %v1254 = vor.u32 %v1253, %v1249
      %v1255 = vrot.slane %v1254, 4
      %v1257 = vshll.u32 %v993, 16
      %v1259 = vrot.slane %v1257, 5
      %v1260 = vsel %vm1020, %v1255, %v1259
      %v1262 = vshrl.u32 %v994, 16
      %v1264 = vrot.slane %v1262, 4
      %v1265 = vshll.u32 %v994, 16
      %v1267 = vrot.slane %v1265, 5
      %v1268 = vor.u32 %v1264, %v1267
      %v1269 = vrot.slane %v1268, 4
      %v1271 = vshll.u32 %v995, 16
      %v1273 = vrot.slane %v1271, 5
      %v1274 = vsel %vm1020, %v1269, %v1273
      %v1275 = vshrl.u32 %v995, 16
      %v1277 = vrot.slane %v1275, 4
      %v1278 = vor.u32 %v1277, %v1273
      %v1279 = vrot.slane %v1278, 4
      %v1281 = vshll.u32 %v996, 16
      %v1283 = vrot.slane %v1281, 5
      %v1284 = vsel %vm1020, %v1279, %v1283
      %v1286 = vshrl.u32 %v997, 16
      %v1288 = vrot.slane %v1286, 4
      %v1289 = vshll.u32 %v997, 16
      %v1291 = vrot.slane %v1289, 5
      %v1292 = vor.u32 %v1288, %v1291
      %v1293 = vrot.slane %v1292, 4
      %v1295 = vshll.u32 %v998, 16
      %v1297 = vrot.slane %v1295, 5
      %v1298 = vsel %vm1020, %v1293, %v1297
      %v1299 = vshrl.u32 %v998, 16
      %v1301 = vrot.slane %v1299, 4
      %v1302 = vor.u32 %v1301, %v1297
      %v1303 = vrot.slane %v1302, 4
      %v1305 = vshll.u32 %v999, 16
      %v1307 = vrot.slane %v1305, 5
      %v1308 = vsel %vm1020, %v1303, %v1307
      %v1310 = vshrl.u32 %v1000, 16
      %v1312 = vrot.slane %v1310, 4
      %v1313 = vshll.u32 %v1000, 16
      %v1315 = vrot.slane %v1313, 5
      %v1316 = vor.u32 %v1312, %v1315
      %v1317 = vrot.slane %v1316, 4
      %v1319 = vshll.u32 %v1001, 16
      %v1321 = vrot.slane %v1319, 5
      %v1322 = vsel %vm1020, %v1317, %v1321
      %v1323 = vshrl.u32 %v1001, 16
      %v1325 = vrot.slane %v1323, 4
      %v1326 = vor.u32 %v1325, %v1321
      %v1327 = vrot.slane %v1326, 4
      %v1329 = vshll.u32 %v1002, 16
      %v1331 = vrot.slane %v1329, 5
      %v1332 = vsel %vm1020, %v1327, %v1331
      %v1334 = vshrl.u32 %v1003, 16
      %v1336 = vrot.slane %v1334, 4
      %v1337 = vshll.u32 %v1003, 16
      %v1339 = vrot.slane %v1337, 5
      %v1340 = vor.u32 %v1336, %v1339
      %v1341 = vrot.slane %v1340, 4
      %v1343 = vshll.u32 %v1004, 16
      %v1345 = vrot.slane %v1343, 5
      %v1346 = vsel %vm1020, %v1341, %v1345
      %v1347 = vshrl.u32 %v1004, 16
      %v1349 = vrot.slane %v1347, 4
      %v1350 = vor.u32 %v1349, %v1345
      %v1351 = vrot.slane %v1350, 4
      %v1353 = vshll.u32 %v1005, 16
      %v1355 = vrot.slane %v1353, 5
      %v1356 = vsel %vm1020, %v1351, %v1355
      %v1358 = vshrl.u32 %v1006, 16
      %v1360 = vrot.slane %v1358, 4
      %v1361 = vshll.u32 %v1006, 16
      %v1363 = vrot.slane %v1361, 5
      %v1364 = vor.u32 %v1360, %v1363
      %v1365 = vrot.slane %v1364, 4
      %v1367 = vshll.u32 %v1007, 16
      %v1369 = vrot.slane %v1367, 5
      %v1370 = vsel %vm1020, %v1365, %v1369
      %v1371 = vshrl.u32 %v1007, 16
      %v1373 = vrot.slane %v1371, 4
      %v1374 = vor.u32 %v1373, %v1369
      %v1375 = vrot.slane %v1374, 4
      %v1377 = vshll.u32 %v1008, 16
      %v1379 = vrot.slane %v1377, 5
      %v1380 = vsel %vm1020, %v1375, %v1379
      %v1382 = vshrl.u32 %v1009, 16
      %v1384 = vrot.slane %v1382, 4
      %v1385 = vshll.u32 %v1009, 16
      %v1387 = vrot.slane %v1385, 5
      %v1388 = vor.u32 %v1384, %v1387
      %v1389 = vrot.slane %v1388, 4
      %v1391 = vshll.u32 %v1010, 16
      %v1393 = vrot.slane %v1391, 5
      %v1394 = vsel %vm1020, %v1389, %v1393
      %v1395 = vshrl.u32 %v1010, 16
      %v1397 = vrot.slane %v1395, 4
      %v1398 = vor.u32 %v1397, %v1393
      %v1399 = vrot.slane %v1398, 4
      %v1401 = vshll.u32 %v1011, 16
      %v1403 = vrot.slane %v1401, 5
      %v1404 = vsel %vm1020, %v1399, %v1403
      %s1405 = scalar_lea.vmem %s237, 4
      %v1406 = vld [vmem:[%s1405] sm:$0xf]
      %v1407 = vunpack.c.l.b16 %v1034
      %v1408 = vunpack.c.l.b16 %v1044
      %v1409 = vunpack.c.l.b16 %v1058
      %v1410 = vunpack.c.l.b16 %v1068
      %v1411 = vunpack.c.l.b16 %v1082
      %v1412 = vunpack.c.l.b16 %v1092
      %v1413 = vunpack.c.l.b16 %v1106
      %v1414 = vunpack.c.l.b16 %v1116
      %v1415 = vunpack.c.l.b16 %v1130
      %v1416 = vunpack.c.l.b16 %v1140
      %v1417 = vunpack.c.l.b16 %v1154
      %v1418 = vunpack.c.l.b16 %v1164
      %v1419 = vunpack.c.l.b16 %v1178
      %v1420 = vunpack.c.l.b16 %v1188
      %v1421 = vunpack.c.l.b16 %v1202
      %v1422 = vunpack.c.l.b16 %v1212
      %v1423 = vunpack.c.l.b16 %v1226
      %v1424 = vunpack.c.l.b16 %v1236
      %v1425 = vunpack.c.l.b16 %v1250
      %v1426 = vunpack.c.l.b16 %v1260
      %v1427 = vunpack.c.l.b16 %v1274
      %v1428 = vunpack.c.l.b16 %v1284
      %v1429 = vunpack.c.l.b16 %v1298
      %v1430 = vunpack.c.l.b16 %v1308
      %v1431 = vunpack.c.l.b16 %v1322
      %v1432 = vunpack.c.l.b16 %v1332
      %v1433 = vunpack.c.l.b16 %v1346
      %v1434 = vunpack.c.l.b16 %v1356
      %v1435 = vunpack.c.l.b16 %v1370
      %v1436 = vunpack.c.l.b16 %v1380
      %v1437 = vunpack.c.l.b16 %v1394
      %v1438 = vunpack.c.l.b16 %v1404
      %v1439 = vpack.c.b16 %v1408, %v1407
      %v1440 = vpack.c.b16 %v1410, %v1409
      %v1441 = vpack.c.b16 %v1412, %v1411
      %v1442 = vpack.c.b16 %v1414, %v1413
      %v1443 = vpack.c.b16 %v1416, %v1415
      %v1444 = vpack.c.b16 %v1418, %v1417
      %v1445 = vpack.c.b16 %v1420, %v1419
      %v1446 = vpack.c.b16 %v1422, %v1421
      %v1447 = vpack.c.b16 %v1424, %v1423
      %v1448 = vpack.c.b16 %v1426, %v1425
      %v1449 = vpack.c.b16 %v1428, %v1427
      %v1450 = vpack.c.b16 %v1430, %v1429
      %v1451 = vpack.c.b16 %v1432, %v1431
      %v1452 = vpack.c.b16 %v1434, %v1433
      %v1453 = vpack.c.b16 %v1436, %v1435
      %v1454 = vpack.c.b16 %v1438, %v1437
      %v1456 = vsel %vm372, %v1439, 0
      %v1459 = vsel %vm372, %v1440, 0
      %v1462 = vsel %vm372, %v1441, 0
      %v1465 = vsel %vm372, %v1442, 0
      %v1468 = vsel %vm372, %v1443, 0
      %v1471 = vsel %vm372, %v1444, 0
      %v1474 = vsel %vm372, %v1445, 0
      %v1477 = vsel %vm372, %v1446, 0
      %v1480 = vsel %vm372, %v1447, 0
      %v1483 = vsel %vm372, %v1448, 0
      %v1486 = vsel %vm372, %v1449, 0
      %v1489 = vsel %vm372, %v1450, 0
      %v1492 = vsel %vm372, %v1451, 0
      %v1495 = vsel %vm372, %v1452, 0
      %v1498 = vsel %vm372, %v1453, 0
      %v1501 = vsel %vm372, %v1454, 0
      %v1504 = vsel %vm421, %v1406, 0
      %1506 = vmatprep.subr.bf16.mxu0 0
      %1507 = vmatpush1.bf16.msra.mxu0 0
      %1508 = vmatprep.subr.bf16.mxu0 0
      %1509 = vmatpush1.bf16.msra.mxu0 0
      %1510 = vmatprep.subr.bf16.mxu0 0
      %1511 = vmatpush1.bf16.msra.mxu0 0
      %1512 = vmatprep.subr.bf16.mxu0 0
      %1513 = vmatpush1.bf16.msra.mxu0 0
      %1514 = vmatprep.subr.bf16.mxu0 0
      %1515 = vmatpush1.bf16.msra.mxu0 0
      %1516 = vmatprep.subr.bf16.mxu0 0
      %1517 = vmatpush1.bf16.msra.mxu0 0
      %1518 = vmatprep.subr.bf16.mxu0 0
      %1519 = vmatpush1.bf16.msra.mxu0 0
      %1520 = vmatprep.subr.bf16.mxu0 0
      %1521 = vmatpush1.bf16.msra.mxu0 %v1504
      %1522 = vmatprep.subr.bf16.mxu0 0
      %1523 = vmatpush2.bf16.msra.mxu0 0
      %1524 = vmatprep.subr.bf16.mxu0 0
      %1525 = vmatpush2.bf16.msra.mxu0 0
      %1526 = vmatprep.subr.bf16.mxu0 0
      %1527 = vmatpush2.bf16.msra.mxu0 0
      %1528 = vmatprep.subr.bf16.mxu0 0
      %1529 = vmatpush2.bf16.msra.mxu0 0
      %1530 = vmatprep.subr.bf16.mxu0 0
      %1531 = vmatpush2.bf16.msra.mxu0 0
      %1532 = vmatprep.subr.bf16.mxu0 0
      %1533 = vmatpush2.bf16.msra.mxu0 0
      %1534 = vmatprep.subr.bf16.mxu0 0
      %1535 = vmatpush2.bf16.msra.mxu0 0
      %1536 = vmatprep.subr.bf16.mxu0 0
      %1537 = vmatpush2.bf16.msra.mxu0 0
      %1538 = vmatprep.mubr.bf16.mxu0 0
      %1539 = vmatmul.mubr.bf16.gmra.mxu0 %v1456
      %v1540 = vpop.f32.mrf.mxu0
      %v1541 = vadd.f32 0.0, %v1540
      %v1542 = vpop.f32.mrf.mxu0
      %v1543 = vpop.f32.mrf.mxu0
      %v1544 = vadd.f32 0.0, %v1543
      %v1545 = vpop.f32.mrf.mxu0
      %1546 = vmatprep.mubr.bf16.mxu0 0
      %1547 = vmatmul.mubr.bf16.gmra.mxu0 %v1459
      %v1548 = vpop.f32.mrf.mxu0
      %v1549 = vadd.f32 0.0, %v1548
      %v1550 = vpop.f32.mrf.mxu0
      %v1551 = vpop.f32.mrf.mxu0
      %v1552 = vadd.f32 0.0, %v1551
      %v1553 = vpop.f32.mrf.mxu0
      %1554 = vmatprep.mubr.bf16.mxu0 0
      %1555 = vmatmul.mubr.bf16.gmra.mxu0 %v1462
      %v1556 = vpop.f32.mrf.mxu0
      %v1557 = vadd.f32 0.0, %v1556
      %v1558 = vpop.f32.mrf.mxu0
      %v1559 = vpop.f32.mrf.mxu0
      %v1560 = vadd.f32 0.0, %v1559
      %v1561 = vpop.f32.mrf.mxu0
      %1562 = vmatprep.mubr.bf16.mxu0 0
      %1563 = vmatmul.mubr.bf16.gmra.mxu0 %v1465
      %v1564 = vpop.f32.mrf.mxu0
      %v1565 = vadd.f32 0.0, %v1564
      %v1566 = vpop.f32.mrf.mxu0
      %v1567 = vpop.f32.mrf.mxu0
      %v1568 = vadd.f32 0.0, %v1567
      %v1569 = vpop.f32.mrf.mxu0
      %1570 = vmatprep.mubr.bf16.mxu0 0
      %1571 = vmatmul.mubr.bf16.gmra.mxu0 %v1468
      %v1572 = vpop.f32.mrf.mxu0
      %v1573 = vadd.f32 0.0, %v1572
      %v1574 = vpop.f32.mrf.mxu0
      %v1575 = vpop.f32.mrf.mxu0
      %v1576 = vadd.f32 0.0, %v1575
      %v1577 = vpop.f32.mrf.mxu0
      %1578 = vmatprep.mubr.bf16.mxu0 0
      %1579 = vmatmul.mubr.bf16.gmra.mxu0 %v1471
      %v1580 = vpop.f32.mrf.mxu0
      %v1581 = vadd.f32 0.0, %v1580
      %v1582 = vpop.f32.mrf.mxu0
      %v1583 = vpop.f32.mrf.mxu0
      %v1584 = vadd.f32 0.0, %v1583
      %v1585 = vpop.f32.mrf.mxu0
      %1586 = vmatprep.mubr.bf16.mxu0 0
      %1587 = vmatmul.mubr.bf16.gmra.mxu0 %v1474
      %v1588 = vpop.f32.mrf.mxu0
      %v1589 = vadd.f32 0.0, %v1588
      %v1590 = vpop.f32.mrf.mxu0
      %v1591 = vpop.f32.mrf.mxu0
      %v1592 = vadd.f32 0.0, %v1591
      %v1593 = vpop.f32.mrf.mxu0
      %1594 = vmatprep.mubr.bf16.mxu0 0
      %1595 = vmatmul.mubr.bf16.gmra.mxu0 %v1477
      %v1596 = vpop.f32.mrf.mxu0
      %v1597 = vadd.f32 0.0, %v1596
      %v1598 = vpop.f32.mrf.mxu0
      %v1599 = vpop.f32.mrf.mxu0
      %v1600 = vadd.f32 0.0, %v1599
      %v1601 = vpop.f32.mrf.mxu0
      %1602 = vmatprep.mubr.bf16.mxu0 0
      %1603 = vmatmul.mubr.bf16.gmra.mxu0 %v1480
      %v1604 = vpop.f32.mrf.mxu0
      %v1605 = vadd.f32 0.0, %v1604
      %v1606 = vpop.f32.mrf.mxu0
      %v1607 = vpop.f32.mrf.mxu0
      %v1608 = vadd.f32 0.0, %v1607
      %v1609 = vpop.f32.mrf.mxu0
      %1610 = vmatprep.mubr.bf16.mxu0 0
      %1611 = vmatmul.mubr.bf16.gmra.mxu0 %v1483
      %v1612 = vpop.f32.mrf.mxu0
      %v1613 = vadd.f32 0.0, %v1612
      %v1614 = vpop.f32.mrf.mxu0
      %v1615 = vpop.f32.mrf.mxu0
      %v1616 = vadd.f32 0.0, %v1615
      %v1617 = vpop.f32.mrf.mxu0
      %1618 = vmatprep.mubr.bf16.mxu0 0
      %1619 = vmatmul.mubr.bf16.gmra.mxu0 %v1486
      %v1620 = vpop.f32.mrf.mxu0
      %v1621 = vadd.f32 0.0, %v1620
      %v1622 = vpop.f32.mrf.mxu0
      %v1623 = vpop.f32.mrf.mxu0
      %v1624 = vadd.f32 0.0, %v1623
      %v1625 = vpop.f32.mrf.mxu0
      %1626 = vmatprep.mubr.bf16.mxu0 0
      %1627 = vmatmul.mubr.bf16.gmra.mxu0 %v1489
      %v1628 = vpop.f32.mrf.mxu0
      %v1629 = vadd.f32 0.0, %v1628
      %v1630 = vpop.f32.mrf.mxu0
      %v1631 = vpop.f32.mrf.mxu0
      %v1632 = vadd.f32 0.0, %v1631
      %v1633 = vpop.f32.mrf.mxu0
      %1634 = vmatprep.mubr.bf16.mxu0 0
      %1635 = vmatmul.mubr.bf16.gmra.mxu0 %v1492
      %v1636 = vpop.f32.mrf.mxu0
      %v1637 = vadd.f32 0.0, %v1636
      %v1638 = vpop.f32.mrf.mxu0
      %v1639 = vpop.f32.mrf.mxu0
      %v1640 = vadd.f32 0.0, %v1639
      %v1641 = vpop.f32.mrf.mxu0
      %1642 = vmatprep.mubr.bf16.mxu0 0
      %1643 = vmatmul.mubr.bf16.gmra.mxu0 %v1495
      %v1644 = vpop.f32.mrf.mxu0
      %v1645 = vadd.f32 0.0, %v1644
      %v1646 = vpop.f32.mrf.mxu0
      %v1647 = vpop.f32.mrf.mxu0
      %v1648 = vadd.f32 0.0, %v1647
      %v1649 = vpop.f32.mrf.mxu0
      %1650 = vmatprep.mubr.bf16.mxu0 0
      %1651 = vmatmul.mubr.bf16.gmra.mxu0 %v1498
      %v1652 = vpop.f32.mrf.mxu0
      %v1653 = vadd.f32 0.0, %v1652
      %v1654 = vpop.f32.mrf.mxu0
      %v1655 = vpop.f32.mrf.mxu0
      %v1656 = vadd.f32 0.0, %v1655
      %v1657 = vpop.f32.mrf.mxu0
      %1658 = vmatprep.mubr.bf16.mxu0 0
      %1659 = vmatmul.mubr.bf16.gmra.mxu0 %v1501
      %v1660 = vpop.f32.mrf.mxu0
      %v1661 = vadd.f32 0.0, %v1660
      %v1662 = vpop.f32.mrf.mxu0
      %v1663 = vpop.f32.mrf.mxu0
      %v1664 = vadd.f32 0.0, %v1663
      %v1665 = vpop.f32.mrf.mxu0
      %1666 = vdwg.mxu0
      %v1667 = vadd.f32 %v932, %v1541
      %v1668 = vadd.f32 %v933, %v1544
      %v1669 = vadd.f32 %v934, %v1549
      %v1670 = vadd.f32 %v935, %v1552
      %v1671 = vadd.f32 %v936, %v1557
      %v1672 = vadd.f32 %v937, %v1560
      %v1673 = vadd.f32 %v938, %v1565
      %v1674 = vadd.f32 %v939, %v1568
      %v1675 = vadd.f32 %v940, %v1573
      %v1676 = vadd.f32 %v941, %v1576
      %v1677 = vadd.f32 %v942, %v1581
      %v1678 = vadd.f32 %v943, %v1584
      %v1679 = vadd.f32 %v944, %v1589
      %v1680 = vadd.f32 %v945, %v1592
      %v1681 = vadd.f32 %v946, %v1597
      %v1682 = vadd.f32 %v947, %v1600
      %v1683 = vadd.f32 %v948, %v1605
      %v1684 = vadd.f32 %v949, %v1608
      %v1685 = vadd.f32 %v950, %v1613
      %v1686 = vadd.f32 %v951, %v1616
      %v1687 = vadd.f32 %v952, %v1621
      %v1688 = vadd.f32 %v953, %v1624
      %v1689 = vadd.f32 %v954, %v1629
      %v1690 = vadd.f32 %v955, %v1632
      %v1691 = vadd.f32 %v956, %v1637
      %v1692 = vadd.f32 %v957, %v1640
      %v1693 = vadd.f32 %v958, %v1645
      %v1694 = vadd.f32 %v959, %v1648
      %v1695 = vadd.f32 %v960, %v1653
      %v1696 = vadd.f32 %v961, %v1656
      %v1697 = vadd.f32 %v962, %v1661
      %v1698 = vadd.f32 %v963, %v1664
      %v1700 = vshrl.u32 %v1012, 16
      %v1702 = vrot.slane %v1700, 4
      %v1703 = vshll.u32 %v1012, 16
      %v1705 = vrot.slane %v1703, 5
      %v1706 = vor.u32 %v1702, %v1705
      %v1707 = vrot.slane %v1706, 4
      %v1709 = vshll.u32 %v1013, 16
      %v1711 = vrot.slane %v1709, 5
      %v1712 = vsel %vm1020, %v1707, %v1711
      %v1713 = vshrl.u32 %v1013, 16
      %v1715 = vrot.slane %v1713, 4
      %v1716 = vor.u32 %v1715, %v1711
      %v1717 = vrot.slane %v1716, 4
      %v1719 = vshll.u32 %v1014, 16
      %v1721 = vrot.slane %v1719, 5
      %v1722 = vsel %vm1020, %v1717, %v1721
      %s1723 = scalar_lea.vmem %s237, 16
      %v1724 = vld [vmem:[%s1723] sm:$0xf]
      %v1725 = vunpack.c.l.b16 %v1712
      %v1726 = vunpack.c.l.b16 %v1722
      %v1727 = vpack.c.b16 %v1726, %v1725
      %v1729 = vsel %vm372, %v1727, 0
      %v1732 = vsel %vm421, %v1724, 0
      %1734 = vmatprep.subr.bf16.mxu0 0
      %1735 = vmatpush1.bf16.msra.mxu0 0
      %1736 = vmatprep.subr.bf16.mxu0 0
      %1737 = vmatpush1.bf16.msra.mxu0 0
      %1738 = vmatprep.subr.bf16.mxu0 0
      %1739 = vmatpush1.bf16.msra.mxu0 0
      %1740 = vmatprep.subr.bf16.mxu0 0
      %1741 = vmatpush1.bf16.msra.mxu0 0
      %1742 = vmatprep.subr.bf16.mxu0 0
      %1743 = vmatpush1.bf16.msra.mxu0 0
      %1744 = vmatprep.subr.bf16.mxu0 0
      %1745 = vmatpush1.bf16.msra.mxu0 0
      %1746 = vmatprep.subr.bf16.mxu0 0
      %1747 = vmatpush1.bf16.msra.mxu0 0
      %1748 = vmatprep.subr.bf16.mxu0 0
      %1749 = vmatpush1.bf16.msra.mxu0 %v1732
      %1750 = vmatprep.subr.bf16.mxu0 0
      %1751 = vmatpush2.bf16.msra.mxu0 0
      %1752 = vmatprep.subr.bf16.mxu0 0
      %1753 = vmatpush2.bf16.msra.mxu0 0
      %1754 = vmatprep.subr.bf16.mxu0 0
      %1755 = vmatpush2.bf16.msra.mxu0 0
      %1756 = vmatprep.subr.bf16.mxu0 0
      %1757 = vmatpush2.bf16.msra.mxu0 0
      %1758 = vmatprep.subr.bf16.mxu0 0
      %1759 = vmatpush2.bf16.msra.mxu0 0
      %1760 = vmatprep.subr.bf16.mxu0 0
      %1761 = vmatpush2.bf16.msra.mxu0 0
      %1762 = vmatprep.subr.bf16.mxu0 0
      %1763 = vmatpush2.bf16.msra.mxu0 0
      %1764 = vmatprep.subr.bf16.mxu0 0
      %1765 = vmatpush2.bf16.msra.mxu0 0
      %1766 = vmatprep.mubr.bf16.mxu0 0
      %1767 = vmatmul.mubr.bf16.gmra.mxu0 %v1459
      %v1768 = vpop.f32.mrf.mxu0
      %v1769 = vadd.f32 0.0, %v1768
      %v1770 = vpop.f32.mrf.mxu0
      %v1771 = vpop.f32.mrf.mxu0
      %v1772 = vadd.f32 0.0, %v1771
      %v1773 = vpop.f32.mrf.mxu0
      %1774 = vmatprep.mubr.bf16.mxu0 0
      %1775 = vmatmul.mubr.bf16.gmra.mxu0 %v1462
      %v1776 = vpop.f32.mrf.mxu0
      %v1777 = vadd.f32 0.0, %v1776
      %v1778 = vpop.f32.mrf.mxu0
      %v1779 = vpop.f32.mrf.mxu0
      %v1780 = vadd.f32 0.0, %v1779
      %v1781 = vpop.f32.mrf.mxu0
      %1782 = vmatprep.mubr.bf16.mxu0 0
      %1783 = vmatmul.mubr.bf16.gmra.mxu0 %v1465
      %v1784 = vpop.f32.mrf.mxu0
      %v1785 = vadd.f32 0.0, %v1784
      %v1786 = vpop.f32.mrf.mxu0
      %v1787 = vpop.f32.mrf.mxu0
      %v1788 = vadd.f32 0.0, %v1787
      %v1789 = vpop.f32.mrf.mxu0
      %1790 = vmatprep.mubr.bf16.mxu0 0
      %1791 = vmatmul.mubr.bf16.gmra.mxu0 %v1468
      %v1792 = vpop.f32.mrf.mxu0
      %v1793 = vadd.f32 0.0, %v1792
      %v1794 = vpop.f32.mrf.mxu0
      %v1795 = vpop.f32.mrf.mxu0
      %v1796 = vadd.f32 0.0, %v1795
      %v1797 = vpop.f32.mrf.mxu0
      %1798 = vmatprep.mubr.bf16.mxu0 0
      %1799 = vmatmul.mubr.bf16.gmra.mxu0 %v1471
      %v1800 = vpop.f32.mrf.mxu0
      %v1801 = vadd.f32 0.0, %v1800
      %v1802 = vpop.f32.mrf.mxu0
      %v1803 = vpop.f32.mrf.mxu0
      %v1804 = vadd.f32 0.0, %v1803
      %v1805 = vpop.f32.mrf.mxu0
      %1806 = vmatprep.mubr.bf16.mxu0 0
      %1807 = vmatmul.mubr.bf16.gmra.mxu0 %v1474
      %v1808 = vpop.f32.mrf.mxu0
      %v1809 = vadd.f32 0.0, %v1808
      %v1810 = vpop.f32.mrf.mxu0
      %v1811 = vpop.f32.mrf.mxu0
      %v1812 = vadd.f32 0.0, %v1811
      %v1813 = vpop.f32.mrf.mxu0
      %1814 = vmatprep.mubr.bf16.mxu0 0
      %1815 = vmatmul.mubr.bf16.gmra.mxu0 %v1477
      %v1816 = vpop.f32.mrf.mxu0
      %v1817 = vadd.f32 0.0, %v1816
      %v1818 = vpop.f32.mrf.mxu0
      %v1819 = vpop.f32.mrf.mxu0
      %v1820 = vadd.f32 0.0, %v1819
      %v1821 = vpop.f32.mrf.mxu0
      %1822 = vmatprep.mubr.bf16.mxu0 0
      %1823 = vmatmul.mubr.bf16.gmra.mxu0 %v1480
      %v1824 = vpop.f32.mrf.mxu0
      %v1825 = vadd.f32 0.0, %v1824
      %v1826 = vpop.f32.mrf.mxu0
      %v1827 = vpop.f32.mrf.mxu0
      %v1828 = vadd.f32 0.0, %v1827
      %v1829 = vpop.f32.mrf.mxu0
      %1830 = vmatprep.mubr.bf16.mxu0 0
      %1831 = vmatmul.mubr.bf16.gmra.mxu0 %v1483
      %v1832 = vpop.f32.mrf.mxu0
      %v1833 = vadd.f32 0.0, %v1832
      %v1834 = vpop.f32.mrf.mxu0
      %v1835 = vpop.f32.mrf.mxu0
      %v1836 = vadd.f32 0.0, %v1835
      %v1837 = vpop.f32.mrf.mxu0
      %1838 = vmatprep.mubr.bf16.mxu0 0
      %1839 = vmatmul.mubr.bf16.gmra.mxu0 %v1486
      %v1840 = vpop.f32.mrf.mxu0
      %v1841 = vadd.f32 0.0, %v1840
      %v1842 = vpop.f32.mrf.mxu0
      %v1843 = vpop.f32.mrf.mxu0
      %v1844 = vadd.f32 0.0, %v1843
      %v1845 = vpop.f32.mrf.mxu0
      %1846 = vmatprep.mubr.bf16.mxu0 0
      %1847 = vmatmul.mubr.bf16.gmra.mxu0 %v1489
      %v1848 = vpop.f32.mrf.mxu0
      %v1849 = vadd.f32 0.0, %v1848
      %v1850 = vpop.f32.mrf.mxu0
      %v1851 = vpop.f32.mrf.mxu0
      %v1852 = vadd.f32 0.0, %v1851
      %v1853 = vpop.f32.mrf.mxu0
      %1854 = vmatprep.mubr.bf16.mxu0 0
      %1855 = vmatmul.mubr.bf16.gmra.mxu0 %v1492
      %v1856 = vpop.f32.mrf.mxu0
      %v1857 = vadd.f32 0.0, %v1856
      %v1858 = vpop.f32.mrf.mxu0
      %v1859 = vpop.f32.mrf.mxu0
      %v1860 = vadd.f32 0.0, %v1859
      %v1861 = vpop.f32.mrf.mxu0
      %1862 = vmatprep.mubr.bf16.mxu0 0
      %1863 = vmatmul.mubr.bf16.gmra.mxu0 %v1495
      %v1864 = vpop.f32.mrf.mxu0
      %v1865 = vadd.f32 0.0, %v1864
      %v1866 = vpop.f32.mrf.mxu0
      %v1867 = vpop.f32.mrf.mxu0
      %v1868 = vadd.f32 0.0, %v1867
      %v1869 = vpop.f32.mrf.mxu0
      %1870 = vmatprep.mubr.bf16.mxu0 0
      %1871 = vmatmul.mubr.bf16.gmra.mxu0 %v1498
      %v1872 = vpop.f32.mrf.mxu0
      %v1873 = vadd.f32 0.0, %v1872
      %v1874 = vpop.f32.mrf.mxu0
      %v1875 = vpop.f32.mrf.mxu0
      %v1876 = vadd.f32 0.0, %v1875
      %v1877 = vpop.f32.mrf.mxu0
      %1878 = vmatprep.mubr.bf16.mxu0 0
      %1879 = vmatmul.mubr.bf16.gmra.mxu0 %v1501
      %v1880 = vpop.f32.mrf.mxu0
      %v1881 = vadd.f32 0.0, %v1880
      %v1882 = vpop.f32.mrf.mxu0
      %v1883 = vpop.f32.mrf.mxu0
      %v1884 = vadd.f32 0.0, %v1883
      %v1885 = vpop.f32.mrf.mxu0
      %1886 = vmatprep.mubr.bf16.mxu0 0
      %1887 = vmatmul.mubr.bf16.gmra.mxu0 %v1729
      %v1888 = vpop.f32.mrf.mxu0
      %v1889 = vadd.f32 0.0, %v1888
      %v1890 = vpop.f32.mrf.mxu0
      %v1891 = vpop.f32.mrf.mxu0
      %v1892 = vadd.f32 0.0, %v1891
      %v1893 = vpop.f32.mrf.mxu0
      %1894 = vdwg.mxu0
      %v1895 = vadd.f32 %v1667, %v1769
      %v1896 = vadd.f32 %v1668, %v1772
      %v1897 = vadd.f32 %v1669, %v1777
      %v1898 = vadd.f32 %v1670, %v1780
      %v1899 = vadd.f32 %v1671, %v1785
      %v1900 = vadd.f32 %v1672, %v1788
      %v1901 = vadd.f32 %v1673, %v1793
      %v1902 = vadd.f32 %v1674, %v1796
      %v1903 = vadd.f32 %v1675, %v1801
      %v1904 = vadd.f32 %v1676, %v1804
      %v1905 = vadd.f32 %v1677, %v1809
      %v1906 = vadd.f32 %v1678, %v1812
      %v1907 = vadd.f32 %v1679, %v1817
      %v1908 = vadd.f32 %v1680, %v1820
      %v1909 = vadd.f32 %v1681, %v1825
      %v1910 = vadd.f32 %v1682, %v1828
      %v1911 = vadd.f32 %v1683, %v1833
      %v1912 = vadd.f32 %v1684, %v1836
      %v1913 = vadd.f32 %v1685, %v1841
      %v1914 = vadd.f32 %v1686, %v1844
      %v1915 = vadd.f32 %v1687, %v1849
      %v1916 = vadd.f32 %v1688, %v1852
      %v1917 = vadd.f32 %v1689, %v1857
      %v1918 = vadd.f32 %v1690, %v1860
      %v1919 = vadd.f32 %v1691, %v1865
      %v1920 = vadd.f32 %v1692, %v1868
      %v1921 = vadd.f32 %v1693, %v1873
      %v1922 = vadd.f32 %v1694, %v1876
      %v1923 = vadd.f32 %v1695, %v1881
      %v1924 = vadd.f32 %v1696, %v1884
      %v1925 = vadd.f32 %v1697, %v1889
      %v1926 = vadd.f32 %v1698, %v1892
      %v1928 = vshrl.u32 %v1015, 16
      %v1930 = vrot.slane %v1928, 4
      %v1931 = vshll.u32 %v1015, 16
      %v1933 = vrot.slane %v1931, 5
      %v1934 = vor.u32 %v1930, %v1933
      %v1935 = vrot.slane %v1934, 4
      %v1937 = vshll.u32 %v1016, 16
      %v1939 = vrot.slane %v1937, 5
      %v1940 = vsel %vm1020, %v1935, %v1939
      %v1941 = vshrl.u32 %v1016, 16
      %v1943 = vrot.slane %v1941, 4
      %v1944 = vor.u32 %v1943, %v1939
      %v1945 = vrot.slane %v1944, 4
      %v1947 = vshll.u32 %v1017, 16
      %v1949 = vrot.slane %v1947, 5
      %v1950 = vsel %vm1020, %v1945, %v1949
      %s1951 = scalar_lea.vmem %s237, 28
      %v1952 = vld [vmem:[%s1951] sm:$0xf]
      %v1953 = vunpack.c.l.b16 %v1940
      %v1954 = vunpack.c.l.b16 %v1950
      %v1955 = vpack.c.b16 %v1954, %v1953
      %v1957 = vsel %vm372, %v1955, 0
      %v1960 = vsel %vm421, %v1952, 0
      %1962 = vmatprep.subr.bf16.mxu0 0
      %1963 = vmatpush1.bf16.msra.mxu0 0
      %1964 = vmatprep.subr.bf16.mxu0 0
      %1965 = vmatpush1.bf16.msra.mxu0 0
      %1966 = vmatprep.subr.bf16.mxu0 0
      %1967 = vmatpush1.bf16.msra.mxu0 0
      %1968 = vmatprep.subr.bf16.mxu0 0
      %1969 = vmatpush1.bf16.msra.mxu0 0
      %1970 = vmatprep.subr.bf16.mxu0 0
      %1971 = vmatpush1.bf16.msra.mxu0 0
      %1972 = vmatprep.subr.bf16.mxu0 0
      %1973 = vmatpush1.bf16.msra.mxu0 0
      %1974 = vmatprep.subr.bf16.mxu0 0
      %1975 = vmatpush1.bf16.msra.mxu0 0
      %1976 = vmatprep.subr.bf16.mxu0 0
      %1977 = vmatpush1.bf16.msra.mxu0 %v1960
      %1978 = vmatprep.subr.bf16.mxu0 0
      %1979 = vmatpush2.bf16.msra.mxu0 0
      %1980 = vmatprep.subr.bf16.mxu0 0
      %1981 = vmatpush2.bf16.msra.mxu0 0
      %1982 = vmatprep.subr.bf16.mxu0 0
      %1983 = vmatpush2.bf16.msra.mxu0 0
      %1984 = vmatprep.subr.bf16.mxu0 0
      %1985 = vmatpush2.bf16.msra.mxu0 0
      %1986 = vmatprep.subr.bf16.mxu0 0
      %1987 = vmatpush2.bf16.msra.mxu0 0
      %1988 = vmatprep.subr.bf16.mxu0 0
      %1989 = vmatpush2.bf16.msra.mxu0 0
      %1990 = vmatprep.subr.bf16.mxu0 0
      %1991 = vmatpush2.bf16.msra.mxu0 0
      %1992 = vmatprep.subr.bf16.mxu0 0
      %1993 = vmatpush2.bf16.msra.mxu0 0
      %1994 = vmatprep.mubr.bf16.mxu0 0
      %1995 = vmatmul.mubr.bf16.gmra.mxu0 %v1462
      %v1996 = vpop.f32.mrf.mxu0
      %v1997 = vadd.f32 0.0, %v1996
      %v1998 = vpop.f32.mrf.mxu0
      %v1999 = vpop.f32.mrf.mxu0
      %v2000 = vadd.f32 0.0, %v1999
      %v2001 = vpop.f32.mrf.mxu0
      %2002 = vmatprep.mubr.bf16.mxu0 0
      %2003 = vmatmul.mubr.bf16.gmra.mxu0 %v1465
      %v2004 = vpop.f32.mrf.mxu0
      %v2005 = vadd.f32 0.0, %v2004
      %v2006 = vpop.f32.mrf.mxu0
      %v2007 = vpop.f32.mrf.mxu0
      %v2008 = vadd.f32 0.0, %v2007
      %v2009 = vpop.f32.mrf.mxu0
      %2010 = vmatprep.mubr.bf16.mxu0 0
      %2011 = vmatmul.mubr.bf16.gmra.mxu0 %v1468
      %v2012 = vpop.f32.mrf.mxu0
      %v2013 = vadd.f32 0.0, %v2012
      %v2014 = vpop.f32.mrf.mxu0
      %v2015 = vpop.f32.mrf.mxu0
      %v2016 = vadd.f32 0.0, %v2015
      %v2017 = vpop.f32.mrf.mxu0
      %2018 = vmatprep.mubr.bf16.mxu0 0
      %2019 = vmatmul.mubr.bf16.gmra.mxu0 %v1471
      %v2020 = vpop.f32.mrf.mxu0
      %v2021 = vadd.f32 0.0, %v2020
      %v2022 = vpop.f32.mrf.mxu0
      %v2023 = vpop.f32.mrf.mxu0
      %v2024 = vadd.f32 0.0, %v2023
      %v2025 = vpop.f32.mrf.mxu0
      %2026 = vmatprep.mubr.bf16.mxu0 0
      %2027 = vmatmul.mubr.bf16.gmra.mxu0 %v1474
      %v2028 = vpop.f32.mrf.mxu0
      %v2029 = vadd.f32 0.0, %v2028
      %v2030 = vpop.f32.mrf.mxu0
      %v2031 = vpop.f32.mrf.mxu0
      %v2032 = vadd.f32 0.0, %v2031
      %v2033 = vpop.f32.mrf.mxu0
      %2034 = vmatprep.mubr.bf16.mxu0 0
      %2035 = vmatmul.mubr.bf16.gmra.mxu0 %v1477
      %v2036 = vpop.f32.mrf.mxu0
      %v2037 = vadd.f32 0.0, %v2036
      %v2038 = vpop.f32.mrf.mxu0
      %v2039 = vpop.f32.mrf.mxu0
      %v2040 = vadd.f32 0.0, %v2039
      %v2041 = vpop.f32.mrf.mxu0
      %2042 = vmatprep.mubr.bf16.mxu0 0
      %2043 = vmatmul.mubr.bf16.gmra.mxu0 %v1480
      %v2044 = vpop.f32.mrf.mxu0
      %v2045 = vadd.f32 0.0, %v2044
      %v2046 = vpop.f32.mrf.mxu0
      %v2047 = vpop.f32.mrf.mxu0
      %v2048 = vadd.f32 0.0, %v2047
      %v2049 = vpop.f32.mrf.mxu0
      %2050 = vmatprep.mubr.bf16.mxu0 0
      %2051 = vmatmul.mubr.bf16.gmra.mxu0 %v1483
      %v2052 = vpop.f32.mrf.mxu0
      %v2053 = vadd.f32 0.0, %v2052
      %v2054 = vpop.f32.mrf.mxu0
      %v2055 = vpop.f32.mrf.mxu0
      %v2056 = vadd.f32 0.0, %v2055
      %v2057 = vpop.f32.mrf.mxu0
      %2058 = vmatprep.mubr.bf16.mxu0 0
      %2059 = vmatmul.mubr.bf16.gmra.mxu0 %v1486
      %v2060 = vpop.f32.mrf.mxu0
      %v2061 = vadd.f32 0.0, %v2060
      %v2062 = vpop.f32.mrf.mxu0
      %v2063 = vpop.f32.mrf.mxu0
      %v2064 = vadd.f32 0.0, %v2063
      %v2065 = vpop.f32.mrf.mxu0
      %2066 = vmatprep.mubr.bf16.mxu0 0
      %2067 = vmatmul.mubr.bf16.gmra.mxu0 %v1489
      %v2068 = vpop.f32.mrf.mxu0
      %v2069 = vadd.f32 0.0, %v2068
      %v2070 = vpop.f32.mrf.mxu0
      %v2071 = vpop.f32.mrf.mxu0
      %v2072 = vadd.f32 0.0, %v2071
      %v2073 = vpop.f32.mrf.mxu0
      %2074 = vmatprep.mubr.bf16.mxu0 0
      %2075 = vmatmul.mubr.bf16.gmra.mxu0 %v1492
      %v2076 = vpop.f32.mrf.mxu0
      %v2077 = vadd.f32 0.0, %v2076
      %v2078 = vpop.f32.mrf.mxu0
      %v2079 = vpop.f32.mrf.mxu0
      %v2080 = vadd.f32 0.0, %v2079
      %v2081 = vpop.f32.mrf.mxu0
      %2082 = vmatprep.mubr.bf16.mxu0 0
      %2083 = vmatmul.mubr.bf16.gmra.mxu0 %v1495
      %v2084 = vpop.f32.mrf.mxu0
      %v2085 = vadd.f32 0.0, %v2084
      %v2086 = vpop.f32.mrf.mxu0
      %v2087 = vpop.f32.mrf.mxu0
      %v2088 = vadd.f32 0.0, %v2087
      %v2089 = vpop.f32.mrf.mxu0
      %2090 = vmatprep.mubr.bf16.mxu0 0
      %2091 = vmatmul.mubr.bf16.gmra.mxu0 %v1498
      %v2092 = vpop.f32.mrf.mxu0
      %v2093 = vadd.f32 0.0, %v2092
      %v2094 = vpop.f32.mrf.mxu0
      %v2095 = vpop.f32.mrf.mxu0
      %v2096 = vadd.f32 0.0, %v2095
      %v2097 = vpop.f32.mrf.mxu0
      %2098 = vmatprep.mubr.bf16.mxu0 0
      %2099 = vmatmul.mubr.bf16.gmra.mxu0 %v1501
      %v2100 = vpop.f32.mrf.mxu0
      %v2101 = vadd.f32 0.0, %v2100
      %v2102 = vpop.f32.mrf.mxu0
      %v2103 = vpop.f32.mrf.mxu0
      %v2104 = vadd.f32 0.0, %v2103
      %v2105 = vpop.f32.mrf.mxu0
      %2106 = vmatprep.mubr.bf16.mxu0 0
      %2107 = vmatmul.mubr.bf16.gmra.mxu0 %v1729
      %v2108 = vpop.f32.mrf.mxu0
      %v2109 = vadd.f32 0.0, %v2108
      %v2110 = vpop.f32.mrf.mxu0
      %v2111 = vpop.f32.mrf.mxu0
      %v2112 = vadd.f32 0.0, %v2111
      %v2113 = vpop.f32.mrf.mxu0
      %2114 = vmatprep.mubr.bf16.mxu0 0
      %2115 = vmatmul.mubr.bf16.gmra.mxu0 %v1957
      %v2116 = vpop.f32.mrf.mxu0
      %v2117 = vadd.f32 0.0, %v2116
      %v2118 = vpop.f32.mrf.mxu0
      %v2119 = vpop.f32.mrf.mxu0
      %v2120 = vadd.f32 0.0, %v2119
      %v2121 = vpop.f32.mrf.mxu0
      %2122 = vdwg.mxu0
      %v2123 = vadd.f32 %v1895, %v1997
      %v2124 = vadd.f32 %v1896, %v2000
      %v2125 = vadd.f32 %v1897, %v2005
      %v2126 = vadd.f32 %v1898, %v2008
      %v2127 = vadd.f32 %v1899, %v2013
      %v2128 = vadd.f32 %v1900, %v2016
      %v2129 = vadd.f32 %v1901, %v2021
      %v2130 = vadd.f32 %v1902, %v2024
      %v2131 = vadd.f32 %v1903, %v2029
      %v2132 = vadd.f32 %v1904, %v2032
      %v2133 = vadd.f32 %v1905, %v2037
      %v2134 = vadd.f32 %v1906, %v2040
      %v2135 = vadd.f32 %v1907, %v2045
      %v2136 = vadd.f32 %v1908, %v2048
      %v2137 = vadd.f32 %v1909, %v2053
      %v2138 = vadd.f32 %v1910, %v2056
      %v2139 = vadd.f32 %v1911, %v2061
      %v2140 = vadd.f32 %v1912, %v2064
      %v2141 = vadd.f32 %v1913, %v2069
      %v2142 = vadd.f32 %v1914, %v2072
      %v2143 = vadd.f32 %v1915, %v2077
      %v2144 = vadd.f32 %v1916, %v2080
      %v2145 = vadd.f32 %v1917, %v2085
      %v2146 = vadd.f32 %v1918, %v2088
      %v2147 = vadd.f32 %v1919, %v2093
      %v2148 = vadd.f32 %v1920, %v2096
      %v2149 = vadd.f32 %v1921, %v2101
      %v2150 = vadd.f32 %v1922, %v2104
      %v2151 = vadd.f32 %v1923, %v2109
      %v2152 = vadd.f32 %v1924, %v2112
      %v2153 = vadd.f32 %v1925, %v2117
      %v2154 = vadd.f32 %v1926, %v2120
      %v2155 = vld [vmem:[%s233] sm:$0xe]
      %v2156 = vld [vmem:[%s233 + $0xc] sm:$0xe]
      %v2157 = vld [vmem:[%s233 + $0x18] sm:$0xe]
      %v2158 = vld [vmem:[%s233 + $0x24] sm:$0xe]
      %v2159 = vld [vmem:[%s233 + $0x30] sm:$0xe]
      %v2160 = vld [vmem:[%s233 + $0x3c] sm:$0xe]
      %v2161 = vld [vmem:[%s233 + $0x48] sm:$0xe]
      %v2162 = vld [vmem:[%s233 + $0x54] sm:$0xe]
      %v2163 = vld [vmem:[%s233 + $0x60] sm:$0xe]
      %v2164 = vld [vmem:[%s233 + $0x6c] sm:$0xe]
      %v2165 = vld [vmem:[%s233 + $0x78] sm:$0xe]
      %v2166 = vld [vmem:[%s233 + $0x84] sm:$0xe]
      %v2167 = vld [vmem:[%s233 + $0x90] sm:$0xe]
      %v2168 = vld [vmem:[%s233 + $0x9c] sm:$0xe]
      %v2169 = vld [vmem:[%s233 + $0xa8] sm:$0xe]
      %v2170 = vld [vmem:[%s233 + $0xb4] sm:$0xe]
      %v2171 = vld [vmem:[%s233 + $0xc0] sm:$0xe]
      %v2172 = vld [vmem:[%s233 + $0xcc] sm:$0xe]
      %vm2221 = vcmask 1042432
      %vm2222 = vcmask 1046532
      %vm2223 = vmor %vm2221, %vm2222
      %v2224 = vrot.slane %v2155, 5
      %v2225 = vrot.slane %v2224, 4
      %v2226 = vrot.slane %v965, 5
      %v2227 = vsel %vm2223, %v2225, %v2226
      %v2228 = vrot.slane %v2226, 4
      %v2229 = vrot.slane %v966, 5
      %v2230 = vsel %vm2223, %v2228, %v2229
      %v2231 = vrot.slane %v2156, 5
      %v2232 = vrot.slane %v2231, 4
      %v2233 = vrot.slane %v968, 5
      %v2234 = vsel %vm2223, %v2232, %v2233
      %v2235 = vrot.slane %v2233, 4
      %v2236 = vrot.slane %v969, 5
      %v2237 = vsel %vm2223, %v2235, %v2236
      %v2238 = vrot.slane %v2157, 5
      %v2239 = vrot.slane %v2238, 4
      %v2240 = vrot.slane %v971, 5
      %v2241 = vsel %vm2223, %v2239, %v2240
      %v2242 = vrot.slane %v2240, 4
      %v2243 = vrot.slane %v972, 5
      %v2244 = vsel %vm2223, %v2242, %v2243
      %v2245 = vrot.slane %v2158, 5
      %v2246 = vrot.slane %v2245, 4
      %v2247 = vrot.slane %v974, 5
      %v2248 = vsel %vm2223, %v2246, %v2247
      %v2249 = vrot.slane %v2247, 4
      %v2250 = vrot.slane %v975, 5
      %v2251 = vsel %vm2223, %v2249, %v2250
      %v2252 = vrot.slane %v2159, 5
      %v2253 = vrot.slane %v2252, 4
      %v2254 = vrot.slane %v977, 5
      %v2255 = vsel %vm2223, %v2253, %v2254
      %v2256 = vrot.slane %v2254, 4
      %v2257 = vrot.slane %v978, 5
      %v2258 = vsel %vm2223, %v2256, %v2257
      %v2259 = vrot.slane %v2160, 5
      %v2260 = vrot.slane %v2259, 4
      %v2261 = vrot.slane %v980, 5
      %v2262 = vsel %vm2223, %v2260, %v2261
      %v2263 = vrot.slane %v2261, 4
      %v2264 = vrot.slane %v981, 5
      %v2265 = vsel %vm2223, %v2263, %v2264
      %v2266 = vrot.slane %v2161, 5
      %v2267 = vrot.slane %v2266, 4
      %v2268 = vrot.slane %v983, 5
      %v2269 = vsel %vm2223, %v2267, %v2268
      %v2270 = vrot.slane %v2268, 4
      %v2271 = vrot.slane %v984, 5
      %v2272 = vsel %vm2223, %v2270, %v2271
      %v2273 = vrot.slane %v2162, 5
      %v2274 = vrot.slane %v2273, 4
      %v2275 = vrot.slane %v986, 5
      %v2276 = vsel %vm2223, %v2274, %v2275
      %v2277 = vrot.slane %v2275, 4
      %v2278 = vrot.slane %v987, 5
      %v2279 = vsel %vm2223, %v2277, %v2278
      %v2280 = vrot.slane %v2163, 5
      %v2281 = vrot.slane %v2280, 4
      %v2282 = vrot.slane %v989, 5
      %v2283 = vsel %vm2223, %v2281, %v2282
      %v2284 = vrot.slane %v2282, 4
      %v2285 = vrot.slane %v990, 5
      %v2286 = vsel %vm2223, %v2284, %v2285
      %v2287 = vrot.slane %v2164, 5
      %v2288 = vrot.slane %v2287, 4
      %v2289 = vrot.slane %v992, 5
      %v2290 = vsel %vm2223, %v2288, %v2289
      %v2291 = vrot.slane %v2289, 4
      %v2292 = vrot.slane %v993, 5
      %v2293 = vsel %vm2223, %v2291, %v2292
      %v2294 = vrot.slane %v2165, 5
      %v2295 = vrot.slane %v2294, 4
      %v2296 = vrot.slane %v995, 5
      %v2297 = vsel %vm2223, %v2295, %v2296
      %v2298 = vrot.slane %v2296, 4
      %v2299 = vrot.slane %v996, 5
      %v2300 = vsel %vm2223, %v2298, %v2299
      %v2301 = vrot.slane %v2166, 5
      %v2302 = vrot.slane %v2301, 4
      %v2303 = vrot.slane %v998, 5
      %v2304 = vsel %vm2223, %v2302, %v2303
      %v2305 = vrot.slane %v2303, 4
      %v2306 = vrot.slane %v999, 5
      %v2307 = vsel %vm2223, %v2305, %v2306
      %v2308 = vrot.slane %v2167, 5
      %v2309 = vrot.slane %v2308, 4
      %v2310 = vrot.slane %v1001, 5
      %v2311 = vsel %vm2223, %v2309, %v2310
      %v2312 = vrot.slane %v2310, 4
      %v2313 = vrot.slane %v1002, 5
      %v2314 = vsel %vm2223, %v2312, %v2313
      %v2315 = vrot.slane %v2168, 5
      %v2316 = vrot.slane %v2315, 4
      %v2317 = vrot.slane %v1004, 5
      %v2318 = vsel %vm2223, %v2316, %v2317
      %v2319 = vrot.slane %v2317, 4
      %v2320 = vrot.slane %v1005, 5
      %v2321 = vsel %vm2223, %v2319, %v2320
      %v2322 = vrot.slane %v2169, 5
      %v2323 = vrot.slane %v2322, 4
      %v2324 = vrot.slane %v1007, 5
      %v2325 = vsel %vm2223, %v2323, %v2324
      %v2326 = vrot.slane %v2324, 4
      %v2327 = vrot.slane %v1008, 5
      %v2328 = vsel %vm2223, %v2326, %v2327
      %v2329 = vrot.slane %v2170, 5
      %v2330 = vrot.slane %v2329, 4
      %v2331 = vrot.slane %v1010, 5
      %v2332 = vsel %vm2223, %v2330, %v2331
      %v2333 = vrot.slane %v2331, 4
      %v2334 = vrot.slane %v1011, 5
      %v2335 = vsel %vm2223, %v2333, %v2334
      %s2336 = scalar_lea.vmem %s237, 8
      %v2337 = vld [vmem:[%s2336] sm:$0xf]
      %v2338 = vunpack.c.l.b16 %v2227
      %v2339 = vunpack.c.l.b16 %v2230
      %v2340 = vunpack.c.l.b16 %v2234
      %v2341 = vunpack.c.l.b16 %v2237
      %v2342 = vunpack.c.l.b16 %v2241
      %v2343 = vunpack.c.l.b16 %v2244
      %v2344 = vunpack.c.l.b16 %v2248
      %v2345 = vunpack.c.l.b16 %v2251
      %v2346 = vunpack.c.l.b16 %v2255
      %v2347 = vunpack.c.l.b16 %v2258
      %v2348 = vunpack.c.l.b16 %v2262
      %v2349 = vunpack.c.l.b16 %v2265
      %v2350 = vunpack.c.l.b16 %v2269
      %v2351 = vunpack.c.l.b16 %v2272
      %v2352 = vunpack.c.l.b16 %v2276
      %v2353 = vunpack.c.l.b16 %v2279
      %v2354 = vunpack.c.l.b16 %v2283
      %v2355 = vunpack.c.l.b16 %v2286
      %v2356 = vunpack.c.l.b16 %v2290
      %v2357 = vunpack.c.l.b16 %v2293
      %v2358 = vunpack.c.l.b16 %v2297
      %v2359 = vunpack.c.l.b16 %v2300
      %v2360 = vunpack.c.l.b16 %v2304
      %v2361 = vunpack.c.l.b16 %v2307
      %v2362 = vunpack.c.l.b16 %v2311
      %v2363 = vunpack.c.l.b16 %v2314
      %v2364 = vunpack.c.l.b16 %v2318
      %v2365 = vunpack.c.l.b16 %v2321
      %v2366 = vunpack.c.l.b16 %v2325
      %v2367 = vunpack.c.l.b16 %v2328
      %v2368 = vunpack.c.l.b16 %v2332
      %v2369 = vunpack.c.l.b16 %v2335
      %v2370 = vpack.c.b16 %v2339, %v2338
      %v2371 = vpack.c.b16 %v2341, %v2340
      %v2372 = vpack.c.b16 %v2343, %v2342
      %v2373 = vpack.c.b16 %v2345, %v2344
      %v2374 = vpack.c.b16 %v2347, %v2346
      %v2375 = vpack.c.b16 %v2349, %v2348
      %v2376 = vpack.c.b16 %v2351, %v2350
      %v2377 = vpack.c.b16 %v2353, %v2352
      %v2378 = vpack.c.b16 %v2355, %v2354
      %v2379 = vpack.c.b16 %v2357, %v2356
      %v2380 = vpack.c.b16 %v2359, %v2358
      %v2381 = vpack.c.b16 %v2361, %v2360
      %v2382 = vpack.c.b16 %v2363, %v2362
      %v2383 = vpack.c.b16 %v2365, %v2364
      %v2384 = vpack.c.b16 %v2367, %v2366
      %v2385 = vpack.c.b16 %v2369, %v2368
      %v2387 = vsel %vm372, %v2370, 0
      %v2390 = vsel %vm372, %v2371, 0
      %v2393 = vsel %vm372, %v2372, 0
      %v2396 = vsel %vm372, %v2373, 0
      %v2399 = vsel %vm372, %v2374, 0
      %v2402 = vsel %vm372, %v2375, 0
      %v2405 = vsel %vm372, %v2376, 0
      %v2408 = vsel %vm372, %v2377, 0
      %v2411 = vsel %vm372, %v2378, 0
      %v2414 = vsel %vm372, %v2379, 0
      %v2417 = vsel %vm372, %v2380, 0
      %v2420 = vsel %vm372, %v2381, 0
      %v2423 = vsel %vm372, %v2382, 0
      %v2426 = vsel %vm372, %v2383, 0
      %v2429 = vsel %vm372, %v2384, 0
      %v2432 = vsel %vm372, %v2385, 0
      %v2435 = vsel %vm421, %v2337, 0
      %2437 = vmatprep.subr.bf16.mxu0 0
      %2438 = vmatpush1.bf16.msra.mxu0 0
      %2439 = vmatprep.subr.bf16.mxu0 0
      %2440 = vmatpush1.bf16.msra.mxu0 0
      %2441 = vmatprep.subr.bf16.mxu0 0
      %2442 = vmatpush1.bf16.msra.mxu0 0
      %2443 = vmatprep.subr.bf16.mxu0 0
      %2444 = vmatpush1.bf16.msra.mxu0 0
      %2445 = vmatprep.subr.bf16.mxu0 0
      %2446 = vmatpush1.bf16.msra.mxu0 0
      %2447 = vmatprep.subr.bf16.mxu0 0
      %2448 = vmatpush1.bf16.msra.mxu0 0
      %2449 = vmatprep.subr.bf16.mxu0 0
      %2450 = vmatpush1.bf16.msra.mxu0 0
      %2451 = vmatprep.subr.bf16.mxu0 0
      %2452 = vmatpush1.bf16.msra.mxu0 %v2435
      %2453 = vmatprep.subr.bf16.mxu0 0
      %2454 = vmatpush2.bf16.msra.mxu0 0
      %2455 = vmatprep.subr.bf16.mxu0 0
      %2456 = vmatpush2.bf16.msra.mxu0 0
      %2457 = vmatprep.subr.bf16.mxu0 0
      %2458 = vmatpush2.bf16.msra.mxu0 0
      %2459 = vmatprep.subr.bf16.mxu0 0
      %2460 = vmatpush2.bf16.msra.mxu0 0
      %2461 = vmatprep.subr.bf16.mxu0 0
      %2462 = vmatpush2.bf16.msra.mxu0 0
      %2463 = vmatprep.subr.bf16.mxu0 0
      %2464 = vmatpush2.bf16.msra.mxu0 0
      %2465 = vmatprep.subr.bf16.mxu0 0
      %2466 = vmatpush2.bf16.msra.mxu0 0
      %2467 = vmatprep.subr.bf16.mxu0 0
      %2468 = vmatpush2.bf16.msra.mxu0 0
      %2469 = vmatprep.mubr.bf16.mxu0 0
      %2470 = vmatmul.mubr.bf16.gmra.mxu0 %v2387
      %v2471 = vpop.f32.mrf.mxu0
      %v2472 = vadd.f32 0.0, %v2471
      %v2473 = vpop.f32.mrf.mxu0
      %v2474 = vpop.f32.mrf.mxu0
      %v2475 = vadd.f32 0.0, %v2474
      %v2476 = vpop.f32.mrf.mxu0
      %2477 = vmatprep.mubr.bf16.mxu0 0
      %2478 = vmatmul.mubr.bf16.gmra.mxu0 %v2390
      %v2479 = vpop.f32.mrf.mxu0
      %v2480 = vadd.f32 0.0, %v2479
      %v2481 = vpop.f32.mrf.mxu0
      %v2482 = vpop.f32.mrf.mxu0
      %v2483 = vadd.f32 0.0, %v2482
      %v2484 = vpop.f32.mrf.mxu0
      %2485 = vmatprep.mubr.bf16.mxu0 0
      %2486 = vmatmul.mubr.bf16.gmra.mxu0 %v2393
      %v2487 = vpop.f32.mrf.mxu0
      %v2488 = vadd.f32 0.0, %v2487
      %v2489 = vpop.f32.mrf.mxu0
      %v2490 = vpop.f32.mrf.mxu0
      %v2491 = vadd.f32 0.0, %v2490
      %v2492 = vpop.f32.mrf.mxu0
      %2493 = vmatprep.mubr.bf16.mxu0 0
      %2494 = vmatmul.mubr.bf16.gmra.mxu0 %v2396
      %v2495 = vpop.f32.mrf.mxu0
      %v2496 = vadd.f32 0.0, %v2495
      %v2497 = vpop.f32.mrf.mxu0
      %v2498 = vpop.f32.mrf.mxu0
      %v2499 = vadd.f32 0.0, %v2498
      %v2500 = vpop.f32.mrf.mxu0
      %2501 = vmatprep.mubr.bf16.mxu0 0
      %2502 = vmatmul.mubr.bf16.gmra.mxu0 %v2399
      %v2503 = vpop.f32.mrf.mxu0
      %v2504 = vadd.f32 0.0, %v2503
      %v2505 = vpop.f32.mrf.mxu0
      %v2506 = vpop.f32.mrf.mxu0
      %v2507 = vadd.f32 0.0, %v2506
      %v2508 = vpop.f32.mrf.mxu0
      %2509 = vmatprep.mubr.bf16.mxu0 0
      %2510 = vmatmul.mubr.bf16.gmra.mxu0 %v2402
      %v2511 = vpop.f32.mrf.mxu0
      %v2512 = vadd.f32 0.0, %v2511
      %v2513 = vpop.f32.mrf.mxu0
      %v2514 = vpop.f32.mrf.mxu0
      %v2515 = vadd.f32 0.0, %v2514
      %v2516 = vpop.f32.mrf.mxu0
      %2517 = vmatprep.mubr.bf16.mxu0 0
      %2518 = vmatmul.mubr.bf16.gmra.mxu0 %v2405
      %v2519 = vpop.f32.mrf.mxu0
      %v2520 = vadd.f32 0.0, %v2519
      %v2521 = vpop.f32.mrf.mxu0
      %v2522 = vpop.f32.mrf.mxu0
      %v2523 = vadd.f32 0.0, %v2522
      %v2524 = vpop.f32.mrf.mxu0
      %2525 = vmatprep.mubr.bf16.mxu0 0
      %2526 = vmatmul.mubr.bf16.gmra.mxu0 %v2408
      %v2527 = vpop.f32.mrf.mxu0
      %v2528 = vadd.f32 0.0, %v2527
      %v2529 = vpop.f32.mrf.mxu0
      %v2530 = vpop.f32.mrf.mxu0
      %v2531 = vadd.f32 0.0, %v2530
      %v2532 = vpop.f32.mrf.mxu0
      %2533 = vmatprep.mubr.bf16.mxu0 0
      %2534 = vmatmul.mubr.bf16.gmra.mxu0 %v2411
      %v2535 = vpop.f32.mrf.mxu0
      %v2536 = vadd.f32 0.0, %v2535
      %v2537 = vpop.f32.mrf.mxu0
      %v2538 = vpop.f32.mrf.mxu0
      %v2539 = vadd.f32 0.0, %v2538
      %v2540 = vpop.f32.mrf.mxu0
      %2541 = vmatprep.mubr.bf16.mxu0 0
      %2542 = vmatmul.mubr.bf16.gmra.mxu0 %v2414
      %v2543 = vpop.f32.mrf.mxu0
      %v2544 = vadd.f32 0.0, %v2543
      %v2545 = vpop.f32.mrf.mxu0
      %v2546 = vpop.f32.mrf.mxu0
      %v2547 = vadd.f32 0.0, %v2546
      %v2548 = vpop.f32.mrf.mxu0
      %2549 = vmatprep.mubr.bf16.mxu0 0
      %2550 = vmatmul.mubr.bf16.gmra.mxu0 %v2417
      %v2551 = vpop.f32.mrf.mxu0
      %v2552 = vadd.f32 0.0, %v2551
      %v2553 = vpop.f32.mrf.mxu0
      %v2554 = vpop.f32.mrf.mxu0
      %v2555 = vadd.f32 0.0, %v2554
      %v2556 = vpop.f32.mrf.mxu0
      %2557 = vmatprep.mubr.bf16.mxu0 0
      %2558 = vmatmul.mubr.bf16.gmra.mxu0 %v2420
      %v2559 = vpop.f32.mrf.mxu0
      %v2560 = vadd.f32 0.0, %v2559
      %v2561 = vpop.f32.mrf.mxu0
      %v2562 = vpop.f32.mrf.mxu0
      %v2563 = vadd.f32 0.0, %v2562
      %v2564 = vpop.f32.mrf.mxu0
      %2565 = vmatprep.mubr.bf16.mxu0 0
      %2566 = vmatmul.mubr.bf16.gmra.mxu0 %v2423
      %v2567 = vpop.f32.mrf.mxu0
      %v2568 = vadd.f32 0.0, %v2567
      %v2569 = vpop.f32.mrf.mxu0
      %v2570 = vpop.f32.mrf.mxu0
      %v2571 = vadd.f32 0.0, %v2570
      %v2572 = vpop.f32.mrf.mxu0
      %2573 = vmatprep.mubr.bf16.mxu0 0
      %2574 = vmatmul.mubr.bf16.gmra.mxu0 %v2426
      %v2575 = vpop.f32.mrf.mxu0
      %v2576 = vadd.f32 0.0, %v2575
      %v2577 = vpop.f32.mrf.mxu0
      %v2578 = vpop.f32.mrf.mxu0
      %v2579 = vadd.f32 0.0, %v2578
      %v2580 = vpop.f32.mrf.mxu0
      %2581 = vmatprep.mubr.bf16.mxu0 0
      %2582 = vmatmul.mubr.bf16.gmra.mxu0 %v2429
      %v2583 = vpop.f32.mrf.mxu0
      %v2584 = vadd.f32 0.0, %v2583
      %v2585 = vpop.f32.mrf.mxu0
      %v2586 = vpop.f32.mrf.mxu0
      %v2587 = vadd.f32 0.0, %v2586
      %v2588 = vpop.f32.mrf.mxu0
      %2589 = vmatprep.mubr.bf16.mxu0 0
      %2590 = vmatmul.mubr.bf16.gmra.mxu0 %v2432
      %v2591 = vpop.f32.mrf.mxu0
      %v2592 = vadd.f32 0.0, %v2591
      %v2593 = vpop.f32.mrf.mxu0
      %v2594 = vpop.f32.mrf.mxu0
      %v2595 = vadd.f32 0.0, %v2594
      %v2596 = vpop.f32.mrf.mxu0
      %2597 = vdwg.mxu0
      %v2598 = vadd.f32 %v2123, %v2472
      %v2599 = vadd.f32 %v2124, %v2475
      %v2600 = vadd.f32 %v2125, %v2480
      %v2601 = vadd.f32 %v2126, %v2483
      %v2602 = vadd.f32 %v2127, %v2488
      %v2603 = vadd.f32 %v2128, %v2491
      %v2604 = vadd.f32 %v2129, %v2496
      %v2605 = vadd.f32 %v2130, %v2499
      %v2606 = vadd.f32 %v2131, %v2504
      %v2607 = vadd.f32 %v2132, %v2507
      %v2608 = vadd.f32 %v2133, %v2512
      %v2609 = vadd.f32 %v2134, %v2515
      %v2610 = vadd.f32 %v2135, %v2520
      %v2611 = vadd.f32 %v2136, %v2523
      %v2612 = vadd.f32 %v2137, %v2528
      %v2613 = vadd.f32 %v2138, %v2531
      %v2614 = vadd.f32 %v2139, %v2536
      %v2615 = vadd.f32 %v2140, %v2539
      %v2616 = vadd.f32 %v2141, %v2544
      %v2617 = vadd.f32 %v2142, %v2547
      %v2618 = vadd.f32 %v2143, %v2552
      %v2619 = vadd.f32 %v2144, %v2555
      %v2620 = vadd.f32 %v2145, %v2560
      %v2621 = vadd.f32 %v2146, %v2563
      %v2622 = vadd.f32 %v2147, %v2568
      %v2623 = vadd.f32 %v2148, %v2571
      %v2624 = vadd.f32 %v2149, %v2576
      %v2625 = vadd.f32 %v2150, %v2579
      %v2626 = vadd.f32 %v2151, %v2584
      %v2627 = vadd.f32 %v2152, %v2587
      %v2628 = vadd.f32 %v2153, %v2592
      %v2629 = vadd.f32 %v2154, %v2595
      %v2633 = vrot.slane %v2171, 5
      %v2634 = vrot.slane %v2633, 4
      %v2635 = vrot.slane %v1013, 5
      %v2636 = vsel %vm2223, %v2634, %v2635
      %v2637 = vrot.slane %v2635, 4
      %v2638 = vrot.slane %v1014, 5
      %v2639 = vsel %vm2223, %v2637, %v2638
      %s2640 = scalar_lea.vmem %s237, 20
      %v2641 = vld [vmem:[%s2640] sm:$0xf]
      %v2642 = vunpack.c.l.b16 %v2636
      %v2643 = vunpack.c.l.b16 %v2639
      %v2644 = vpack.c.b16 %v2643, %v2642
      %v2646 = vsel %vm372, %v2644, 0
      %v2649 = vsel %vm421, %v2641, 0
      %2651 = vmatprep.subr.bf16.mxu0 0
      %2652 = vmatpush1.bf16.msra.mxu0 0
      %2653 = vmatprep.subr.bf16.mxu0 0
      %2654 = vmatpush1.bf16.msra.mxu0 0
      %2655 = vmatprep.subr.bf16.mxu0 0
      %2656 = vmatpush1.bf16.msra.mxu0 0
      %2657 = vmatprep.subr.bf16.mxu0 0
      %2658 = vmatpush1.bf16.msra.mxu0 0
      %2659 = vmatprep.subr.bf16.mxu0 0
      %2660 = vmatpush1.bf16.msra.mxu0 0
      %2661 = vmatprep.subr.bf16.mxu0 0
      %2662 = vmatpush1.bf16.msra.mxu0 0
      %2663 = vmatprep.subr.bf16.mxu0 0
      %2664 = vmatpush1.bf16.msra.mxu0 0
      %2665 = vmatprep.subr.bf16.mxu0 0
      %2666 = vmatpush1.bf16.msra.mxu0 %v2649
      %2667 = vmatprep.subr.bf16.mxu0 0
      %2668 = vmatpush2.bf16.msra.mxu0 0
      %2669 = vmatprep.subr.bf16.mxu0 0
      %2670 = vmatpush2.bf16.msra.mxu0 0
      %2671 = vmatprep.subr.bf16.mxu0 0
      %2672 = vmatpush2.bf16.msra.mxu0 0
      %2673 = vmatprep.subr.bf16.mxu0 0
      %2674 = vmatpush2.bf16.msra.mxu0 0
      %2675 = vmatprep.subr.bf16.mxu0 0
      %2676 = vmatpush2.bf16.msra.mxu0 0
      %2677 = vmatprep.subr.bf16.mxu0 0
      %2678 = vmatpush2.bf16.msra.mxu0 0
      %2679 = vmatprep.subr.bf16.mxu0 0
      %2680 = vmatpush2.bf16.msra.mxu0 0
      %2681 = vmatprep.subr.bf16.mxu0 0
      %2682 = vmatpush2.bf16.msra.mxu0 0
      %2683 = vmatprep.mubr.bf16.mxu0 0
      %2684 = vmatmul.mubr.bf16.gmra.mxu0 %v2390
      %v2685 = vpop.f32.mrf.mxu0
      %v2686 = vadd.f32 0.0, %v2685
      %v2687 = vpop.f32.mrf.mxu0
      %v2688 = vpop.f32.mrf.mxu0
      %v2689 = vadd.f32 0.0, %v2688
      %v2690 = vpop.f32.mrf.mxu0
      %2691 = vmatprep.mubr.bf16.mxu0 0
      %2692 = vmatmul.mubr.bf16.gmra.mxu0 %v2393
      %v2693 = vpop.f32.mrf.mxu0
      %v2694 = vadd.f32 0.0, %v2693
      %v2695 = vpop.f32.mrf.mxu0
      %v2696 = vpop.f32.mrf.mxu0
      %v2697 = vadd.f32 0.0, %v2696
      %v2698 = vpop.f32.mrf.mxu0
      %2699 = vmatprep.mubr.bf16.mxu0 0
      %2700 = vmatmul.mubr.bf16.gmra.mxu0 %v2396
      %v2701 = vpop.f32.mrf.mxu0
      %v2702 = vadd.f32 0.0, %v2701
      %v2703 = vpop.f32.mrf.mxu0
      %v2704 = vpop.f32.mrf.mxu0
      %v2705 = vadd.f32 0.0, %v2704
      %v2706 = vpop.f32.mrf.mxu0
      %2707 = vmatprep.mubr.bf16.mxu0 0
      %2708 = vmatmul.mubr.bf16.gmra.mxu0 %v2399
      %v2709 = vpop.f32.mrf.mxu0
      %v2710 = vadd.f32 0.0, %v2709
      %v2711 = vpop.f32.mrf.mxu0
      %v2712 = vpop.f32.mrf.mxu0
      %v2713 = vadd.f32 0.0, %v2712
      %v2714 = vpop.f32.mrf.mxu0
      %2715 = vmatprep.mubr.bf16.mxu0 0
      %2716 = vmatmul.mubr.bf16.gmra.mxu0 %v2402
      %v2717 = vpop.f32.mrf.mxu0
      %v2718 = vadd.f32 0.0, %v2717
      %v2719 = vpop.f32.mrf.mxu0
      %v2720 = vpop.f32.mrf.mxu0
      %v2721 = vadd.f32 0.0, %v2720
      %v2722 = vpop.f32.mrf.mxu0
      %2723 = vmatprep.mubr.bf16.mxu0 0
      %2724 = vmatmul.mubr.bf16.gmra.mxu0 %v2405
      %v2725 = vpop.f32.mrf.mxu0
      %v2726 = vadd.f32 0.0, %v2725
      %v2727 = vpop.f32.mrf.mxu0
      %v2728 = vpop.f32.mrf.mxu0
      %v2729 = vadd.f32 0.0, %v2728
      %v2730 = vpop.f32.mrf.mxu0
      %2731 = vmatprep.mubr.bf16.mxu0 0
      %2732 = vmatmul.mubr.bf16.gmra.mxu0 %v2408
      %v2733 = vpop.f32.mrf.mxu0
      %v2734 = vadd.f32 0.0, %v2733
      %v2735 = vpop.f32.mrf.mxu0
      %v2736 = vpop.f32.mrf.mxu0
      %v2737 = vadd.f32 0.0, %v2736
      %v2738 = vpop.f32.mrf.mxu0
      %2739 = vmatprep.mubr.bf16.mxu0 0
      %2740 = vmatmul.mubr.bf16.gmra.mxu0 %v2411
      %v2741 = vpop.f32.mrf.mxu0
      %v2742 = vadd.f32 0.0, %v2741
      %v2743 = vpop.f32.mrf.mxu0
      %v2744 = vpop.f32.mrf.mxu0
      %v2745 = vadd.f32 0.0, %v2744
      %v2746 = vpop.f32.mrf.mxu0
      %2747 = vmatprep.mubr.bf16.mxu0 0
      %2748 = vmatmul.mubr.bf16.gmra.mxu0 %v2414
      %v2749 = vpop.f32.mrf.mxu0
      %v2750 = vadd.f32 0.0, %v2749
      %v2751 = vpop.f32.mrf.mxu0
      %v2752 = vpop.f32.mrf.mxu0
      %v2753 = vadd.f32 0.0, %v2752
      %v2754 = vpop.f32.mrf.mxu0
      %2755 = vmatprep.mubr.bf16.mxu0 0
      %2756 = vmatmul.mubr.bf16.gmra.mxu0 %v2417
      %v2757 = vpop.f32.mrf.mxu0
      %v2758 = vadd.f32 0.0, %v2757
      %v2759 = vpop.f32.mrf.mxu0
      %v2760 = vpop.f32.mrf.mxu0
      %v2761 = vadd.f32 0.0, %v2760
      %v2762 = vpop.f32.mrf.mxu0
      %2763 = vmatprep.mubr.bf16.mxu0 0
      %2764 = vmatmul.mubr.bf16.gmra.mxu0 %v2420
      %v2765 = vpop.f32.mrf.mxu0
      %v2766 = vadd.f32 0.0, %v2765
      %v2767 = vpop.f32.mrf.mxu0
      %v2768 = vpop.f32.mrf.mxu0
      %v2769 = vadd.f32 0.0, %v2768
      %v2770 = vpop.f32.mrf.mxu0
      %2771 = vmatprep.mubr.bf16.mxu0 0
      %2772 = vmatmul.mubr.bf16.gmra.mxu0 %v2423
      %v2773 = vpop.f32.mrf.mxu0
      %v2774 = vadd.f32 0.0, %v2773
      %v2775 = vpop.f32.mrf.mxu0
      %v2776 = vpop.f32.mrf.mxu0
      %v2777 = vadd.f32 0.0, %v2776
      %v2778 = vpop.f32.mrf.mxu0
      %2779 = vmatprep.mubr.bf16.mxu0 0
      %2780 = vmatmul.mubr.bf16.gmra.mxu0 %v2426
      %v2781 = vpop.f32.mrf.mxu0
      %v2782 = vadd.f32 0.0, %v2781
      %v2783 = vpop.f32.mrf.mxu0
      %v2784 = vpop.f32.mrf.mxu0
      %v2785 = vadd.f32 0.0, %v2784
      %v2786 = vpop.f32.mrf.mxu0
      %2787 = vmatprep.mubr.bf16.mxu0 0
      %2788 = vmatmul.mubr.bf16.gmra.mxu0 %v2429
      %v2789 = vpop.f32.mrf.mxu0
      %v2790 = vadd.f32 0.0, %v2789
      %v2791 = vpop.f32.mrf.mxu0
      %v2792 = vpop.f32.mrf.mxu0
      %v2793 = vadd.f32 0.0, %v2792
      %v2794 = vpop.f32.mrf.mxu0
      %2795 = vmatprep.mubr.bf16.mxu0 0
      %2796 = vmatmul.mubr.bf16.gmra.mxu0 %v2432
      %v2797 = vpop.f32.mrf.mxu0
      %v2798 = vadd.f32 0.0, %v2797
      %v2799 = vpop.f32.mrf.mxu0
      %v2800 = vpop.f32.mrf.mxu0
      %v2801 = vadd.f32 0.0, %v2800
      %v2802 = vpop.f32.mrf.mxu0
      %2803 = vmatprep.mubr.bf16.mxu0 0
      %2804 = vmatmul.mubr.bf16.gmra.mxu0 %v2646
      %v2805 = vpop.f32.mrf.mxu0
      %v2806 = vadd.f32 0.0, %v2805
      %v2807 = vpop.f32.mrf.mxu0
      %v2808 = vpop.f32.mrf.mxu0
      %v2809 = vadd.f32 0.0, %v2808
      %v2810 = vpop.f32.mrf.mxu0
      %2811 = vdwg.mxu0
      %v2812 = vadd.f32 %v2598, %v2686
      %v2813 = vadd.f32 %v2599, %v2689
      %v2814 = vadd.f32 %v2600, %v2694
      %v2815 = vadd.f32 %v2601, %v2697
      %v2816 = vadd.f32 %v2602, %v2702
      %v2817 = vadd.f32 %v2603, %v2705
      %v2818 = vadd.f32 %v2604, %v2710
      %v2819 = vadd.f32 %v2605, %v2713
      %v2820 = vadd.f32 %v2606, %v2718
      %v2821 = vadd.f32 %v2607, %v2721
      %v2822 = vadd.f32 %v2608, %v2726
      %v2823 = vadd.f32 %v2609, %v2729
      %v2824 = vadd.f32 %v2610, %v2734
      %v2825 = vadd.f32 %v2611, %v2737
      %v2826 = vadd.f32 %v2612, %v2742
      %v2827 = vadd.f32 %v2613, %v2745
      %v2828 = vadd.f32 %v2614, %v2750
      %v2829 = vadd.f32 %v2615, %v2753
      %v2830 = vadd.f32 %v2616, %v2758
      %v2831 = vadd.f32 %v2617, %v2761
      %v2832 = vadd.f32 %v2618, %v2766
      %v2833 = vadd.f32 %v2619, %v2769
      %v2834 = vadd.f32 %v2620, %v2774
      %v2835 = vadd.f32 %v2621, %v2777
      %v2836 = vadd.f32 %v2622, %v2782
      %v2837 = vadd.f32 %v2623, %v2785
      %v2838 = vadd.f32 %v2624, %v2790
      %v2839 = vadd.f32 %v2625, %v2793
      %v2840 = vadd.f32 %v2626, %v2798
      %v2841 = vadd.f32 %v2627, %v2801
      %v2842 = vadd.f32 %v2628, %v2806
      %v2843 = vadd.f32 %v2629, %v2809
      %v2847 = vrot.slane %v2172, 5
      %v2848 = vrot.slane %v2847, 4
      %v2849 = vrot.slane %v1016, 5
      %v2850 = vsel %vm2223, %v2848, %v2849
      %v2851 = vrot.slane %v2849, 4
      %v2852 = vrot.slane %v1017, 5
      %v2853 = vsel %vm2223, %v2851, %v2852
      %s2854 = scalar_lea.vmem %s237, 32
      %v2855 = vld [vmem:[%s2854] sm:$0xf]
      %v2856 = vunpack.c.l.b16 %v2850
      %v2857 = vunpack.c.l.b16 %v2853
      %v2858 = vpack.c.b16 %v2857, %v2856
      %v2860 = vsel %vm372, %v2858, 0
      %v2863 = vsel %vm421, %v2855, 0
      %2865 = vmatprep.subr.bf16.mxu0 0
      %2866 = vmatpush1.bf16.msra.mxu0 0
      %2867 = vmatprep.subr.bf16.mxu0 0
      %2868 = vmatpush1.bf16.msra.mxu0 0
      %2869 = vmatprep.subr.bf16.mxu0 0
      %2870 = vmatpush1.bf16.msra.mxu0 0
      %2871 = vmatprep.subr.bf16.mxu0 0
      %2872 = vmatpush1.bf16.msra.mxu0 0
      %2873 = vmatprep.subr.bf16.mxu0 0
      %2874 = vmatpush1.bf16.msra.mxu0 0
      %2875 = vmatprep.subr.bf16.mxu0 0
      %2876 = vmatpush1.bf16.msra.mxu0 0
      %2877 = vmatprep.subr.bf16.mxu0 0
      %2878 = vmatpush1.bf16.msra.mxu0 0
      %2879 = vmatprep.subr.bf16.mxu0 0
      %2880 = vmatpush1.bf16.msra.mxu0 %v2863
      %2881 = vmatprep.subr.bf16.mxu0 0
      %2882 = vmatpush2.bf16.msra.mxu0 0
      %2883 = vmatprep.subr.bf16.mxu0 0
      %2884 = vmatpush2.bf16.msra.mxu0 0
      %2885 = vmatprep.subr.bf16.mxu0 0
      %2886 = vmatpush2.bf16.msra.mxu0 0
      %2887 = vmatprep.subr.bf16.mxu0 0
      %2888 = vmatpush2.bf16.msra.mxu0 0
      %2889 = vmatprep.subr.bf16.mxu0 0
      %2890 = vmatpush2.bf16.msra.mxu0 0
      %2891 = vmatprep.subr.bf16.mxu0 0
      %2892 = vmatpush2.bf16.msra.mxu0 0
      %2893 = vmatprep.subr.bf16.mxu0 0
      %2894 = vmatpush2.bf16.msra.mxu0 0
      %2895 = vmatprep.subr.bf16.mxu0 0
      %2896 = vmatpush2.bf16.msra.mxu0 0
      %2897 = vmatprep.mubr.bf16.mxu0 0
      %2898 = vmatmul.mubr.bf16.gmra.mxu0 %v2393
      %v2899 = vpop.f32.mrf.mxu0
      %v2900 = vadd.f32 0.0, %v2899
      %v2901 = vpop.f32.mrf.mxu0
      %v2902 = vpop.f32.mrf.mxu0
      %v2903 = vadd.f32 0.0, %v2902
      %v2904 = vpop.f32.mrf.mxu0
      %2905 = vmatprep.mubr.bf16.mxu0 0
      %2906 = vmatmul.mubr.bf16.gmra.mxu0 %v2396
      %v2907 = vpop.f32.mrf.mxu0
      %v2908 = vadd.f32 0.0, %v2907
      %v2909 = vpop.f32.mrf.mxu0
      %v2910 = vpop.f32.mrf.mxu0
      %v2911 = vadd.f32 0.0, %v2910
      %v2912 = vpop.f32.mrf.mxu0
      %2913 = vmatprep.mubr.bf16.mxu0 0
      %2914 = vmatmul.mubr.bf16.gmra.mxu0 %v2399
      %v2915 = vpop.f32.mrf.mxu0
      %v2916 = vadd.f32 0.0, %v2915
      %v2917 = vpop.f32.mrf.mxu0
      %v2918 = vpop.f32.mrf.mxu0
      %v2919 = vadd.f32 0.0, %v2918
      %v2920 = vpop.f32.mrf.mxu0
      %2921 = vmatprep.mubr.bf16.mxu0 0
      %2922 = vmatmul.mubr.bf16.gmra.mxu0 %v2402
      %v2923 = vpop.f32.mrf.mxu0
      %v2924 = vadd.f32 0.0, %v2923
      %v2925 = vpop.f32.mrf.mxu0
      %v2926 = vpop.f32.mrf.mxu0
      %v2927 = vadd.f32 0.0, %v2926
      %v2928 = vpop.f32.mrf.mxu0
      %2929 = vmatprep.mubr.bf16.mxu0 0
      %2930 = vmatmul.mubr.bf16.gmra.mxu0 %v2405
      %v2931 = vpop.f32.mrf.mxu0
      %v2932 = vadd.f32 0.0, %v2931
      %v2933 = vpop.f32.mrf.mxu0
      %v2934 = vpop.f32.mrf.mxu0
      %v2935 = vadd.f32 0.0, %v2934
      %v2936 = vpop.f32.mrf.mxu0
      %2937 = vmatprep.mubr.bf16.mxu0 0
      %2938 = vmatmul.mubr.bf16.gmra.mxu0 %v2408
      %v2939 = vpop.f32.mrf.mxu0
      %v2940 = vadd.f32 0.0, %v2939
      %v2941 = vpop.f32.mrf.mxu0
      %v2942 = vpop.f32.mrf.mxu0
      %v2943 = vadd.f32 0.0, %v2942
      %v2944 = vpop.f32.mrf.mxu0
      %2945 = vmatprep.mubr.bf16.mxu0 0
      %2946 = vmatmul.mubr.bf16.gmra.mxu0 %v2411
      %v2947 = vpop.f32.mrf.mxu0
      %v2948 = vadd.f32 0.0, %v2947
      %v2949 = vpop.f32.mrf.mxu0
      %v2950 = vpop.f32.mrf.mxu0
      %v2951 = vadd.f32 0.0, %v2950
      %v2952 = vpop.f32.mrf.mxu0
      %2953 = vmatprep.mubr.bf16.mxu0 0
      %2954 = vmatmul.mubr.bf16.gmra.mxu0 %v2414
      %v2955 = vpop.f32.mrf.mxu0
      %v2956 = vadd.f32 0.0, %v2955
      %v2957 = vpop.f32.mrf.mxu0
      %v2958 = vpop.f32.mrf.mxu0
      %v2959 = vadd.f32 0.0, %v2958
      %v2960 = vpop.f32.mrf.mxu0
      %2961 = vmatprep.mubr.bf16.mxu0 0
      %2962 = vmatmul.mubr.bf16.gmra.mxu0 %v2417
      %v2963 = vpop.f32.mrf.mxu0
      %v2964 = vadd.f32 0.0, %v2963
      %v2965 = vpop.f32.mrf.mxu0
      %v2966 = vpop.f32.mrf.mxu0
      %v2967 = vadd.f32 0.0, %v2966
      %v2968 = vpop.f32.mrf.mxu0
      %2969 = vmatprep.mubr.bf16.mxu0 0
      %2970 = vmatmul.mubr.bf16.gmra.mxu0 %v2420
      %v2971 = vpop.f32.mrf.mxu0
      %v2972 = vadd.f32 0.0, %v2971
      %v2973 = vpop.f32.mrf.mxu0
      %v2974 = vpop.f32.mrf.mxu0
      %v2975 = vadd.f32 0.0, %v2974
      %v2976 = vpop.f32.mrf.mxu0
      %2977 = vmatprep.mubr.bf16.mxu0 0
      %2978 = vmatmul.mubr.bf16.gmra.mxu0 %v2423
      %v2979 = vpop.f32.mrf.mxu0
      %v2980 = vadd.f32 0.0, %v2979
      %v2981 = vpop.f32.mrf.mxu0
      %v2982 = vpop.f32.mrf.mxu0
      %v2983 = vadd.f32 0.0, %v2982
      %v2984 = vpop.f32.mrf.mxu0
      %2985 = vmatprep.mubr.bf16.mxu0 0
      %2986 = vmatmul.mubr.bf16.gmra.mxu0 %v2426
      %v2987 = vpop.f32.mrf.mxu0
      %v2988 = vadd.f32 0.0, %v2987
      %v2989 = vpop.f32.mrf.mxu0
      %v2990 = vpop.f32.mrf.mxu0
      %v2991 = vadd.f32 0.0, %v2990
      %v2992 = vpop.f32.mrf.mxu0
      %2993 = vmatprep.mubr.bf16.mxu0 0
      %2994 = vmatmul.mubr.bf16.gmra.mxu0 %v2429
      %v2995 = vpop.f32.mrf.mxu0
      %v2996 = vadd.f32 0.0, %v2995
      %v2997 = vpop.f32.mrf.mxu0
      %v2998 = vpop.f32.mrf.mxu0
      %v2999 = vadd.f32 0.0, %v2998
      %v3000 = vpop.f32.mrf.mxu0
      %3001 = vmatprep.mubr.bf16.mxu0 0
      %3002 = vmatmul.mubr.bf16.gmra.mxu0 %v2432
      %v3003 = vpop.f32.mrf.mxu0
      %v3004 = vadd.f32 0.0, %v3003
      %v3005 = vpop.f32.mrf.mxu0
      %v3006 = vpop.f32.mrf.mxu0
      %v3007 = vadd.f32 0.0, %v3006
      %v3008 = vpop.f32.mrf.mxu0
      %3009 = vmatprep.mubr.bf16.mxu0 0
      %3010 = vmatmul.mubr.bf16.gmra.mxu0 %v2646
      %v3011 = vpop.f32.mrf.mxu0
      %v3012 = vadd.f32 0.0, %v3011
      %v3013 = vpop.f32.mrf.mxu0
      %v3014 = vpop.f32.mrf.mxu0
      %v3015 = vadd.f32 0.0, %v3014
      %v3016 = vpop.f32.mrf.mxu0
      %3017 = vmatprep.mubr.bf16.mxu0 0
      %3018 = vmatmul.mubr.bf16.gmra.mxu0 %v2860
      %v3019 = vpop.f32.mrf.mxu0
      %v3020 = vadd.f32 0.0, %v3019
      %v3021 = vpop.f32.mrf.mxu0
      %v3022 = vpop.f32.mrf.mxu0
      %v3023 = vadd.f32 0.0, %v3022
      %v3024 = vpop.f32.mrf.mxu0
      %3025 = vdwg.mxu0
      %v3026 = vadd.f32 %v2812, %v2900
      %v3027 = vadd.f32 %v2813, %v2903
      %v3028 = vadd.f32 %v2814, %v2908
      %v3029 = vadd.f32 %v2815, %v2911
      %v3030 = vadd.f32 %v2816, %v2916
      %v3031 = vadd.f32 %v2817, %v2919
      %v3032 = vadd.f32 %v2818, %v2924
      %v3033 = vadd.f32 %v2819, %v2927
      %v3034 = vadd.f32 %v2820, %v2932
      %v3035 = vadd.f32 %v2821, %v2935
      %v3036 = vadd.f32 %v2822, %v2940
      %v3037 = vadd.f32 %v2823, %v2943
      %v3038 = vadd.f32 %v2824, %v2948
      %v3039 = vadd.f32 %v2825, %v2951
      %v3040 = vadd.f32 %v2826, %v2956
      %v3041 = vadd.f32 %v2827, %v2959
      %v3042 = vadd.f32 %v2828, %v2964
      %v3043 = vadd.f32 %v2829, %v2967
      %v3044 = vadd.f32 %v2830, %v2972
      %v3045 = vadd.f32 %v2831, %v2975
      %v3046 = vadd.f32 %v2832, %v2980
      %v3047 = vadd.f32 %v2833, %v2983
      %v3048 = vadd.f32 %v2834, %v2988
      %v3049 = vadd.f32 %v2835, %v2991
      %v3050 = vadd.f32 %v2836, %v2996
      %v3051 = vadd.f32 %v2837, %v2999
      %v3052 = vadd.f32 %v2838, %v3004
      %v3053 = vadd.f32 %v2839, %v3007
      %v3054 = vadd.f32 %v2840, %v3012
      %v3055 = vadd.f32 %v2841, %v3015
      %v3056 = vadd.f32 %v2842, %v3020
      %v3057 = vadd.f32 %v2843, %v3023
      %3058 = vst [vmem:[%s245] sm:$0xff] %v3026
      %3059 = vst [vmem:[%s245 + $0x8] sm:$0xff] %v3027
      %3060 = vst [vmem:[%s245 + $0x10] sm:$0xff] %v3028
      %3061 = vst [vmem:[%s245 + $0x18] sm:$0xff] %v3029
      %3062 = vst [vmem:[%s245 + $0x20] sm:$0xff] %v3030
      %3063 = vst [vmem:[%s245 + $0x28] sm:$0xff] %v3031
      %3064 = vst [vmem:[%s245 + $0x30] sm:$0xff] %v3032
      %3065 = vst [vmem:[%s245 + $0x38] sm:$0xff] %v3033
      %3066 = vst [vmem:[%s245 + $0x40] sm:$0xff] %v3034
      %3067 = vst [vmem:[%s245 + $0x48] sm:$0xff] %v3035
      %3068 = vst [vmem:[%s245 + $0x50] sm:$0xff] %v3036
      %3069 = vst [vmem:[%s245 + $0x58] sm:$0xff] %v3037
      %3070 = vst [vmem:[%s245 + $0x60] sm:$0xff] %v3038
      %3071 = vst [vmem:[%s245 + $0x68] sm:$0xff] %v3039
      %3072 = vst [vmem:[%s245 + $0x70] sm:$0xff] %v3040
      %3073 = vst [vmem:[%s245 + $0x78] sm:$0xff] %v3041
      %3074 = vst [vmem:[%s245 + $0x80] sm:$0xff] %v3042
      %3075 = vst [vmem:[%s245 + $0x88] sm:$0xff] %v3043
      %3076 = vst [vmem:[%s245 + $0x90] sm:$0xff] %v3044
      %3077 = vst [vmem:[%s245 + $0x98] sm:$0xff] %v3045
      %3078 = vst [vmem:[%s245 + $0xa0] sm:$0xff] %v3046
      %3079 = vst [vmem:[%s245 + $0xa8] sm:$0xff] %v3047
      %3080 = vst [vmem:[%s245 + $0xb0] sm:$0xff] %v3048
      %3081 = vst [vmem:[%s245 + $0xb8] sm:$0xff] %v3049
      %3082 = vst [vmem:[%s245 + $0xc0] sm:$0xff] %v3050
      %3083 = vst [vmem:[%s245 + $0xc8] sm:$0xff] %v3051
      %3084 = vst [vmem:[%s245 + $0xd0] sm:$0xff] %v3052
      %3085 = vst [vmem:[%s245 + $0xd8] sm:$0xff] %v3053
      %3086 = vst [vmem:[%s245 + $0xe0] sm:$0xff] %v3054
      %3087 = vst [vmem:[%s245 + $0xe8] sm:$0xff] %v3055
      %3088 = vst [vmem:[%s245 + $0xf0] sm:$0xff] %v3056
      %3089 = vst [vmem:[%s245 + $0xf8] sm:$0xff] %v3057
      %p3090 = scmp.eq.s32.totalorder %s21, 0
      // Predicated region
      $region29: #{conv_sync_bn_relu.2} parent=27 // pred_check
        %p3091 = pneg %p3090
      $region30: #{conv_sync_bn_relu.2} parent=27 // pred_check_branch
        %3093 = sbr.rel (%p3091) target = $region32
      $region31: #{conv_sync_bn_relu.2} parent=27 // pred_region
        %3094 = vst [vmem:[%s248] sm:$0x1] 0.0
        %3095 = vst [vmem:[%s251] sm:$0x1] 0.0
      $region32: #{conv_sync_bn_relu.2} parent=27 // pred_fallthru
        _
      %v3096 = vld [vmem:[%s248] sm:$0x1]
      %v3097 = vadd.f32 %v3026, %v3027
      %v3098 = vadd.f32 %v3097, %v3028
      %v3099 = vadd.f32 %v3098, %v3029
      %v3100 = vadd.f32 %v3099, %v3030
      %v3101 = vadd.f32 %v3100, %v3031
      %v3102 = vadd.f32 %v3101, %v3032
      %v3103 = vadd.f32 %v3102, %v3033
      %v3104 = vadd.f32 %v3103, %v3034
      %v3105 = vadd.f32 %v3104, %v3035
      %v3106 = vadd.f32 %v3105, %v3036
      %v3107 = vadd.f32 %v3106, %v3037
      %v3108 = vadd.f32 %v3107, %v3038
      %v3109 = vadd.f32 %v3108, %v3039
      %v3110 = vadd.f32 %v3109, %v3040
      %v3111 = vadd.f32 %v3110, %v3041
      %v3112 = vadd.f32 %v3111, %v3042
      %v3113 = vadd.f32 %v3112, %v3043
      %v3114 = vadd.f32 %v3113, %v3044
      %v3115 = vadd.f32 %v3114, %v3045
      %v3116 = vadd.f32 %v3115, %v3046
      %v3117 = vadd.f32 %v3116, %v3047
      %v3118 = vadd.f32 %v3117, %v3048
      %v3119 = vadd.f32 %v3118, %v3049
      %v3120 = vadd.f32 %v3119, %v3050
      %v3121 = vadd.f32 %v3120, %v3051
      %v3122 = vadd.f32 %v3121, %v3052
      %v3123 = vadd.f32 %v3122, %v3053
      %v3124 = vadd.f32 %v3123, %v3054
      %v3125 = vadd.f32 %v3124, %v3055
      %v3126 = vadd.f32 %v3125, %v3056
      %v3127 = vadd.f32 %v3126, %v3057
      %v3128 = vrot.slane %v3127, 4
      %v3129 = vadd.f32 %v3127, %v3128
      %v3130 = vrot.slane %v3129, 2
      %v3131 = vadd.f32 %v3129, %v3130
      %v3132 = vrot.slane %v3131, 1
      %v3133 = vadd.f32 %v3131, %v3132
      %v3134 = vadd.f32 %v3096, %v3133
      %3135 = vst [vmem:[%s248] sm:$0x1] %v3134
      %v3136 = vld [vmem:[%s251] sm:$0x1]
      %v3137 = vmul.f32 %v3026, %v3026
      %v3138 = vmul.f32 %v3027, %v3027
      %v3139 = vmul.f32 %v3028, %v3028
      %v3140 = vmul.f32 %v3029, %v3029
      %v3141 = vmul.f32 %v3030, %v3030
      %v3142 = vmul.f32 %v3031, %v3031
      %v3143 = vmul.f32 %v3032, %v3032
      %v3144 = vmul.f32 %v3033, %v3033
      %v3145 = vmul.f32 %v3034, %v3034
      %v3146 = vmul.f32 %v3035, %v3035
      %v3147 = vmul.f32 %v3036, %v3036
      %v3148 = vmul.f32 %v3037, %v3037
      %v3149 = vmul.f32 %v3038, %v3038
      %v3150 = vmul.f32 %v3039, %v3039
      %v3151 = vmul.f32 %v3040, %v3040
      %v3152 = vmul.f32 %v3041, %v3041
      %v3153 = vmul.f32 %v3042, %v3042
      %v3154 = vmul.f32 %v3043, %v3043
      %v3155 = vmul.f32 %v3044, %v3044
      %v3156 = vmul.f32 %v3045, %v3045
      %v3157 = vmul.f32 %v3046, %v3046
      %v3158 = vmul.f32 %v3047, %v3047
      %v3159 = vmul.f32 %v3048, %v3048
      %v3160 = vmul.f32 %v3049, %v3049
      %v3161 = vmul.f32 %v3050, %v3050
      %v3162 = vmul.f32 %v3051, %v3051
      %v3163 = vmul.f32 %v3052, %v3052
      %v3164 = vmul.f32 %v3053, %v3053
      %v3165 = vmul.f32 %v3054, %v3054
      %v3166 = vmul.f32 %v3055, %v3055
      %v3167 = vmul.f32 %v3056, %v3056
      %v3168 = vmul.f32 %v3057, %v3057
      %v3169 = vadd.f32 %v3137, %v3138
      %v3170 = vadd.f32 %v3169, %v3139
      %v3171 = vadd.f32 %v3170, %v3140
      %v3172 = vadd.f32 %v3171, %v3141
      %v3173 = vadd.f32 %v3172, %v3142
      %v3174 = vadd.f32 %v3173, %v3143
      %v3175 = vadd.f32 %v3174, %v3144
      %v3176 = vadd.f32 %v3175, %v3145
      %v3177 = vadd.f32 %v3176, %v3146
      %v3178 = vadd.f32 %v3177, %v3147
      %v3179 = vadd.f32 %v3178, %v3148
      %v3180 = vadd.f32 %v3179, %v3149
      %v3181 = vadd.f32 %v3180, %v3150
      %v3182 = vadd.f32 %v3181, %v3151
      %v3183 = vadd.f32 %v3182, %v3152
      %v3184 = vadd.f32 %v3183, %v3153
      %v3185 = vadd.f32 %v3184, %v3154
      %v3186 = vadd.f32 %v3185, %v3155
      %v3187 = vadd.f32 %v3186, %v3156
      %v3188 = vadd.f32 %v3187, %v3157
      %v3189 = vadd.f32 %v3188, %v3158
      %v3190 = vadd.f32 %v3189, %v3159
      %v3191 = vadd.f32 %v3190, %v3160
      %v3192 = vadd.f32 %v3191, %v3161
      %v3193 = vadd.f32 %v3192, %v3162
      %v3194 = vadd.f32 %v3193, %v3163
      %v3195 = vadd.f32 %v3194, %v3164
      %v3196 = vadd.f32 %v3195, %v3165
      %v3197 = vadd.f32 %v3196, %v3166
      %v3198 = vadd.f32 %v3197, %v3167
      %v3199 = vadd.f32 %v3198, %v3168
      %v3200 = vrot.slane %v3199, 4
      %v3201 = vadd.f32 %v3199, %v3200
      %v3202 = vrot.slane %v3201, 2
      %v3203 = vadd.f32 %v3201, %v3202
      %v3204 = vrot.slane %v3203, 1
      %v3205 = vadd.f32 %v3203, %v3204
      %v3206 = vadd.f32 %v3136, %v3205
      %3207 = vst [vmem:[%s251] sm:$0x1] %v3206
      %p3208 = scmp.lt.s32.totalorder %s21, 1
      %s3209 = scalar_select %p3208, %s21, 1
      %p3210 = scmp.lt.s32.totalorder %s20, 0
      %s3211 = scalar_select %p3210, %s20, 0
      %s3212 = smul.addr %s3209, 32
      %s3213 = sadd.s32 %s3211, %s3212
      %s3214 = smul.addr %s3213, 8
      %s3215 = scalar_lea.vmem %s2, %s3214
      %p3216 = scmp.lt.s32.totalorder %s20, 0
      %s3217 = scalar_select %p3216, %s20, 0
      %s3218 = scalar_lea.vmem %s3, %s3217
      %p3219 = scmp.lt.s32.totalorder %s20, 0
      %s3220 = scalar_select %p3219, %s20, 0
      %s3221 = scalar_lea.vmem %s4, %s3220
      // Predicated region
      $region33: #{conv_sync_bn_relu.2} parent=27 // pred_check
        %p3222 = pneg %p100
      $region34: #{conv_sync_bn_relu.2} parent=27 // pred_check_branch
        %3224 = sbr.rel (%p3222) target = $region36
      $region35: #{conv_sync_bn_relu.2} parent=27 // pred_region
        _
      $region36: #{conv_sync_bn_relu.2} parent=27 // pred_fallthru
        _
      // Predicated region
      $region37: #{conv_sync_bn_relu.2} parent=27 // pred_check
        %p3225 = pneg %p126
      $region38: #{conv_sync_bn_relu.2} parent=27 // pred_check_branch
        %3227 = sbr.rel (%p3225) target = $region40
      $region39: #{conv_sync_bn_relu.2} parent=27 // pred_region
        _
      $region40: #{conv_sync_bn_relu.2} parent=27 // pred_fallthru
        _
      // Predicated region
      $region41: #{conv_sync_bn_relu.2} parent=27 // pred_check
        %p3228 = pneg %p152
      $region42: #{conv_sync_bn_relu.2} parent=27 // pred_check_branch
        %3230 = sbr.rel (%p3228) target = $region44
      $region43: #{conv_sync_bn_relu.2} parent=27 // pred_region
        _
      $region44: #{conv_sync_bn_relu.2} parent=27 // pred_fallthru
        _
      // Predicated region
      $region45: #{conv_sync_bn_relu.2} parent=27 // pred_check
        %p3231 = pneg %p126
      $region46: #{conv_sync_bn_relu.2} parent=27 // pred_check_branch
        %3233 = sbr.rel (%p3231) target = $region48
      $region47: #{conv_sync_bn_relu.2} parent=27 // pred_region
        %p3234 = scmp.lt.s32.totalorder %s20, 0
        %s3235 = scalar_select %p3234, %s20, 0
        %s3236 = scalar_lea.vmem %s3, %s3235
      $region48: #{conv_sync_bn_relu.2} parent=27 // pred_fallthru
        _
      // Predicated region
      $region49: #{conv_sync_bn_relu.2} parent=27 // pred_check
        %p3237 = pneg %p152
      $region50: #{conv_sync_bn_relu.2} parent=27 // pred_check_branch
        %3239 = sbr.rel (%p3237) target = $region52
      $region51: #{conv_sync_bn_relu.2} parent=27 // pred_region
        %p3240 = scmp.lt.s32.totalorder %s20, 0
        %s3241 = scalar_select %p3240, %s20, 0
        %s3242 = scalar_lea.vmem %s4, %s3241
      $region52: #{conv_sync_bn_relu.2} parent=27 // pred_fallthru
        _
    $region28: #{conv_sync_bn_relu.2} parent=5 // pred_fallthru
      _
    %p3243 = scmp.le.s32.totalorder 2, %s11
    // Predicated region
    $region53: #{conv_sync_bn_relu.2} parent=5 // pred_check
      %p3244 = pneg %p3243
    $region54: #{conv_sync_bn_relu.2} parent=5 // pred_check_branch
      %3246 = sbr.rel (%p3244) target = $region56
    $region55: #{conv_sync_bn_relu.2} parent=5 // pred_region
      %s3247 = ssub.s32 %s11, 2
      // Predicated region
      $region57: #{conv_sync_bn_relu.2} parent=55 // pred_check
        %p3248 = pneg %p106
      $region58: #{conv_sync_bn_relu.2} parent=55 // pred_check_branch
        %3250 = sbr.rel (%p3248) target = $region60
      $region59: #{conv_sync_bn_relu.2} parent=55 // pred_region
        %p3251 = scmp.lt.s32.totalorder %s23, 1
        %s3252 = scalar_select %p3251, %s23, 1
        %p3253 = scmp.lt.s32.totalorder %s22, 0
        %s3254 = scalar_select %p3253, %s22, 0
        %s3255 = smul.addr %s3252, 32
        %s3256 = sadd.s32 %s3254, %s3255
        %s3257 = smul.addr %s3256, 8
        %s3258 = scalar_lea.vmem %s2, %s3257
      $region60: #{conv_sync_bn_relu.2} parent=55 // pred_fallthru
        _
    $region56: #{conv_sync_bn_relu.2} parent=5 // pred_fallthru
      _
  $region6: #{conv_sync_bn_relu.2} parent=0 // loop_footer
    %s15 = sadd.s32 1, %s11
  $region7: #{conv_sync_bn_relu.2} parent=0 // loop_footer_branch
    %10 = sbr.rel target = $region3
  $region8: #{conv_sync_bn_relu.2} parent=0 // loop_exit
    _

</llo_original>
